<compile_context>
chip_gen: v7x
topology: tpu7x:2x2x1
jax: 0.10.0
libtpu: 0.0.40
codegen_flags: <defaults>
</compile_context>

<pallas_src>
import functools

import jax
import jax.numpy as jnp
import numpy as np
from jax.experimental import pallas as pl
from jax.experimental.pallas import tpu as pltpu


def _vq_kernel(x_ref, ed_ref, eg_ref, he2_ref,
               q_ref, enc_ref, cnt_ref, loss_ref,
               *, n_valid, tile_n, num_latents, num_codes, bf16_distance):
    # x_ref:   (TN, L*D)   tile of flattened inputs (all latents)
    # ed_ref:  (L*D, L*K)  block-diagonal distance matrix (blocks = emb[l].T)
    # eg_ref:  (L*K, L*D)  block-diagonal gather matrix   (blocks = emb[l])
    # he2_ref: (L, 1, K)   precomputed 0.5*||e||^2 per code
    # q_ref:   (TN, L*D)   quantized output tile
    # enc_ref: (TN, L*K)   one-hot encodings output tile
    # cnt_ref: (1, 8, L*K) per-tile code counts (padded rows masked)
    # loss_ref:(1, 8, 128) per-tile sum((q - x)^2) (padded rows masked)
    L, K = num_latents, num_codes
    x = x_ref[...].astype(jnp.float32)                           # (TN, L*D)
    tn = x.shape[0]

    # Fused distance matmul: xe[:, l*K:(l+1)*K] = x_l @ emb_l.T  (one MXU push
    # sequence, contraction depth L*D instead of D per latent).
    if bf16_distance:
        xe = jnp.dot(x.astype(jnp.bfloat16), ed_ref[...],
                     preferred_element_type=jnp.float32)         # (TN, L*K)
    else:
        xe = jnp.dot(x, ed_ref[...],
                     preferred_element_type=jnp.float32)         # (TN, L*K)

    iota_k = jax.lax.broadcasted_iota(jnp.int32, (tn, K), 1)     # (TN, K)
    pieces = []
    for l in range(L):                                           # L small & static
        # argmin_k ||x - e_k||^2 == argmin_k (0.5*||e_k||^2 - x.e_k)
        dist = he2_ref[l] - xe[:, l * K:(l + 1) * K]             # (TN, K)
        dmin = jnp.min(dist, axis=-1, keepdims=True)             # (TN, 1)
        idx = jnp.min(jnp.where(dist == dmin, iota_k, K),
                      axis=-1, keepdims=True)                    # first-min index
        pieces.append((iota_k == idx).astype(jnp.float32))       # (TN, K)
    onehot = pieces[0] if L == 1 else jnp.concatenate(pieces, axis=-1)  # (TN, L*K)

    # Fused gather-as-matmul: q[:, l*D:(l+1)*D] = onehot_l @ emb_l
    q = jnp.dot(onehot, eg_ref[...],
                preferred_element_type=jnp.float32)              # (TN, L*D)

    # Single lane-dense stores.
    q_ref[...] = q.astype(q_ref.dtype)
    enc_ref[...] = onehot

    # Per-tile reductions (mask rows past the true N introduced by padding).
    row0 = pl.program_id(0) * tile_n
    rows = jax.lax.broadcasted_iota(jnp.int32, (tn, 1), 0) + row0
    mask = (rows < n_valid).astype(jnp.float32)                  # (TN, 1)

    counts = jnp.sum(onehot * mask, axis=0, keepdims=True)       # (1, L*K)
    cnt_ref[...] = jnp.broadcast_to(counts[None, :, :], cnt_ref.shape)

    diff = (q - x) * mask
    sq = jnp.sum(diff * diff)                                    # scalar
    loss_ref[...] = jnp.broadcast_to(sq.reshape(1, 1, 1), loss_ref.shape)


def vq_forward(x, embedding, *, tile_n=1024, bf16_distance=False):
    """Forward of VectorQuantizerEMA.

    Returns (quantized, encodings, commitment_loss, perplexity), matching the
    PyTorch module's returned tensors (shapes/dtypes/values).
      x:         (..., num_latents * embedding_dim), float32
      embedding: (num_latents, num_embeddings, embedding_dim), float32
    """
    L, K, D = embedding.shape
    orig_shape = x.shape
    flat = x.reshape(-1, L * D)                    # (N, L*D) -- free reshape
    N = flat.shape[0]

    # Per-dtype sublane rounding (f32: 8, bf16: 16, int8/fp8: 32).
    itemsize = jnp.dtype(x.dtype).itemsize
    sub = {4: 8, 2: 16, 1: 32}.get(itemsize, 8)

    # Clamp tile_n so the "parallel" grid axis has >= 2 steps when N allows it
    # (both v7x TensorCores get work); round to the sublane multiple.
    half = -(-((N + 1) // 2) // sub) * sub
    tile_n = max(sub, (min(tile_n, half) // sub) * sub)
    pad = (-N) % tile_n
    flat_p = jnp.pad(flat, ((0, pad), (0, 0))) if pad else flat
    Np = N + pad
    nb = Np // tile_n

    # Precompute block-diagonal codebook matrices + half ||e||^2 once.
    emb_f32 = embedding.astype(jnp.float32)
    eye_l = jnp.eye(L, dtype=jnp.float32)
    e_gather = jnp.einsum('lm,lkd->lkmd', eye_l, emb_f32).reshape(L * K, L * D)
    e_dist = jnp.einsum('lm,lkd->ldmk', eye_l, emb_f32).reshape(L * D, L * K)
    if bf16_distance:
        e_dist = e_dist.astype(jnp.bfloat16)
    half_e2 = 0.5 * jnp.sum(emb_f32 * emb_f32, axis=-1)[:, None, :]   # (L, 1, K)

    # Explicit, generation-aware VMEM budget (double-buffered blocks +
    # resident codebook matrices).
    ed_bytes = jnp.dtype(e_dist.dtype).itemsize
    block_bytes = (tile_n * L * D * itemsize        # x in
                   + tile_n * L * D * itemsize      # q out
                   + tile_n * L * K * 4             # enc out (f32)
                   + 8 * L * K * 4 + 8 * 128 * 4)   # counts + loss out
    resident = (L * D * L * K * ed_bytes            # E_dist
                + L * K * L * D * 4                 # E_gather
                + L * 8 * 128 * 4)                  # half_e2 (padded)
    vmem_limit = 2 * (block_bytes + resident) + (2 << 20)
    try:
        cap = int(pltpu.get_tpu_info().vmem_capacity_bytes)
    except Exception:
        cap = 64 << 20
    vmem_limit = int(min(max(vmem_limit, 4 << 20), max(cap // 2, 16 << 20)))

    kernel = functools.partial(
        _vq_kernel, n_valid=N, tile_n=tile_n,
        num_latents=L, num_codes=K, bf16_distance=bf16_distance)

    q_p, enc_p, cnt_p, loss_p = pl.pallas_call(
        kernel,
        out_shape=(
            jax.ShapeDtypeStruct((Np, L * D), x.dtype),        # quantized
            jax.ShapeDtypeStruct((Np, L * K), jnp.float32),    # one-hot encodings
            jax.ShapeDtypeStruct((nb, 8, L * K), jnp.float32), # per-tile counts
            jax.ShapeDtypeStruct((nb, 8, 128), jnp.float32),   # per-tile sq-error
        ),
        grid_spec=pltpu.PrefetchScalarGridSpec(
            num_scalar_prefetch=0,
            grid=(nb,),
            in_specs=[
                pl.BlockSpec((tile_n, L * D), lambda i: (i, 0)),
                pl.BlockSpec((L * D, L * K), lambda i: (0, 0)),
                pl.BlockSpec((L * K, L * D), lambda i: (0, 0)),
                pl.BlockSpec((L, 1, K), lambda i: (0, 0, 0)),
            ],
            out_specs=[
                pl.BlockSpec((tile_n, L * D), lambda i: (i, 0)),
                pl.BlockSpec((tile_n, L * K), lambda i: (i, 0)),
                pl.BlockSpec((1, 8, L * K), lambda i: (i, 0, 0)),
                pl.BlockSpec((1, 8, 128), lambda i: (i, 0, 0)),
            ],
        ),
        compiler_params=pltpu.CompilerParams(
            dimension_semantics=("parallel",),
            vmem_limit_bytes=vmem_limit),
    )(flat_p, e_dist, e_gather, half_e2)

    q_flat = q_p[:N] if pad else q_p
    enc_flat = enc_p[:N] if pad else enc_p
    quantized = q_flat.reshape(orig_shape)                     # free reshape
    encodings = enc_flat.reshape(N, L, K)                      # free reshape

    # Reductions from the tiny per-tile outputs (no re-read of big arrays).
    counts = jnp.sum(cnt_p[:, 0, :], axis=0).reshape(L, K)     # (L, K)
    avg_probs = counts / N
    perplexity = jnp.exp(-jnp.sum(avg_probs * jnp.log(avg_probs + 1e-10) / L))

    # mse_loss(quantized.detach(), input) == sum((q - x)^2) / numel
    commitment_loss = jnp.sum(loss_p[:, 0, 0]) / (N * L * D)
    # TODO(synk): commitment_loss comes from the kernel and is not
    # differentiable; add a custom_vjp if gradient w.r.t. x is needed.

    # Straight-through estimator: same value, gradient flows to x only.
    quantized_st = x + jax.lax.stop_gradient(quantized - x)

    # TODO(synk): stateful buffer mutations of the nn.Module (accumulated_error
    # scatter_add_, training-mode EMA of cluster_size/embedding,
    # activation_count) are side effects that do not influence the returned
    # tensors; not reproduced here.
    return quantized_st, encodings, commitment_loss, perplexity


def vq_reference(x, embedding):
    """Pure-JAX reference mirroring the PyTorch forward math."""
    L, K, D = embedding.shape
    flat = x.reshape(-1, L, D)
    dist = jnp.sum(
        (flat[:, :, :, None] - jnp.transpose(embedding, (0, 2, 1))[None]) ** 2,
        axis=-2)                                        # (N, L, K)
    idx = jnp.argmin(dist, axis=-1)                     # (N, L)
    quant = embedding[jnp.arange(L)[None, :], idx]      # (N, L, D)
    enc = jax.nn.one_hot(idx, K, dtype=jnp.float32)     # (N, L, K)
    quantized = quant.reshape(x.shape)
    loss = jnp.mean((quantized - x) ** 2)
    avg = jnp.mean(enc, axis=0)
    perp = jnp.exp(-jnp.sum(avg * jnp.log(avg + 1e-10) / L))
    return quantized, enc, loss, perp


if __name__ == "__main__":
    key = jax.random.PRNGKey(0)
    k_emb, k_x = jax.random.split(key)

    num_latents, num_embeddings, embedding_dim = 2, 128, 32
    embedding = jax.random.normal(
        k_emb, (num_latents, num_embeddings, embedding_dim), jnp.float32)

    B, H, W = 2, 16, 16   # flattened tokens N = 512
    x = jax.random.normal(
        k_x, (B, H, W, num_latents * embedding_dim), jnp.float32)

    outs = jax.jit(vq_forward)(x, embedding)
    outs = jax.block_until_ready(outs)
    quantized, encodings, loss, perp = outs

    ref_q, ref_e, ref_l, ref_p = vq_reference(x, embedding)
    np.testing.assert_allclose(np.asarray(quantized), np.asarray(ref_q),
                               rtol=1e-5, atol=1e-5)
    np.testing.assert_allclose(np.asarray(encodings), np.asarray(ref_e),
                               rtol=0, atol=0)
    np.testing.assert_allclose(float(loss), float(ref_l), rtol=1e-5, atol=1e-6)
    np.testing.assert_allclose(float(perp), float(ref_p), rtol=1e-5, atol=1e-5)

    print("KERNEL_OK")
</pallas_src>

<mosaic_0001>
module attributes {stable_mosaic.version = 11 : i64} {
  func.func @_vq_kernel(%arg0: i32, %arg1: memref<256x64xf32, #tpu.memory_space<vmem>>, %arg2: memref<64x256xf32, #tpu.memory_space<vmem>>, %arg3: memref<256x64xf32, #tpu.memory_space<vmem>>, %arg4: memref<2x1x128xf32, #tpu.memory_space<vmem>>, %arg5: memref<256x64xf32, #tpu.memory_space<vmem>>, %arg6: memref<256x256xf32, #tpu.memory_space<vmem>>, %arg7: memref<1x8x256xf32, #tpu.memory_space<vmem>>, %arg8: memref<1x8x128xf32, #tpu.memory_space<vmem>>) attributes {dimension_semantics = [#tpu.dimension_semantics<parallel>], iteration_bounds = array<i64: 2>, scalar_prefetch = 0 : i64, scratch_operands = 0 : i64, tpu.core_type = #tpu.core_type<tc>, window_params = [{transform_indices = @transform_0, window_bounds = array<i64: 256, 64>}, {pipeline_mode = #tpu.pipeline_mode<synchronous>, transform_indices = @transform_1, window_bounds = array<i64: 64, 256>}, {pipeline_mode = #tpu.pipeline_mode<synchronous>, transform_indices = @transform_2, window_bounds = array<i64: 256, 64>}, {pipeline_mode = #tpu.pipeline_mode<synchronous>, transform_indices = @transform_3, window_bounds = array<i64: 2, 1, 128>}, {transform_indices = @transform_4, window_bounds = array<i64: 256, 64>}, {transform_indices = @transform_5, window_bounds = array<i64: 256, 256>}, {transform_indices = @transform_6, window_bounds = array<i64: 1, 8, 256>}, {transform_indices = @transform_7, window_bounds = array<i64: 1, 8, 128>}]} {
    %c0 = arith.constant 0 : index
    %c0_0 = arith.constant 0 : index
    %0 = vector.load %arg1[%c0, %c0_0] : memref<256x64xf32, #tpu.memory_space<vmem>>, vector<256x64xf32>
    %c0_1 = arith.constant 0 : index
    %c0_2 = arith.constant 0 : index
    %1 = vector.load %arg2[%c0_1, %c0_2] : memref<64x256xf32, #tpu.memory_space<vmem>>, vector<64x256xf32>
    %cst = arith.constant dense<0.000000e+00> : vector<256x256xf32>
    %2 = tpu.matmul %0, %1, %cst {dimension_numbers = #tpu.dot_dimension_numbers<[1], [0], [0], [1], [0, 0, 1, 1], [], []>} : vector<256x64xf32>, vector<64x256xf32>, vector<256x256xf32> -> vector<256x256xf32>
    %3 = tpu.iota {dimensions = array<i32: 1>} : vector<256x128xi32>
    %c0_3 = arith.constant 0 : index
    %c0_4 = arith.constant 0 : index
    %c0_5 = arith.constant 0 : index
    %4 = vector.load %arg4[%c0_3, %c0_4, %c0_5] : memref<2x1x128xf32, #tpu.memory_space<vmem>>, vector<1x1x128xf32>
    %5 = vector.shape_cast %4 : vector<1x1x128xf32> to vector<1x128xf32>
    %6 = vector.extract_strided_slice %2 {offsets = [0, 0], sizes = [256, 128], strides = [1, 1]} : vector<256x256xf32> to vector<256x128xf32>
    %7 = vector.broadcast %5 : vector<1x128xf32> to vector<256x128xf32>
    %8 = arith.subf %7, %6 : vector<256x128xf32>
    %cst_6 = arith.constant dense<0x7F800000> : vector<256xf32>
    %9 = vector.multi_reduction <minimumf>, %8, %cst_6 [1] : vector<256x128xf32> to vector<256xf32>
    %10 = vector.shape_cast %9 : vector<256xf32> to vector<256x1xf32>
    %11 = vector.broadcast %10 : vector<256x1xf32> to vector<256x128xf32>
    %12 = arith.cmpf oeq, %8, %11 : vector<256x128xf32>
    %c128_i32 = arith.constant 128 : i32
    %13 = vector.broadcast %c128_i32 : i32 to vector<256x128xi32>
    %14 = arith.select %12, %3, %13 : vector<256x128xi1>, vector<256x128xi32>
    %cst_7 = arith.constant dense<2147483647> : vector<256xi32>
    %15 = vector.multi_reduction <minsi>, %14, %cst_7 [1] : vector<256x128xi32> to vector<256xi32>
    %16 = vector.shape_cast %15 : vector<256xi32> to vector<256x1xi32>
    %17 = vector.broadcast %16 : vector<256x1xi32> to vector<256x128xi32>
    %18 = arith.cmpi eq, %3, %17 : vector<256x128xi32>
    %19 = arith.extui %18 : vector<256x128xi1> to vector<256x128xi32>
    %20 = arith.sitofp %19 : vector<256x128xi32> to vector<256x128xf32>
    %c1 = arith.constant 1 : index
    %c0_8 = arith.constant 0 : index
    %c0_9 = arith.constant 0 : index
    %21 = vector.load %arg4[%c1, %c0_8, %c0_9] : memref<2x1x128xf32, #tpu.memory_space<vmem>>, vector<1x1x128xf32>
    %22 = vector.shape_cast %21 : vector<1x1x128xf32> to vector<1x128xf32>
    %23 = vector.extract_strided_slice %2 {offsets = [0, 128], sizes = [256, 128], strides = [1, 1]} : vector<256x256xf32> to vector<256x128xf32>
    %24 = vector.broadcast %22 : vector<1x128xf32> to vector<256x128xf32>
    %25 = arith.subf %24, %23 : vector<256x128xf32>
    %cst_10 = arith.constant dense<0x7F800000> : vector<256xf32>
    %26 = vector.multi_reduction <minimumf>, %25, %cst_10 [1] : vector<256x128xf32> to vector<256xf32>
    %27 = vector.shape_cast %26 : vector<256xf32> to vector<256x1xf32>
    %28 = vector.broadcast %27 : vector<256x1xf32> to vector<256x128xf32>
    %29 = arith.cmpf oeq, %25, %28 : vector<256x128xf32>
    %c128_i32_11 = arith.constant 128 : i32
    %30 = vector.broadcast %c128_i32_11 : i32 to vector<256x128xi32>
    %31 = arith.select %29, %3, %30 : vector<256x128xi1>, vector<256x128xi32>
    %cst_12 = arith.constant dense<2147483647> : vector<256xi32>
    %32 = vector.multi_reduction <minsi>, %31, %cst_12 [1] : vector<256x128xi32> to vector<256xi32>
    %33 = vector.shape_cast %32 : vector<256xi32> to vector<256x1xi32>
    %34 = vector.broadcast %33 : vector<256x1xi32> to vector<256x128xi32>
    %35 = arith.cmpi eq, %3, %34 : vector<256x128xi32>
    %36 = arith.extui %35 : vector<256x128xi1> to vector<256x128xi32>
    %37 = arith.sitofp %36 : vector<256x128xi32> to vector<256x128xf32>
    %38 = tpu.concatenate %20, %37 in 1 : vector<256x128xf32>, vector<256x128xf32> -> vector<256x256xf32>
    %c0_13 = arith.constant 0 : index
    %c0_14 = arith.constant 0 : index
    %39 = vector.load %arg3[%c0_13, %c0_14] : memref<256x64xf32, #tpu.memory_space<vmem>>, vector<256x64xf32>
    %cst_15 = arith.constant dense<0.000000e+00> : vector<256x64xf32>
    %40 = tpu.matmul %38, %39, %cst_15 {dimension_numbers = #tpu.dot_dimension_numbers<[1], [0], [0], [1], [0, 0, 1, 1], [], []>} : vector<256x256xf32>, vector<256x64xf32>, vector<256x64xf32> -> vector<256x64xf32>
    %c0_16 = arith.constant 0 : index
    %c0_17 = arith.constant 0 : index
    %41 = vector.load %arg5[%c0_16, %c0_17] : memref<256x64xf32, #tpu.memory_space<vmem>>, vector<256x64xf32>
    tpu.vector_store %arg5[%c0_16, %c0_17], %40 {strides = array<i32>} : memref<256x64xf32, #tpu.memory_space<vmem>>, vector<256x64xf32>,
    %c0_18 = arith.constant 0 : index
    %c0_19 = arith.constant 0 : index
    %42 = vector.load %arg6[%c0_18, %c0_19] : memref<256x256xf32, #tpu.memory_space<vmem>>, vector<256x256xf32>
    tpu.vector_store %arg6[%c0_18, %c0_19], %38 {strides = array<i32>} : memref<256x256xf32, #tpu.memory_space<vmem>>, vector<256x256xf32>,
    %c256_i32 = arith.constant 256 : i32
    %43 = arith.muli %arg0, %c256_i32 : i32
    %44 = tpu.iota {dimensions = array<i32: 0>} : vector<256x1xi32>
    %45 = vector.broadcast %43 : i32 to vector<256x1xi32>
    %46 = arith.addi %44, %45 : vector<256x1xi32>
    %c512_i32 = arith.constant 512 : i32
    %47 = vector.broadcast %c512_i32 : i32 to vector<256x1xi32>
    %48 = arith.cmpi slt, %46, %47 : vector<256x1xi32>
    %49 = arith.extui %48 : vector<256x1xi1> to vector<256x1xi32>
    %50 = arith.sitofp %49 : vector<256x1xi32> to vector<256x1xf32>
    %51 = vector.broadcast %50 : vector<256x1xf32> to vector<256x256xf32>
    %52 = arith.mulf %38, %51 : vector<256x256xf32>
    %cst_20 = arith.constant dense<0.000000e+00> : vector<256xf32>
    %53 = vector.multi_reduction <add>, %52, %cst_20 [0] : vector<256x256xf32> to vector<256xf32>
    %54 = vector.shape_cast %53 : vector<256xf32> to vector<1x256xf32>
    %55 = vector.shape_cast %54 : vector<1x256xf32> to vector<1x1x256xf32>
    %56 = vector.shape_cast %55 : vector<1x1x256xf32> to vector<1x1x256xf32>
    %57 = vector.broadcast %56 : vector<1x1x256xf32> to vector<1x8x256xf32>
    %c0_21 = arith.constant 0 : index
    %c0_22 = arith.constant 0 : index
    %c0_23 = arith.constant 0 : index
    %58 = vector.load %arg7[%c0_21, %c0_22, %c0_23] : memref<1x8x256xf32, #tpu.memory_space<vmem>>, vector<1x8x256xf32>
    tpu.vector_store %arg7[%c0_21, %c0_22, %c0_23], %57 {strides = array<i32>} : memref<1x8x256xf32, #tpu.memory_space<vmem>>, vector<1x8x256xf32>,
    %59 = arith.subf %40, %0 : vector<256x64xf32>
    %60 = vector.broadcast %50 : vector<256x1xf32> to vector<256x64xf32>
    %61 = arith.mulf %59, %60 : vector<256x64xf32>
    %62 = arith.mulf %61, %61 : vector<256x64xf32>
    %63 = vector.shape_cast %62 : vector<256x64xf32> to vector<1x256x64xf32>
    %cst_24 = arith.constant dense<0.000000e+00> : vector<1xf32>
    %64 = vector.multi_reduction <add>, %63, %cst_24 [1, 2] : vector<1x256x64xf32> to vector<1xf32>
    %65 = vector.shape_cast %64 : vector<1xf32> to vector<1x1x1xf32>
    %66 = vector.extract %65[0, 0, 0] : f32 from vector<1x1x1xf32>
    %67 = vector.broadcast %66 : f32 to vector<1x1x1xf32>
    %68 = vector.shape_cast %67 : vector<1x1x1xf32> to vector<1x1x1xf32>
    %69 = vector.broadcast %68 : vector<1x1x1xf32> to vector<1x8x128xf32>
    %c0_25 = arith.constant 0 : index
    %c0_26 = arith.constant 0 : index
    %c0_27 = arith.constant 0 : index
    %70 = vector.load %arg8[%c0_25, %c0_26, %c0_27] : memref<1x8x128xf32, #tpu.memory_space<vmem>>, vector<1x8x128xf32>
    tpu.vector_store %arg8[%c0_25, %c0_26, %c0_27], %69 {strides = array<i32>} : memref<1x8x128xf32, #tpu.memory_space<vmem>>, vector<1x8x128xf32>,
    return
  }
  func.func @transform_0(%arg0: i32) -> (i32, i32) {
    %c0_i32 = arith.constant 0 : i32
    %c0_i32_0 = arith.constant 0 : i32
    return %arg0, %c0_i32 : i32, i32
  }
  func.func @transform_1(%arg0: i32) -> (i32, i32) {
    %c0_i32 = arith.constant 0 : i32
    %c0_i32_0 = arith.constant 0 : i32
    %c0_i32_1 = arith.constant 0 : i32
    return %c0_i32, %c0_i32_0 : i32, i32
  }
  func.func @transform_2(%arg0: i32) -> (i32, i32) {
    %c0_i32 = arith.constant 0 : i32
    %c0_i32_0 = arith.constant 0 : i32
    %c0_i32_1 = arith.constant 0 : i32
    return %c0_i32, %c0_i32_0 : i32, i32
  }
  func.func @transform_3(%arg0: i32) -> (i32, i32, i32) {
    %c0_i32 = arith.constant 0 : i32
    %c0_i32_0 = arith.constant 0 : i32
    %c0_i32_1 = arith.constant 0 : i32
    %c0_i32_2 = arith.constant 0 : i32
    return %c0_i32, %c0_i32_0, %c0_i32_1 : i32, i32, i32
  }
  func.func @transform_4(%arg0: i32) -> (i32, i32) {
    %c0_i32 = arith.constant 0 : i32
    %c0_i32_0 = arith.constant 0 : i32
    return %arg0, %c0_i32 : i32, i32
  }
  func.func @transform_5(%arg0: i32) -> (i32, i32) {
    %c0_i32 = arith.constant 0 : i32
    %c0_i32_0 = arith.constant 0 : i32
    return %arg0, %c0_i32 : i32, i32
  }
  func.func @transform_6(%arg0: i32) -> (i32, i32, i32) {
    %c0_i32 = arith.constant 0 : i32
    %c0_i32_0 = arith.constant 0 : i32
    %c0_i32_1 = arith.constant 0 : i32
    return %arg0, %c0_i32, %c0_i32_0 : i32, i32, i32
  }
  func.func @transform_7(%arg0: i32) -> (i32, i32, i32) {
    %c0_i32 = arith.constant 0 : i32
    %c0_i32_0 = arith.constant 0 : i32
    %c0_i32_1 = arith.constant 0 : i32
    return %arg0, %c0_i32, %c0_i32_0 : i32, i32, i32
  }
}

</mosaic_0001>

<llo_original>
// kernel: vq_forward.1
$region0: #{vq_forward.1}
  #allocation0 [shape = 'u32[]', space=smem, size = 0x4, offset = 0x4, fixed_abs, tag = 'smem constant byte address 0x4 - core index']
  #allocation1 [shape = 'u32[144,128]{1,0:T(1,128)}', space=vmem, size = 0x12000, scoped, tag = 'internal scratch']
  %s0 = inlined_call_operand.vmem [shape: f32[512,64], index: 0, kind: input, shape index: {}]
  %s1 = inlined_call_operand.vmem [shape: f32[64,256], index: 1, kind: input, shape index: {}]
  %s2 = inlined_call_operand.vmem [shape: f32[256,64], index: 2, kind: input, shape index: {}]
  %s3 = inlined_call_operand.vmem [shape: f32[2,1,128], index: 3, kind: input, shape index: {}]
  %s4 = inlined_call_operand.vmem [shape: f32[512,64], index: 4, kind: output, shape index: {0}]
  %s5 = inlined_call_operand.vmem [shape: f32[512,256], index: 5, kind: output, shape index: {1}]
  %s6 = inlined_call_operand.vmem [shape: f32[2,8,256], index: 6, kind: output, shape index: {2}]
  %s7 = inlined_call_operand.vmem [shape: f32[2,8,128], index: 7, kind: output, shape index: {3}]
  %8 = xla_tuple %s4, %s5, %s6, %s7
  %s9 = sld [smem:[#allocation0]]
  $region73: #{vq_forward.1} parent=0
    _
  %s11 = ssub.s32 1, %s9
  %s12 = scalar_select 0, %s11, %s9
  loop: start=0, step=1, limit=4
  $region2: #{vq_forward.1} parent=0 // loop_pre_header
    _
  $region3: #{vq_forward.1} parent=0 // loop_header
    %s14 = sphi 0, %s18
    %p15 = scmp.ge.s32.totalorder %s14, 4
    %s24 = sphi 0, %s26
    %s27 = sphi 0, %s24
    %s28 = sphi 0, %s27
    %s44 = sphi 0, %s28
    %s48 = sphi 0, %s48
    %s50 = sphi 0, %s48
    %s51 = sphi 0, %s50
    %s65 = sphi 0, %s51
    %s69 = sphi 0, %s69
    %s71 = sphi 0, %s69
    %s72 = sphi 0, %s71
    %s86 = sphi 0, %s72
    %s90 = sphi 0, %s90
    %s92 = sphi 0, %s90
    %s93 = sphi 0, %s92
    %s107 = sphi 0, %s93
    %s113 = sphi 0, %s115
    %s116 = sphi 0, %s113
    %s117 = sphi 0, %s116
    %s133 = sphi 0, %s117
    %s139 = sphi 0, %s141
    %s142 = sphi 0, %s139
    %s143 = sphi 0, %s142
    %s159 = sphi 0, %s143
    %s165 = sphi 0, %s167
    %s168 = sphi 0, %s165
    %s169 = sphi 0, %s168
    %s185 = sphi 0, %s169
    %s191 = sphi 0, %s193
    %s194 = sphi 0, %s191
    %s195 = sphi 0, %s194
    %s211 = sphi 0, %s195
  $region4: #{vq_forward.1} parent=0 // loop_header_branch
    %17 = sbr.rel (%p15) target = $region8
  $region5: #{vq_forward.1} parent=0 // loop_body
    %s19 = ssub.s32 %s14, 1
    %s20 = ssub.s32 %s14, 2
    %s21 = sadd.s32 %s14, 1
    %s22 = ssub.s32 %s14, %s21
    %p23 = scmp.eq.s32.totalorder %s22, 0
    %s25 = sadd.s32 %s24, 1
    %s26 = scalar_select %p23, %s24, %s25
    %p29 = pneg %p23
    %p30 = scmp.eq.s32.totalorder %s14, 1
    %p31 = por %p29, %p30
    %p32 = scmp.ne.s32.totalorder %s24, %s27
    %p33 = scmp.eq.s32.totalorder %s14, 0
    %p34 = por %p32, %p33
    %p35 = scmp.ne.s32.totalorder %s24, %s27
    %p36 = scmp.eq.s32.totalorder %s19, 1
    %p37 = por %p35, %p36
    %p38 = scmp.ne.s32.totalorder %s27, %s28
    %p39 = scmp.eq.s32.totalorder %s19, 0
    %p40 = por %p38, %p39
    %p41 = scmp.ne.s32.totalorder %s27, %s28
    %p42 = scmp.eq.s32.totalorder %s20, 1
    %p43 = por %p41, %p42
    %p45 = scmp.ne.s32.totalorder %s28, %s44
    %p46 = scmp.eq.s32.totalorder %s20, 0
    %p47 = por %p45, %p46
    %s49 = sadd.s32 %s48, 1
    %p52 = scmp.eq.s32.totalorder %s14, 1
    %p53 = scmp.ne.s32.totalorder %s48, %s50
    %p54 = scmp.eq.s32.totalorder %s14, 0
    %p55 = por %p53, %p54
    %p56 = scmp.ne.s32.totalorder %s48, %s50
    %p57 = scmp.eq.s32.totalorder %s19, 1
    %p58 = por %p56, %p57
    %p59 = scmp.ne.s32.totalorder %s50, %s51
    %p60 = scmp.eq.s32.totalorder %s19, 0
    %p61 = por %p59, %p60
    %p62 = scmp.ne.s32.totalorder %s50, %s51
    %p63 = scmp.eq.s32.totalorder %s20, 1
    %p64 = por %p62, %p63
    %p66 = scmp.ne.s32.totalorder %s51, %s65
    %p67 = scmp.eq.s32.totalorder %s20, 0
    %p68 = por %p66, %p67
    %s70 = sadd.s32 %s69, 1
    %p73 = scmp.eq.s32.totalorder %s14, 1
    %p74 = scmp.ne.s32.totalorder %s69, %s71
    %p75 = scmp.eq.s32.totalorder %s14, 0
    %p76 = por %p74, %p75
    %p77 = scmp.ne.s32.totalorder %s69, %s71
    %p78 = scmp.eq.s32.totalorder %s19, 1
    %p79 = por %p77, %p78
    %p80 = scmp.ne.s32.totalorder %s71, %s72
    %p81 = scmp.eq.s32.totalorder %s19, 0
    %p82 = por %p80, %p81
    %p83 = scmp.ne.s32.totalorder %s71, %s72
    %p84 = scmp.eq.s32.totalorder %s20, 1
    %p85 = por %p83, %p84
    %p87 = scmp.ne.s32.totalorder %s72, %s86
    %p88 = scmp.eq.s32.totalorder %s20, 0
    %p89 = por %p87, %p88
    %s91 = sadd.s32 %s90, 1
    %p94 = scmp.eq.s32.totalorder %s14, 1
    %p95 = scmp.ne.s32.totalorder %s90, %s92
    %p96 = scmp.eq.s32.totalorder %s14, 0
    %p97 = por %p95, %p96
    %p98 = scmp.ne.s32.totalorder %s90, %s92
    %p99 = scmp.eq.s32.totalorder %s19, 1
    %p100 = por %p98, %p99
    %p101 = scmp.ne.s32.totalorder %s92, %s93
    %p102 = scmp.eq.s32.totalorder %s19, 0
    %p103 = por %p101, %p102
    %p104 = scmp.ne.s32.totalorder %s92, %s93
    %p105 = scmp.eq.s32.totalorder %s20, 1
    %p106 = por %p104, %p105
    %p108 = scmp.ne.s32.totalorder %s93, %s107
    %p109 = scmp.eq.s32.totalorder %s20, 0
    %p110 = por %p108, %p109
    %s111 = ssub.s32 %s14, %s21
    %p112 = scmp.eq.s32.totalorder %s111, 0
    %s114 = sadd.s32 %s113, 1
    %s115 = scalar_select %p112, %s113, %s114
    %p118 = pneg %p112
    %p119 = scmp.eq.s32.totalorder %s14, 1
    %p120 = por %p118, %p119
    %p121 = scmp.ne.s32.totalorder %s113, %s116
    %p122 = scmp.eq.s32.totalorder %s14, 0
    %p123 = por %p121, %p122
    %p124 = scmp.ne.s32.totalorder %s113, %s116
    %p125 = scmp.eq.s32.totalorder %s19, 1
    %p126 = por %p124, %p125
    %p127 = scmp.ne.s32.totalorder %s116, %s117
    %p128 = scmp.eq.s32.totalorder %s19, 0
    %p129 = por %p127, %p128
    %p130 = scmp.ne.s32.totalorder %s116, %s117
    %p131 = scmp.eq.s32.totalorder %s20, 1
    %p132 = por %p130, %p131
    %p134 = scmp.ne.s32.totalorder %s117, %s133
    %p135 = scmp.eq.s32.totalorder %s20, 0
    %p136 = por %p134, %p135
    %s137 = ssub.s32 %s14, %s21
    %p138 = scmp.eq.s32.totalorder %s137, 0
    %s140 = sadd.s32 %s139, 1
    %s141 = scalar_select %p138, %s139, %s140
    %p144 = pneg %p138
    %p145 = scmp.eq.s32.totalorder %s14, 1
    %p146 = por %p144, %p145
    %p147 = scmp.ne.s32.totalorder %s139, %s142
    %p148 = scmp.eq.s32.totalorder %s14, 0
    %p149 = por %p147, %p148
    %p150 = scmp.ne.s32.totalorder %s139, %s142
    %p151 = scmp.eq.s32.totalorder %s19, 1
    %p152 = por %p150, %p151
    %p153 = scmp.ne.s32.totalorder %s142, %s143
    %p154 = scmp.eq.s32.totalorder %s19, 0
    %p155 = por %p153, %p154
    %p156 = scmp.ne.s32.totalorder %s142, %s143
    %p157 = scmp.eq.s32.totalorder %s20, 1
    %p158 = por %p156, %p157
    %p160 = scmp.ne.s32.totalorder %s143, %s159
    %p161 = scmp.eq.s32.totalorder %s20, 0
    %p162 = por %p160, %p161
    %s163 = ssub.s32 %s14, %s21
    %p164 = scmp.eq.s32.totalorder %s163, 0
    %s166 = sadd.s32 %s165, 1
    %s167 = scalar_select %p164, %s165, %s166
    %p170 = pneg %p164
    %p171 = scmp.eq.s32.totalorder %s14, 1
    %p172 = por %p170, %p171
    %p173 = scmp.ne.s32.totalorder %s165, %s168
    %p174 = scmp.eq.s32.totalorder %s14, 0
    %p175 = por %p173, %p174
    %p176 = scmp.ne.s32.totalorder %s165, %s168
    %p177 = scmp.eq.s32.totalorder %s19, 1
    %p178 = por %p176, %p177
    %p179 = scmp.ne.s32.totalorder %s168, %s169
    %p180 = scmp.eq.s32.totalorder %s19, 0
    %p181 = por %p179, %p180
    %p182 = scmp.ne.s32.totalorder %s168, %s169
    %p183 = scmp.eq.s32.totalorder %s20, 1
    %p184 = por %p182, %p183
    %p186 = scmp.ne.s32.totalorder %s169, %s185
    %p187 = scmp.eq.s32.totalorder %s20, 0
    %p188 = por %p186, %p187
    %s189 = ssub.s32 %s14, %s21
    %p190 = scmp.eq.s32.totalorder %s189, 0
    %s192 = sadd.s32 %s191, 1
    %s193 = scalar_select %p190, %s191, %s192
    %p196 = pneg %p190
    %p197 = scmp.eq.s32.totalorder %s14, 1
    %p198 = por %p196, %p197
    %p199 = scmp.ne.s32.totalorder %s191, %s194
    %p200 = scmp.eq.s32.totalorder %s14, 0
    %p201 = por %p199, %p200
    %p202 = scmp.ne.s32.totalorder %s191, %s194
    %p203 = scmp.eq.s32.totalorder %s19, 1
    %p204 = por %p202, %p203
    %p205 = scmp.ne.s32.totalorder %s194, %s195
    %p206 = scmp.eq.s32.totalorder %s19, 0
    %p207 = por %p205, %p206
    %p208 = scmp.ne.s32.totalorder %s194, %s195
    %p209 = scmp.eq.s32.totalorder %s20, 1
    %p210 = por %p208, %p209
    %p212 = scmp.ne.s32.totalorder %s195, %s211
    %p213 = scmp.eq.s32.totalorder %s20, 0
    %p214 = por %p212, %p213
    %p215 = scmp.le.s32.totalorder 1, %s14
    %p216 = scmp.lt.s32.totalorder %s14, 3
    %p217 = pnand %p215, %p216
    %p218 = pneg %p217
    // Predicated region
    $region9: #{vq_forward.1} parent=5 // pred_check
      _
    $region10: #{vq_forward.1} parent=5 // pred_check_branch
      %220 = sbr.rel (%p217) target = $region12
    $region11: #{vq_forward.1} parent=5 // pred_region
      %s221 = ssub.s32 %s14, 1
      // Predicated region
      $region13: #{vq_forward.1} parent=11 // pred_check
        %p222 = pneg %p61
      $region14: #{vq_forward.1} parent=11 // pred_check_branch
        %224 = sbr.rel (%p222) target = $region16
      $region15: #{vq_forward.1} parent=11 // pred_region
        _
      $region16: #{vq_forward.1} parent=11 // pred_fallthru
        _
      // Predicated region
      $region17: #{vq_forward.1} parent=11 // pred_check
        %p225 = pneg %p82
      $region18: #{vq_forward.1} parent=11 // pred_check_branch
        %227 = sbr.rel (%p225) target = $region20
      $region19: #{vq_forward.1} parent=11 // pred_region
        _
      $region20: #{vq_forward.1} parent=11 // pred_fallthru
        _
      // Predicated region
      $region21: #{vq_forward.1} parent=11 // pred_check
        %p228 = pneg %p103
      $region22: #{vq_forward.1} parent=11 // pred_check_branch
        %230 = sbr.rel (%p228) target = $region24
      $region23: #{vq_forward.1} parent=11 // pred_region
        _
      $region24: #{vq_forward.1} parent=11 // pred_fallthru
        _
    $region12: #{vq_forward.1} parent=5 // pred_fallthru
      _
    %p231 = scmp.lt.s32.totalorder %s14, 2
    // Predicated region
    $region25: #{vq_forward.1} parent=5 // pred_check
      %p232 = pneg %p231
    $region26: #{vq_forward.1} parent=5 // pred_check_branch
      %234 = sbr.rel (%p232) target = $region28
    $region27: #{vq_forward.1} parent=5 // pred_region
      // Predicated region
      $region29: #{vq_forward.1} parent=27 // pred_check
        %p235 = pneg %p34
      $region30: #{vq_forward.1} parent=27 // pred_check_branch
        %237 = sbr.rel (%p235) target = $region32
      $region31: #{vq_forward.1} parent=27 // pred_region
        %s238 = smul.u32 32, %s14
        %p239 = scmp.lt.s32.totalorder %s238, 63
        %s240 = scalar_select %p239, %s238, 63
        %s241 = smul.addr %s240, 8
        %s242 = scalar_lea.vmem %s0, %s241
        %s243 = smul.u32 32, %s14
      $region32: #{vq_forward.1} parent=27 // pred_fallthru
        _
    $region28: #{vq_forward.1} parent=5 // pred_fallthru
      _
    %p244 = scmp.le.s32.totalorder 1, %s14
    %p245 = scmp.lt.s32.totalorder %s14, 3
    %p246 = pnand %p244, %p245
    %p247 = pneg %p246
    // Predicated region
    $region33: #{vq_forward.1} parent=5 // pred_check
      _
    $region34: #{vq_forward.1} parent=5 // pred_check_branch
      %249 = sbr.rel (%p246) target = $region36
    $region35: #{vq_forward.1} parent=5 // pred_region
      %s250 = ssub.s32 %s14, 1
      %s251 = smul.u32 32, %s19
      %p252 = scmp.lt.s32.totalorder %s251, 63
      %s253 = scalar_select %p252, %s251, 63
      %s254 = smul.addr %s253, 8
      %s255 = scalar_lea.vmem %s0, %s254
      %p256 = pneg %p40
      %p257 = pneg %p37
      %p258 = pneg %p61
      %p259 = pneg %p58
      %p260 = pneg %p82
      %p261 = pneg %p79
      %p262 = pneg %p103
      %p263 = pneg %p100
      %p264 = pneg %p129
      %p265 = pneg %p126
      %s266 = smul.u32 32, %s19
      %p267 = scmp.lt.s32.totalorder %s266, 63
      %s268 = scalar_select %p267, %s266, 63
      %s269 = smul.addr %s268, 8
      %s270 = scalar_lea.vmem %s4, %s269
      %p271 = pneg %p155
      %p272 = pneg %p152
      %s273 = smul.u32 32, %s19
      %p274 = scmp.lt.s32.totalorder %s273, 63
      %s275 = scalar_select %p274, %s273, 63
      %s276 = smul.addr %s275, 2
      %s277 = smul.addr %s276, 8
      %s278 = scalar_lea.vmem %s5, %s277
      %p279 = pneg %p181
      %p280 = pneg %p178
      %p281 = scmp.lt.s32.totalorder %s19, 1
      %s282 = scalar_select %p281, %s19, 1
      %s283 = smul.addr %s282, 2
      %s284 = smul.addr %s283, 8
      %s285 = scalar_lea.vmem %s6, %s284
      %p286 = pneg %p207
      %p287 = pneg %p204
      %p288 = scmp.lt.s32.totalorder %s19, 1
      %s289 = scalar_select %p288, %s19, 1
      %s290 = smul.addr %s289, 8
      %s291 = scalar_lea.vmem %s7, %s290
      %s292 = smul.u32 32, %s19
      %p293 = scmp.lt.s32.totalorder %s292, 63
      %s294 = scalar_select %p293, %s292, 63
      %s295 = smul.addr %s294, 8
      %s296 = scalar_lea.vmem %s0, %s295
      %s297 = smul.u32 32, %s19
      %s298 = smul.u32 32, %s19
      %p299 = scmp.lt.s32.totalorder %s298, 63
      %s300 = scalar_select %p299, %s298, 63
      %s301 = smul.addr %s300, 8
      %s302 = scalar_lea.vmem %s4, %s301
      %s303 = smul.u32 32, %s19
      %s304 = smul.u32 32, %s19
      %p305 = scmp.lt.s32.totalorder %s304, 63
      %s306 = scalar_select %p305, %s304, 63
      %s307 = smul.addr %s306, 2
      %s308 = smul.addr %s307, 8
      %s309 = scalar_lea.vmem %s5, %s308
      %s310 = smul.u32 32, %s19
      %p311 = scmp.lt.s32.totalorder %s19, 1
      %s312 = scalar_select %p311, %s19, 1
      %s313 = smul.addr %s312, 2
      %s314 = smul.addr %s313, 8
      %s315 = scalar_lea.vmem %s6, %s314
      %p316 = scmp.lt.s32.totalorder %s19, 1
      %s317 = scalar_select %p316, %s19, 1
      %s318 = smul.addr %s317, 8
      %s319 = scalar_lea.vmem %s7, %s318
      %v320 = vld [vmem:[%s296] sm:$0xff]
      %v321 = vld [vmem:[%s296 + $0x8] sm:$0xff]
      %v322 = vld [vmem:[%s296 + $0x10] sm:$0xff]
      %v323 = vld [vmem:[%s296 + $0x18] sm:$0xff]
      %v324 = vld [vmem:[%s296 + $0x20] sm:$0xff]
      %v325 = vld [vmem:[%s296 + $0x28] sm:$0xff]
      %v326 = vld [vmem:[%s296 + $0x30] sm:$0xff]
      %v327 = vld [vmem:[%s296 + $0x38] sm:$0xff]
      %v328 = vld [vmem:[%s296 + $0x40] sm:$0xff]
      %v329 = vld [vmem:[%s296 + $0x48] sm:$0xff]
      %v330 = vld [vmem:[%s296 + $0x50] sm:$0xff]
      %v331 = vld [vmem:[%s296 + $0x58] sm:$0xff]
      %v332 = vld [vmem:[%s296 + $0x60] sm:$0xff]
      %v333 = vld [vmem:[%s296 + $0x68] sm:$0xff]
      %v334 = vld [vmem:[%s296 + $0x70] sm:$0xff]
      %v335 = vld [vmem:[%s296 + $0x78] sm:$0xff]
      %v336 = vld [vmem:[%s296 + $0x80] sm:$0xff]
      %v337 = vld [vmem:[%s296 + $0x88] sm:$0xff]
      %v338 = vld [vmem:[%s296 + $0x90] sm:$0xff]
      %v339 = vld [vmem:[%s296 + $0x98] sm:$0xff]
      %v340 = vld [vmem:[%s296 + $0xa0] sm:$0xff]
      %v341 = vld [vmem:[%s296 + $0xa8] sm:$0xff]
      %v342 = vld [vmem:[%s296 + $0xb0] sm:$0xff]
      %v343 = vld [vmem:[%s296 + $0xb8] sm:$0xff]
      %v344 = vld [vmem:[%s296 + $0xc0] sm:$0xff]
      %v345 = vld [vmem:[%s296 + $0xc8] sm:$0xff]
      %v346 = vld [vmem:[%s296 + $0xd0] sm:$0xff]
      %v347 = vld [vmem:[%s296 + $0xd8] sm:$0xff]
      %v348 = vld [vmem:[%s296 + $0xe0] sm:$0xff]
      %v349 = vld [vmem:[%s296 + $0xe8] sm:$0xff]
      %v350 = vld [vmem:[%s296 + $0xf0] sm:$0xff]
      %v351 = vld [vmem:[%s296 + $0xf8] sm:$0xff]
      %v352 = vld [vmem:[%s1] sm:$0xff]
      %v353 = vld [vmem:[%s1 + $0x8] sm:$0xff]
      %v354 = vld [vmem:[%s1 + $0x10] sm:$0xff]
      %v355 = vld [vmem:[%s1 + $0x18] sm:$0xff]
      %v356 = vld [vmem:[%s1 + $0x20] sm:$0xff]
      %v357 = vld [vmem:[%s1 + $0x28] sm:$0xff]
      %v358 = vld [vmem:[%s1 + $0x30] sm:$0xff]
      %v359 = vld [vmem:[%s1 + $0x38] sm:$0xff]
      %v360 = vld [vmem:[%s1 + $0x40] sm:$0xff]
      %v361 = vld [vmem:[%s1 + $0x48] sm:$0xff]
      %v362 = vld [vmem:[%s1 + $0x50] sm:$0xff]
      %v363 = vld [vmem:[%s1 + $0x58] sm:$0xff]
      %v364 = vld [vmem:[%s1 + $0x60] sm:$0xff]
      %v365 = vld [vmem:[%s1 + $0x68] sm:$0xff]
      %v366 = vld [vmem:[%s1 + $0x70] sm:$0xff]
      %v367 = vld [vmem:[%s1 + $0x78] sm:$0xff]
      %vm368 = vcmask 523264
      %v370 = vsel %vm368, %v320, 0
      %v373 = vsel %vm368, %v321, 0
      %v376 = vsel %vm368, %v322, 0
      %v379 = vsel %vm368, %v323, 0
      %v382 = vsel %vm368, %v324, 0
      %v385 = vsel %vm368, %v325, 0
      %v388 = vsel %vm368, %v326, 0
      %v391 = vsel %vm368, %v327, 0
      %v394 = vsel %vm368, %v328, 0
      %v397 = vsel %vm368, %v329, 0
      %v400 = vsel %vm368, %v330, 0
      %v403 = vsel %vm368, %v331, 0
      %v406 = vsel %vm368, %v332, 0
      %v409 = vsel %vm368, %v333, 0
      %v412 = vsel %vm368, %v334, 0
      %v415 = vsel %vm368, %v335, 0
      %v418 = vsel %vm368, %v336, 0
      %v421 = vsel %vm368, %v337, 0
      %v424 = vsel %vm368, %v338, 0
      %v427 = vsel %vm368, %v339, 0
      %v430 = vsel %vm368, %v340, 0
      %v433 = vsel %vm368, %v341, 0
      %v436 = vsel %vm368, %v342, 0
      %v439 = vsel %vm368, %v343, 0
      %v442 = vsel %vm368, %v344, 0
      %v445 = vsel %vm368, %v345, 0
      %v448 = vsel %vm368, %v346, 0
      %v451 = vsel %vm368, %v347, 0
      %v454 = vsel %vm368, %v348, 0
      %v457 = vsel %vm368, %v349, 0
      %v460 = vsel %vm368, %v350, 0
      %v463 = vsel %vm368, %v351, 0
      %465 = vmatprep.subr.mxu0 %v353
      %466 = vmatpush1.msra.mxu0 %v352
      %467 = vmatprep.subr.mxu0 %v355
      %468 = vmatpush1.msra.mxu0 %v354
      %469 = vmatprep.subr.mxu0 %v357
      %470 = vmatpush1.msra.mxu0 %v356
      %471 = vmatprep.subr.mxu0 %v359
      %472 = vmatpush1.msra.mxu0 %v358
      %473 = vmatprep.subr.mxu0 %v361
      %474 = vmatpush1.msra.mxu0 %v360
      %475 = vmatprep.subr.mxu0 %v363
      %476 = vmatpush1.msra.mxu0 %v362
      %477 = vmatprep.subr.mxu0 %v365
      %478 = vmatpush1.msra.mxu0 %v364
      %479 = vmatprep.subr.mxu0 %v367
      %480 = vmatpush1.msra.mxu0 %v366
      %481 = vmatprep.subr.mxu0 0.0
      %482 = vmatpush1.msra.mxu0 0.0
      %483 = vmatprep.subr.mxu0 0.0
      %484 = vmatpush1.msra.mxu0 0.0
      %485 = vmatprep.subr.mxu0 0.0
      %486 = vmatpush1.msra.mxu0 0.0
      %487 = vmatprep.subr.mxu0 0.0
      %488 = vmatpush1.msra.mxu0 0.0
      %489 = vmatprep.subr.mxu0 0.0
      %490 = vmatpush1.msra.mxu0 0.0
      %491 = vmatprep.subr.mxu0 0.0
      %492 = vmatpush1.msra.mxu0 0.0
      %493 = vmatprep.subr.mxu0 0.0
      %494 = vmatpush1.msra.mxu0 0.0
      %495 = vmatprep.subr.mxu0 0.0
      %496 = vmatpush1.msra.mxu0 0.0
      %497 = vmatprep.subr.mxu0 0.0
      %498 = vmatpush1.msra.mxu0 0.0
      %499 = vmatprep.subr.mxu0 0.0
      %500 = vmatpush1.msra.mxu0 0.0
      %501 = vmatprep.subr.mxu0 0.0
      %502 = vmatpush1.msra.mxu0 0.0
      %503 = vmatprep.subr.mxu0 0.0
      %504 = vmatpush1.msra.mxu0 0.0
      %505 = vmatprep.subr.mxu0 0.0
      %506 = vmatpush1.msra.mxu0 0.0
      %507 = vmatprep.subr.mxu0 0.0
      %508 = vmatpush1.msra.mxu0 0.0
      %509 = vmatprep.subr.mxu0 0.0
      %510 = vmatpush1.msra.mxu0 0.0
      %511 = vmatprep.subr.mxu0 0.0
      %512 = vmatpush1.msra.mxu0 0.0
      %513 = vmatprep.subr.mxu0 0.0
      %514 = vmatpush1.msra.mxu0 0.0
      %515 = vmatprep.subr.mxu0 0.0
      %516 = vmatpush1.msra.mxu0 0.0
      %517 = vmatprep.subr.mxu0 0.0
      %518 = vmatpush1.msra.mxu0 0.0
      %519 = vmatprep.subr.mxu0 0.0
      %520 = vmatpush1.msra.mxu0 0.0
      %521 = vmatprep.subr.mxu0 0.0
      %522 = vmatpush1.msra.mxu0 0.0
      %523 = vmatprep.subr.mxu0 0.0
      %524 = vmatpush1.msra.mxu0 0.0
      %525 = vmatprep.subr.mxu0 0.0
      %526 = vmatpush1.msra.mxu0 0.0
      %527 = vmatprep.subr.mxu0 0.0
      %528 = vmatpush1.msra.mxu0 0.0
      %529 = vmatprep.mubr.f32.mxu0 0.0
      %530 = vmatmul.mubr.f32.gmra.mrb[0].mxu0 %v370
      %v531 = vpop.f32.mrb[0].mxu0
      %v532 = vadd.f32 0.0, %v531
      %v533 = vpop.f32.mrb[0].mxu0
      %v534 = vadd.f32 0.0, %v533
      %535 = vmatprep.mubr.f32.mxu0 0.0
      %536 = vmatmul.mubr.f32.gmra.mrb[0].mxu0 %v373
      %v537 = vpop.f32.mrb[0].mxu0
      %v538 = vadd.f32 0.0, %v537
      %v539 = vpop.f32.mrb[0].mxu0
      %v540 = vadd.f32 0.0, %v539
      %541 = vmatprep.mubr.f32.mxu0 0.0
      %542 = vmatmul.mubr.f32.gmra.mrb[0].mxu0 %v376
      %v543 = vpop.f32.mrb[0].mxu0
      %v544 = vadd.f32 0.0, %v543
      %v545 = vpop.f32.mrb[0].mxu0
      %v546 = vadd.f32 0.0, %v545
      %547 = vmatprep.mubr.f32.mxu0 0.0
      %548 = vmatmul.mubr.f32.gmra.mrb[0].mxu0 %v379
      %v549 = vpop.f32.mrb[0].mxu0
      %v550 = vadd.f32 0.0, %v549
      %v551 = vpop.f32.mrb[0].mxu0
      %v552 = vadd.f32 0.0, %v551
      %553 = vmatprep.mubr.f32.mxu0 0.0
      %554 = vmatmul.mubr.f32.gmra.mrb[0].mxu0 %v382
      %v555 = vpop.f32.mrb[0].mxu0
      %v556 = vadd.f32 0.0, %v555
      %v557 = vpop.f32.mrb[0].mxu0
      %v558 = vadd.f32 0.0, %v557
      %559 = vmatprep.mubr.f32.mxu0 0.0
      %560 = vmatmul.mubr.f32.gmra.mrb[0].mxu0 %v385
      %v561 = vpop.f32.mrb[0].mxu0
      %v562 = vadd.f32 0.0, %v561
      %v563 = vpop.f32.mrb[0].mxu0
      %v564 = vadd.f32 0.0, %v563
      %565 = vmatprep.mubr.f32.mxu0 0.0
      %566 = vmatmul.mubr.f32.gmra.mrb[0].mxu0 %v388
      %v567 = vpop.f32.mrb[0].mxu0
      %v568 = vadd.f32 0.0, %v567
      %v569 = vpop.f32.mrb[0].mxu0
      %v570 = vadd.f32 0.0, %v569
      %571 = vmatprep.mubr.f32.mxu0 0.0
      %572 = vmatmul.mubr.f32.gmra.mrb[0].mxu0 %v391
      %v573 = vpop.f32.mrb[0].mxu0
      %v574 = vadd.f32 0.0, %v573
      %v575 = vpop.f32.mrb[0].mxu0
      %v576 = vadd.f32 0.0, %v575
      %577 = vmatprep.mubr.f32.mxu0 0.0
      %578 = vmatmul.mubr.f32.gmra.mrb[0].mxu0 %v394
      %v579 = vpop.f32.mrb[0].mxu0
      %v580 = vadd.f32 0.0, %v579
      %v581 = vpop.f32.mrb[0].mxu0
      %v582 = vadd.f32 0.0, %v581
      %583 = vmatprep.mubr.f32.mxu0 0.0
      %584 = vmatmul.mubr.f32.gmra.mrb[0].mxu0 %v397
      %v585 = vpop.f32.mrb[0].mxu0
      %v586 = vadd.f32 0.0, %v585
      %v587 = vpop.f32.mrb[0].mxu0
      %v588 = vadd.f32 0.0, %v587
      %589 = vmatprep.mubr.f32.mxu0 0.0
      %590 = vmatmul.mubr.f32.gmra.mrb[0].mxu0 %v400
      %v591 = vpop.f32.mrb[0].mxu0
      %v592 = vadd.f32 0.0, %v591
      %v593 = vpop.f32.mrb[0].mxu0
      %v594 = vadd.f32 0.0, %v593
      %595 = vmatprep.mubr.f32.mxu0 0.0
      %596 = vmatmul.mubr.f32.gmra.mrb[0].mxu0 %v403
      %v597 = vpop.f32.mrb[0].mxu0
      %v598 = vadd.f32 0.0, %v597
      %v599 = vpop.f32.mrb[0].mxu0
      %v600 = vadd.f32 0.0, %v599
      %601 = vmatprep.mubr.f32.mxu0 0.0
      %602 = vmatmul.mubr.f32.gmra.mrb[0].mxu0 %v406
      %v603 = vpop.f32.mrb[0].mxu0
      %v604 = vadd.f32 0.0, %v603
      %v605 = vpop.f32.mrb[0].mxu0
      %v606 = vadd.f32 0.0, %v605
      %607 = vmatprep.mubr.f32.mxu0 0.0
      %608 = vmatmul.mubr.f32.gmra.mrb[0].mxu0 %v409
      %v609 = vpop.f32.mrb[0].mxu0
      %v610 = vadd.f32 0.0, %v609
      %v611 = vpop.f32.mrb[0].mxu0
      %v612 = vadd.f32 0.0, %v611
      %613 = vmatprep.mubr.f32.mxu0 0.0
      %614 = vmatmul.mubr.f32.gmra.mrb[0].mxu0 %v412
      %v615 = vpop.f32.mrb[0].mxu0
      %v616 = vadd.f32 0.0, %v615
      %v617 = vpop.f32.mrb[0].mxu0
      %v618 = vadd.f32 0.0, %v617
      %619 = vmatprep.mubr.f32.mxu0 0.0
      %620 = vmatmul.mubr.f32.gmra.mrb[0].mxu0 %v415
      %v621 = vpop.f32.mrb[0].mxu0
      %v622 = vadd.f32 0.0, %v621
      %v623 = vpop.f32.mrb[0].mxu0
      %v624 = vadd.f32 0.0, %v623
      %625 = vmatprep.mubr.f32.mxu0 0.0
      %626 = vmatmul.mubr.f32.gmra.mrb[0].mxu0 %v418
      %v627 = vpop.f32.mrb[0].mxu0
      %v628 = vadd.f32 0.0, %v627
      %v629 = vpop.f32.mrb[0].mxu0
      %v630 = vadd.f32 0.0, %v629
      %631 = vmatprep.mubr.f32.mxu0 0.0
      %632 = vmatmul.mubr.f32.gmra.mrb[0].mxu0 %v421
      %v633 = vpop.f32.mrb[0].mxu0
      %v634 = vadd.f32 0.0, %v633
      %v635 = vpop.f32.mrb[0].mxu0
      %v636 = vadd.f32 0.0, %v635
      %637 = vmatprep.mubr.f32.mxu0 0.0
      %638 = vmatmul.mubr.f32.gmra.mrb[0].mxu0 %v424
      %v639 = vpop.f32.mrb[0].mxu0
      %v640 = vadd.f32 0.0, %v639
      %v641 = vpop.f32.mrb[0].mxu0
      %v642 = vadd.f32 0.0, %v641
      %643 = vmatprep.mubr.f32.mxu0 0.0
      %644 = vmatmul.mubr.f32.gmra.mrb[0].mxu0 %v427
      %v645 = vpop.f32.mrb[0].mxu0
      %v646 = vadd.f32 0.0, %v645
      %v647 = vpop.f32.mrb[0].mxu0
      %v648 = vadd.f32 0.0, %v647
      %649 = vmatprep.mubr.f32.mxu0 0.0
      %650 = vmatmul.mubr.f32.gmra.mrb[0].mxu0 %v430
      %v651 = vpop.f32.mrb[0].mxu0
      %v652 = vadd.f32 0.0, %v651
      %v653 = vpop.f32.mrb[0].mxu0
      %v654 = vadd.f32 0.0, %v653
      %655 = vmatprep.mubr.f32.mxu0 0.0
      %656 = vmatmul.mubr.f32.gmra.mrb[0].mxu0 %v433
      %v657 = vpop.f32.mrb[0].mxu0
      %v658 = vadd.f32 0.0, %v657
      %v659 = vpop.f32.mrb[0].mxu0
      %v660 = vadd.f32 0.0, %v659
      %661 = vmatprep.mubr.f32.mxu0 0.0
      %662 = vmatmul.mubr.f32.gmra.mrb[0].mxu0 %v436
      %v663 = vpop.f32.mrb[0].mxu0
      %v664 = vadd.f32 0.0, %v663
      %v665 = vpop.f32.mrb[0].mxu0
      %v666 = vadd.f32 0.0, %v665
      %667 = vmatprep.mubr.f32.mxu0 0.0
      %668 = vmatmul.mubr.f32.gmra.mrb[0].mxu0 %v439
      %v669 = vpop.f32.mrb[0].mxu0
      %v670 = vadd.f32 0.0, %v669
      %v671 = vpop.f32.mrb[0].mxu0
      %v672 = vadd.f32 0.0, %v671
      %673 = vmatprep.mubr.f32.mxu0 0.0
      %674 = vmatmul.mubr.f32.gmra.mrb[0].mxu0 %v442
      %v675 = vpop.f32.mrb[0].mxu0
      %v676 = vadd.f32 0.0, %v675
      %v677 = vpop.f32.mrb[0].mxu0
      %v678 = vadd.f32 0.0, %v677
      %679 = vmatprep.mubr.f32.mxu0 0.0
      %680 = vmatmul.mubr.f32.gmra.mrb[0].mxu0 %v445
      %v681 = vpop.f32.mrb[0].mxu0
      %v682 = vadd.f32 0.0, %v681
      %v683 = vpop.f32.mrb[0].mxu0
      %v684 = vadd.f32 0.0, %v683
      %685 = vmatprep.mubr.f32.mxu0 0.0
      %686 = vmatmul.mubr.f32.gmra.mrb[0].mxu0 %v448
      %v687 = vpop.f32.mrb[0].mxu0
      %v688 = vadd.f32 0.0, %v687
      %v689 = vpop.f32.mrb[0].mxu0
      %v690 = vadd.f32 0.0, %v689
      %691 = vmatprep.mubr.f32.mxu0 0.0
      %692 = vmatmul.mubr.f32.gmra.mrb[0].mxu0 %v451
      %v693 = vpop.f32.mrb[0].mxu0
      %v694 = vadd.f32 0.0, %v693
      %v695 = vpop.f32.mrb[0].mxu0
      %v696 = vadd.f32 0.0, %v695
      %697 = vmatprep.mubr.f32.mxu0 0.0
      %698 = vmatmul.mubr.f32.gmra.mrb[0].mxu0 %v454
      %v699 = vpop.f32.mrb[0].mxu0
      %v700 = vadd.f32 0.0, %v699
      %v701 = vpop.f32.mrb[0].mxu0
      %v702 = vadd.f32 0.0, %v701
      %703 = vmatprep.mubr.f32.mxu0 0.0
      %704 = vmatmul.mubr.f32.gmra.mrb[0].mxu0 %v457
      %v705 = vpop.f32.mrb[0].mxu0
      %v706 = vadd.f32 0.0, %v705
      %v707 = vpop.f32.mrb[0].mxu0
      %v708 = vadd.f32 0.0, %v707
      %709 = vmatprep.mubr.f32.mxu0 0.0
      %710 = vmatmul.mubr.f32.gmra.mrb[0].mxu0 %v460
      %v711 = vpop.f32.mrb[0].mxu0
      %v712 = vadd.f32 0.0, %v711
      %v713 = vpop.f32.mrb[0].mxu0
      %v714 = vadd.f32 0.0, %v713
      %715 = vmatprep.mubr.f32.mxu0 0.0
      %716 = vmatmul.mubr.f32.gmra.mrb[0].mxu0 %v463
      %v717 = vpop.f32.mrb[0].mxu0
      %v718 = vadd.f32 0.0, %v717
      %v719 = vpop.f32.mrb[0].mxu0
      %v720 = vadd.f32 0.0, %v719
      %721 = vdwg.mxu0
      %v722 = vlaneseq
      %v723 = vand.u32 %v722, 127
      %v724 = vld [vmem:[%s3] sm:$0x1]
      %v726 = vlaneseq
      %v727 = vshrl.u32 %v726, 7
      %v728 = vsub.s32 0, %v727
      %v729 = vrot.slane %v724, %v728
      %v731 = vsub.f32 %v729, %v532
      %v732 = vsub.f32 %v729, %v538
      %v733 = vsub.f32 %v729, %v544
      %v734 = vsub.f32 %v729, %v550
      %v735 = vsub.f32 %v729, %v556
      %v736 = vsub.f32 %v729, %v562
      %v737 = vsub.f32 %v729, %v568
      %v738 = vsub.f32 %v729, %v574
      %v739 = vsub.f32 %v729, %v580
      %v740 = vsub.f32 %v729, %v586
      %v741 = vsub.f32 %v729, %v592
      %v742 = vsub.f32 %v729, %v598
      %v743 = vsub.f32 %v729, %v604
      %v744 = vsub.f32 %v729, %v610
      %v745 = vsub.f32 %v729, %v616
      %v746 = vsub.f32 %v729, %v622
      %v747 = vsub.f32 %v729, %v628
      %v748 = vsub.f32 %v729, %v634
      %v749 = vsub.f32 %v729, %v640
      %v750 = vsub.f32 %v729, %v646
      %v751 = vsub.f32 %v729, %v652
      %v752 = vsub.f32 %v729, %v658
      %v753 = vsub.f32 %v729, %v664
      %v754 = vsub.f32 %v729, %v670
      %v755 = vsub.f32 %v729, %v676
      %v756 = vsub.f32 %v729, %v682
      %v757 = vsub.f32 %v729, %v688
      %v758 = vsub.f32 %v729, %v694
      %v759 = vsub.f32 %v729, %v700
      %v760 = vsub.f32 %v729, %v706
      %v761 = vsub.f32 %v729, %v712
      %v762 = vsub.f32 %v729, %v718
      %763 = vmin.xlane.f32.xlu0 %v731
      %v764 = vpop.xlane.xlu0 %763
      %765 = vmin.xlane.f32.xlu0 %v732
      %v766 = vpop.xlane.xlu0 %765
      %767 = vmin.xlane.f32.xlu0 %v733
      %v768 = vpop.xlane.xlu0 %767
      %769 = vmin.xlane.f32.xlu0 %v734
      %v770 = vpop.xlane.xlu0 %769
      %771 = vmin.xlane.f32.xlu0 %v735
      %v772 = vpop.xlane.xlu0 %771
      %773 = vmin.xlane.f32.xlu0 %v736
      %v774 = vpop.xlane.xlu0 %773
      %775 = vmin.xlane.f32.xlu0 %v737
      %v776 = vpop.xlane.xlu0 %775
      %777 = vmin.xlane.f32.xlu0 %v738
      %v778 = vpop.xlane.xlu0 %777
      %779 = vmin.xlane.f32.xlu0 %v739
      %v780 = vpop.xlane.xlu0 %779
      %781 = vmin.xlane.f32.xlu0 %v740
      %v782 = vpop.xlane.xlu0 %781
      %783 = vmin.xlane.f32.xlu0 %v741
      %v784 = vpop.xlane.xlu0 %783
      %785 = vmin.xlane.f32.xlu0 %v742
      %v786 = vpop.xlane.xlu0 %785
      %787 = vmin.xlane.f32.xlu0 %v743
      %v788 = vpop.xlane.xlu0 %787
      %789 = vmin.xlane.f32.xlu0 %v744
      %v790 = vpop.xlane.xlu0 %789
      %791 = vmin.xlane.f32.xlu0 %v745
      %v792 = vpop.xlane.xlu0 %791
      %793 = vmin.xlane.f32.xlu0 %v746
      %v794 = vpop.xlane.xlu0 %793
      %795 = vmin.xlane.f32.xlu0 %v747
      %v796 = vpop.xlane.xlu0 %795
      %797 = vmin.xlane.f32.xlu0 %v748
      %v798 = vpop.xlane.xlu0 %797
      %799 = vmin.xlane.f32.xlu0 %v749
      %v800 = vpop.xlane.xlu0 %799
      %801 = vmin.xlane.f32.xlu0 %v750
      %v802 = vpop.xlane.xlu0 %801
      %803 = vmin.xlane.f32.xlu0 %v751
      %v804 = vpop.xlane.xlu0 %803
      %805 = vmin.xlane.f32.xlu0 %v752
      %v806 = vpop.xlane.xlu0 %805
      %807 = vmin.xlane.f32.xlu0 %v753
      %v808 = vpop.xlane.xlu0 %807
      %809 = vmin.xlane.f32.xlu0 %v754
      %v810 = vpop.xlane.xlu0 %809
      %811 = vmin.xlane.f32.xlu0 %v755
      %v812 = vpop.xlane.xlu0 %811
      %813 = vmin.xlane.f32.xlu0 %v756
      %v814 = vpop.xlane.xlu0 %813
      %815 = vmin.xlane.f32.xlu0 %v757
      %v816 = vpop.xlane.xlu0 %815
      %817 = vmin.xlane.f32.xlu0 %v758
      %v818 = vpop.xlane.xlu0 %817
      %819 = vmin.xlane.f32.xlu0 %v759
      %v820 = vpop.xlane.xlu0 %819
      %821 = vmin.xlane.f32.xlu0 %v760
      %v822 = vpop.xlane.xlu0 %821
      %823 = vmin.xlane.f32.xlu0 %v761
      %v824 = vpop.xlane.xlu0 %823
      %825 = vmin.xlane.f32.xlu0 %v762
      %v826 = vpop.xlane.xlu0 %825
      %vm827 = vcmp.eq.f32.partialorder %v731, %v764
      %vm828 = vcmp.eq.f32.partialorder %v732, %v766
      %vm829 = vcmp.eq.f32.partialorder %v733, %v768
      %vm830 = vcmp.eq.f32.partialorder %v734, %v770
      %vm831 = vcmp.eq.f32.partialorder %v735, %v772
      %vm832 = vcmp.eq.f32.partialorder %v736, %v774
      %vm833 = vcmp.eq.f32.partialorder %v737, %v776
      %vm834 = vcmp.eq.f32.partialorder %v738, %v778
      %vm835 = vcmp.eq.f32.partialorder %v739, %v780
      %vm836 = vcmp.eq.f32.partialorder %v740, %v782
      %vm837 = vcmp.eq.f32.partialorder %v741, %v784
      %vm838 = vcmp.eq.f32.partialorder %v742, %v786
      %vm839 = vcmp.eq.f32.partialorder %v743, %v788
      %vm840 = vcmp.eq.f32.partialorder %v744, %v790
      %vm841 = vcmp.eq.f32.partialorder %v745, %v792
      %vm842 = vcmp.eq.f32.partialorder %v746, %v794
      %vm843 = vcmp.eq.f32.partialorder %v747, %v796
      %vm844 = vcmp.eq.f32.partialorder %v748, %v798
      %vm845 = vcmp.eq.f32.partialorder %v749, %v800
      %vm846 = vcmp.eq.f32.partialorder %v750, %v802
      %vm847 = vcmp.eq.f32.partialorder %v751, %v804
      %vm848 = vcmp.eq.f32.partialorder %v752, %v806
      %vm849 = vcmp.eq.f32.partialorder %v753, %v808
      %vm850 = vcmp.eq.f32.partialorder %v754, %v810
      %vm851 = vcmp.eq.f32.partialorder %v755, %v812
      %vm852 = vcmp.eq.f32.partialorder %v756, %v814
      %vm853 = vcmp.eq.f32.partialorder %v757, %v816
      %vm854 = vcmp.eq.f32.partialorder %v758, %v818
      %vm855 = vcmp.eq.f32.partialorder %v759, %v820
      %vm856 = vcmp.eq.f32.partialorder %v760, %v822
      %vm857 = vcmp.eq.f32.partialorder %v761, %v824
      %vm858 = vcmp.eq.f32.partialorder %v762, %v826
      %v859 = vsel %vm827, %v723, 128
      %v860 = vsel %vm828, %v723, 128
      %v861 = vsel %vm829, %v723, 128
      %v862 = vsel %vm830, %v723, 128
      %v863 = vsel %vm831, %v723, 128
      %v864 = vsel %vm832, %v723, 128
      %v865 = vsel %vm833, %v723, 128
      %v866 = vsel %vm834, %v723, 128
      %v867 = vsel %vm835, %v723, 128
      %v868 = vsel %vm836, %v723, 128
      %v869 = vsel %vm837, %v723, 128
      %v870 = vsel %vm838, %v723, 128
      %v871 = vsel %vm839, %v723, 128
      %v872 = vsel %vm840, %v723, 128
      %v873 = vsel %vm841, %v723, 128
      %v874 = vsel %vm842, %v723, 128
      %v875 = vsel %vm843, %v723, 128
      %v876 = vsel %vm844, %v723, 128
      %v877 = vsel %vm845, %v723, 128
      %v878 = vsel %vm846, %v723, 128
      %v879 = vsel %vm847, %v723, 128
      %v880 = vsel %vm848, %v723, 128
      %v881 = vsel %vm849, %v723, 128
      %v882 = vsel %vm850, %v723, 128
      %v883 = vsel %vm851, %v723, 128
      %v884 = vsel %vm852, %v723, 128
      %v885 = vsel %vm853, %v723, 128
      %v886 = vsel %vm854, %v723, 128
      %v887 = vsel %vm855, %v723, 128
      %v888 = vsel %vm856, %v723, 128
      %v889 = vsel %vm857, %v723, 128
      %v890 = vsel %vm858, %v723, 128
      %v891 = vand.u32 %v859, 65535
      %v892 = vshra.s32 %v859, 16
      %v893 = vcvt.s32.f32 %v891
      %v894 = vcvt.s32.f32 %v892
      %895 = vmin.xlane.f32.xlu0 %v894
      %v896 = vpop.xlane.xlu0 %895
      %vm897 = vcmp.eq.f32.partialorder %v894, %v896
      %v898 = vsel %vm897, %v893, inf
      %899 = vmin.xlane.f32.xlu0 %v898
      %v900 = vpop.xlane.xlu0 %899
      %v901 = vcvt.f32.s32 %v900
      %v902 = vcvt.f32.s32 %v896
      %v903 = vshll.u32 %v902, 16
      %v904 = vadd.s32 %v903, %v901
      %v905 = vand.u32 %v860, 65535
      %v906 = vshra.s32 %v860, 16
      %v907 = vcvt.s32.f32 %v905
      %v908 = vcvt.s32.f32 %v906
      %909 = vmin.xlane.f32.xlu0 %v908
      %v910 = vpop.xlane.xlu0 %909
      %vm911 = vcmp.eq.f32.partialorder %v908, %v910
      %v912 = vsel %vm911, %v907, inf
      %913 = vmin.xlane.f32.xlu0 %v912
      %v914 = vpop.xlane.xlu0 %913
      %v915 = vcvt.f32.s32 %v914
      %v916 = vcvt.f32.s32 %v910
      %v917 = vshll.u32 %v916, 16
      %v918 = vadd.s32 %v917, %v915
      %v919 = vand.u32 %v861, 65535
      %v920 = vshra.s32 %v861, 16
      %v921 = vcvt.s32.f32 %v919
      %v922 = vcvt.s32.f32 %v920
      %923 = vmin.xlane.f32.xlu0 %v922
      %v924 = vpop.xlane.xlu0 %923
      %vm925 = vcmp.eq.f32.partialorder %v922, %v924
      %v926 = vsel %vm925, %v921, inf
      %927 = vmin.xlane.f32.xlu0 %v926
      %v928 = vpop.xlane.xlu0 %927
      %v929 = vcvt.f32.s32 %v928
      %v930 = vcvt.f32.s32 %v924
      %v931 = vshll.u32 %v930, 16
      %v932 = vadd.s32 %v931, %v929
      %v933 = vand.u32 %v862, 65535
      %v934 = vshra.s32 %v862, 16
      %v935 = vcvt.s32.f32 %v933
      %v936 = vcvt.s32.f32 %v934
      %937 = vmin.xlane.f32.xlu0 %v936
      %v938 = vpop.xlane.xlu0 %937
      %vm939 = vcmp.eq.f32.partialorder %v936, %v938
      %v940 = vsel %vm939, %v935, inf
      %941 = vmin.xlane.f32.xlu0 %v940
      %v942 = vpop.xlane.xlu0 %941
      %v943 = vcvt.f32.s32 %v942
      %v944 = vcvt.f32.s32 %v938
      %v945 = vshll.u32 %v944, 16
      %v946 = vadd.s32 %v945, %v943
      %v947 = vand.u32 %v863, 65535
      %v948 = vshra.s32 %v863, 16
      %v949 = vcvt.s32.f32 %v947
      %v950 = vcvt.s32.f32 %v948
      %951 = vmin.xlane.f32.xlu0 %v950
      %v952 = vpop.xlane.xlu0 %951
      %vm953 = vcmp.eq.f32.partialorder %v950, %v952
      %v954 = vsel %vm953, %v949, inf
      %955 = vmin.xlane.f32.xlu0 %v954
      %v956 = vpop.xlane.xlu0 %955
      %v957 = vcvt.f32.s32 %v956
      %v958 = vcvt.f32.s32 %v952
      %v959 = vshll.u32 %v958, 16
      %v960 = vadd.s32 %v959, %v957
      %v961 = vand.u32 %v864, 65535
      %v962 = vshra.s32 %v864, 16
      %v963 = vcvt.s32.f32 %v961
      %v964 = vcvt.s32.f32 %v962
      %965 = vmin.xlane.f32.xlu0 %v964
      %v966 = vpop.xlane.xlu0 %965
      %vm967 = vcmp.eq.f32.partialorder %v964, %v966
      %v968 = vsel %vm967, %v963, inf
      %969 = vmin.xlane.f32.xlu0 %v968
      %v970 = vpop.xlane.xlu0 %969
      %v971 = vcvt.f32.s32 %v970
      %v972 = vcvt.f32.s32 %v966
      %v973 = vshll.u32 %v972, 16
      %v974 = vadd.s32 %v973, %v971
      %v975 = vand.u32 %v865, 65535
      %v976 = vshra.s32 %v865, 16
      %v977 = vcvt.s32.f32 %v975
      %v978 = vcvt.s32.f32 %v976
      %979 = vmin.xlane.f32.xlu0 %v978
      %v980 = vpop.xlane.xlu0 %979
      %vm981 = vcmp.eq.f32.partialorder %v978, %v980
      %v982 = vsel %vm981, %v977, inf
      %983 = vmin.xlane.f32.xlu0 %v982
      %v984 = vpop.xlane.xlu0 %983
      %v985 = vcvt.f32.s32 %v984
      %v986 = vcvt.f32.s32 %v980
      %v987 = vshll.u32 %v986, 16
      %v988 = vadd.s32 %v987, %v985
      %v989 = vand.u32 %v866, 65535
      %v990 = vshra.s32 %v866, 16
      %v991 = vcvt.s32.f32 %v989
      %v992 = vcvt.s32.f32 %v990
      %993 = vmin.xlane.f32.xlu0 %v992
      %v994 = vpop.xlane.xlu0 %993
      %vm995 = vcmp.eq.f32.partialorder %v992, %v994
      %v996 = vsel %vm995, %v991, inf
      %997 = vmin.xlane.f32.xlu0 %v996
      %v998 = vpop.xlane.xlu0 %997
      %v999 = vcvt.f32.s32 %v998
      %v1000 = vcvt.f32.s32 %v994
      %v1001 = vshll.u32 %v1000, 16
      %v1002 = vadd.s32 %v1001, %v999
      %v1003 = vand.u32 %v867, 65535
      %v1004 = vshra.s32 %v867, 16
      %v1005 = vcvt.s32.f32 %v1003
      %v1006 = vcvt.s32.f32 %v1004
      %1007 = vmin.xlane.f32.xlu0 %v1006
      %v1008 = vpop.xlane.xlu0 %1007
      %vm1009 = vcmp.eq.f32.partialorder %v1006, %v1008
      %v1010 = vsel %vm1009, %v1005, inf
      %1011 = vmin.xlane.f32.xlu0 %v1010
      %v1012 = vpop.xlane.xlu0 %1011
      %v1013 = vcvt.f32.s32 %v1012
      %v1014 = vcvt.f32.s32 %v1008
      %v1015 = vshll.u32 %v1014, 16
      %v1016 = vadd.s32 %v1015, %v1013
      %v1017 = vand.u32 %v868, 65535
      %v1018 = vshra.s32 %v868, 16
      %v1019 = vcvt.s32.f32 %v1017
      %v1020 = vcvt.s32.f32 %v1018
      %1021 = vmin.xlane.f32.xlu0 %v1020
      %v1022 = vpop.xlane.xlu0 %1021
      %vm1023 = vcmp.eq.f32.partialorder %v1020, %v1022
      %v1024 = vsel %vm1023, %v1019, inf
      %1025 = vmin.xlane.f32.xlu0 %v1024
      %v1026 = vpop.xlane.xlu0 %1025
      %v1027 = vcvt.f32.s32 %v1026
      %v1028 = vcvt.f32.s32 %v1022
      %v1029 = vshll.u32 %v1028, 16
      %v1030 = vadd.s32 %v1029, %v1027
      %v1031 = vand.u32 %v869, 65535
      %v1032 = vshra.s32 %v869, 16
      %v1033 = vcvt.s32.f32 %v1031
      %v1034 = vcvt.s32.f32 %v1032
      %1035 = vmin.xlane.f32.xlu0 %v1034
      %v1036 = vpop.xlane.xlu0 %1035
      %vm1037 = vcmp.eq.f32.partialorder %v1034, %v1036
      %v1038 = vsel %vm1037, %v1033, inf
      %1039 = vmin.xlane.f32.xlu0 %v1038
      %v1040 = vpop.xlane.xlu0 %1039
      %v1041 = vcvt.f32.s32 %v1040
      %v1042 = vcvt.f32.s32 %v1036
      %v1043 = vshll.u32 %v1042, 16
      %v1044 = vadd.s32 %v1043, %v1041
      %v1045 = vand.u32 %v870, 65535
      %v1046 = vshra.s32 %v870, 16
      %v1047 = vcvt.s32.f32 %v1045
      %v1048 = vcvt.s32.f32 %v1046
      %1049 = vmin.xlane.f32.xlu0 %v1048
      %v1050 = vpop.xlane.xlu0 %1049
      %vm1051 = vcmp.eq.f32.partialorder %v1048, %v1050
      %v1052 = vsel %vm1051, %v1047, inf
      %1053 = vmin.xlane.f32.xlu0 %v1052
      %v1054 = vpop.xlane.xlu0 %1053
      %v1055 = vcvt.f32.s32 %v1054
      %v1056 = vcvt.f32.s32 %v1050
      %v1057 = vshll.u32 %v1056, 16
      %v1058 = vadd.s32 %v1057, %v1055
      %v1059 = vand.u32 %v871, 65535
      %v1060 = vshra.s32 %v871, 16
      %v1061 = vcvt.s32.f32 %v1059
      %v1062 = vcvt.s32.f32 %v1060
      %1063 = vmin.xlane.f32.xlu0 %v1062
      %v1064 = vpop.xlane.xlu0 %1063
      %vm1065 = vcmp.eq.f32.partialorder %v1062, %v1064
      %v1066 = vsel %vm1065, %v1061, inf
      %1067 = vmin.xlane.f32.xlu0 %v1066
      %v1068 = vpop.xlane.xlu0 %1067
      %v1069 = vcvt.f32.s32 %v1068
      %v1070 = vcvt.f32.s32 %v1064
      %v1071 = vshll.u32 %v1070, 16
      %v1072 = vadd.s32 %v1071, %v1069
      %v1073 = vand.u32 %v872, 65535
      %v1074 = vshra.s32 %v872, 16
      %v1075 = vcvt.s32.f32 %v1073
      %v1076 = vcvt.s32.f32 %v1074
      %1077 = vmin.xlane.f32.xlu0 %v1076
      %v1078 = vpop.xlane.xlu0 %1077
      %vm1079 = vcmp.eq.f32.partialorder %v1076, %v1078
      %v1080 = vsel %vm1079, %v1075, inf
      %1081 = vmin.xlane.f32.xlu0 %v1080
      %v1082 = vpop.xlane.xlu0 %1081
      %v1083 = vcvt.f32.s32 %v1082
      %v1084 = vcvt.f32.s32 %v1078
      %v1085 = vshll.u32 %v1084, 16
      %v1086 = vadd.s32 %v1085, %v1083
      %v1087 = vand.u32 %v873, 65535
      %v1088 = vshra.s32 %v873, 16
      %v1089 = vcvt.s32.f32 %v1087
      %v1090 = vcvt.s32.f32 %v1088
      %1091 = vmin.xlane.f32.xlu0 %v1090
      %v1092 = vpop.xlane.xlu0 %1091
      %vm1093 = vcmp.eq.f32.partialorder %v1090, %v1092
      %v1094 = vsel %vm1093, %v1089, inf
      %1095 = vmin.xlane.f32.xlu0 %v1094
      %v1096 = vpop.xlane.xlu0 %1095
      %v1097 = vcvt.f32.s32 %v1096
      %v1098 = vcvt.f32.s32 %v1092
      %v1099 = vshll.u32 %v1098, 16
      %v1100 = vadd.s32 %v1099, %v1097
      %v1101 = vand.u32 %v874, 65535
      %v1102 = vshra.s32 %v874, 16
      %v1103 = vcvt.s32.f32 %v1101
      %v1104 = vcvt.s32.f32 %v1102
      %1105 = vmin.xlane.f32.xlu0 %v1104
      %v1106 = vpop.xlane.xlu0 %1105
      %vm1107 = vcmp.eq.f32.partialorder %v1104, %v1106
      %v1108 = vsel %vm1107, %v1103, inf
      %1109 = vmin.xlane.f32.xlu0 %v1108
      %v1110 = vpop.xlane.xlu0 %1109
      %v1111 = vcvt.f32.s32 %v1110
      %v1112 = vcvt.f32.s32 %v1106
      %v1113 = vshll.u32 %v1112, 16
      %v1114 = vadd.s32 %v1113, %v1111
      %v1115 = vand.u32 %v875, 65535
      %v1116 = vshra.s32 %v875, 16
      %v1117 = vcvt.s32.f32 %v1115
      %v1118 = vcvt.s32.f32 %v1116
      %1119 = vmin.xlane.f32.xlu0 %v1118
      %v1120 = vpop.xlane.xlu0 %1119
      %vm1121 = vcmp.eq.f32.partialorder %v1118, %v1120
      %v1122 = vsel %vm1121, %v1117, inf
      %1123 = vmin.xlane.f32.xlu0 %v1122
      %v1124 = vpop.xlane.xlu0 %1123
      %v1125 = vcvt.f32.s32 %v1124
      %v1126 = vcvt.f32.s32 %v1120
      %v1127 = vshll.u32 %v1126, 16
      %v1128 = vadd.s32 %v1127, %v1125
      %v1129 = vand.u32 %v876, 65535
      %v1130 = vshra.s32 %v876, 16
      %v1131 = vcvt.s32.f32 %v1129
      %v1132 = vcvt.s32.f32 %v1130
      %1133 = vmin.xlane.f32.xlu0 %v1132
      %v1134 = vpop.xlane.xlu0 %1133
      %vm1135 = vcmp.eq.f32.partialorder %v1132, %v1134
      %v1136 = vsel %vm1135, %v1131, inf
      %1137 = vmin.xlane.f32.xlu0 %v1136
      %v1138 = vpop.xlane.xlu0 %1137
      %v1139 = vcvt.f32.s32 %v1138
      %v1140 = vcvt.f32.s32 %v1134
      %v1141 = vshll.u32 %v1140, 16
      %v1142 = vadd.s32 %v1141, %v1139
      %v1143 = vand.u32 %v877, 65535
      %v1144 = vshra.s32 %v877, 16
      %v1145 = vcvt.s32.f32 %v1143
      %v1146 = vcvt.s32.f32 %v1144
      %1147 = vmin.xlane.f32.xlu0 %v1146
      %v1148 = vpop.xlane.xlu0 %1147
      %vm1149 = vcmp.eq.f32.partialorder %v1146, %v1148
      %v1150 = vsel %vm1149, %v1145, inf
      %1151 = vmin.xlane.f32.xlu0 %v1150
      %v1152 = vpop.xlane.xlu0 %1151
      %v1153 = vcvt.f32.s32 %v1152
      %v1154 = vcvt.f32.s32 %v1148
      %v1155 = vshll.u32 %v1154, 16
      %v1156 = vadd.s32 %v1155, %v1153
      %v1157 = vand.u32 %v878, 65535
      %v1158 = vshra.s32 %v878, 16
      %v1159 = vcvt.s32.f32 %v1157
      %v1160 = vcvt.s32.f32 %v1158
      %1161 = vmin.xlane.f32.xlu0 %v1160
      %v1162 = vpop.xlane.xlu0 %1161
      %vm1163 = vcmp.eq.f32.partialorder %v1160, %v1162
      %v1164 = vsel %vm1163, %v1159, inf
      %1165 = vmin.xlane.f32.xlu0 %v1164
      %v1166 = vpop.xlane.xlu0 %1165
      %v1167 = vcvt.f32.s32 %v1166
      %v1168 = vcvt.f32.s32 %v1162
      %v1169 = vshll.u32 %v1168, 16
      %v1170 = vadd.s32 %v1169, %v1167
      %v1171 = vand.u32 %v879, 65535
      %v1172 = vshra.s32 %v879, 16
      %v1173 = vcvt.s32.f32 %v1171
      %v1174 = vcvt.s32.f32 %v1172
      %1175 = vmin.xlane.f32.xlu0 %v1174
      %v1176 = vpop.xlane.xlu0 %1175
      %vm1177 = vcmp.eq.f32.partialorder %v1174, %v1176
      %v1178 = vsel %vm1177, %v1173, inf
      %1179 = vmin.xlane.f32.xlu0 %v1178
      %v1180 = vpop.xlane.xlu0 %1179
      %v1181 = vcvt.f32.s32 %v1180
      %v1182 = vcvt.f32.s32 %v1176
      %v1183 = vshll.u32 %v1182, 16
      %v1184 = vadd.s32 %v1183, %v1181
      %v1185 = vand.u32 %v880, 65535
      %v1186 = vshra.s32 %v880, 16
      %v1187 = vcvt.s32.f32 %v1185
      %v1188 = vcvt.s32.f32 %v1186
      %1189 = vmin.xlane.f32.xlu0 %v1188
      %v1190 = vpop.xlane.xlu0 %1189
      %vm1191 = vcmp.eq.f32.partialorder %v1188, %v1190
      %v1192 = vsel %vm1191, %v1187, inf
      %1193 = vmin.xlane.f32.xlu0 %v1192
      %v1194 = vpop.xlane.xlu0 %1193
      %v1195 = vcvt.f32.s32 %v1194
      %v1196 = vcvt.f32.s32 %v1190
      %v1197 = vshll.u32 %v1196, 16
      %v1198 = vadd.s32 %v1197, %v1195
      %v1199 = vand.u32 %v881, 65535
      %v1200 = vshra.s32 %v881, 16
      %v1201 = vcvt.s32.f32 %v1199
      %v1202 = vcvt.s32.f32 %v1200
      %1203 = vmin.xlane.f32.xlu0 %v1202
      %v1204 = vpop.xlane.xlu0 %1203
      %vm1205 = vcmp.eq.f32.partialorder %v1202, %v1204
      %v1206 = vsel %vm1205, %v1201, inf
      %1207 = vmin.xlane.f32.xlu0 %v1206
      %v1208 = vpop.xlane.xlu0 %1207
      %v1209 = vcvt.f32.s32 %v1208
      %v1210 = vcvt.f32.s32 %v1204
      %v1211 = vshll.u32 %v1210, 16
      %v1212 = vadd.s32 %v1211, %v1209
      %v1213 = vand.u32 %v882, 65535
      %v1214 = vshra.s32 %v882, 16
      %v1215 = vcvt.s32.f32 %v1213
      %v1216 = vcvt.s32.f32 %v1214
      %1217 = vmin.xlane.f32.xlu0 %v1216
      %v1218 = vpop.xlane.xlu0 %1217
      %vm1219 = vcmp.eq.f32.partialorder %v1216, %v1218
      %v1220 = vsel %vm1219, %v1215, inf
      %1221 = vmin.xlane.f32.xlu0 %v1220
      %v1222 = vpop.xlane.xlu0 %1221
      %v1223 = vcvt.f32.s32 %v1222
      %v1224 = vcvt.f32.s32 %v1218
      %v1225 = vshll.u32 %v1224, 16
      %v1226 = vadd.s32 %v1225, %v1223
      %v1227 = vand.u32 %v883, 65535
      %v1228 = vshra.s32 %v883, 16
      %v1229 = vcvt.s32.f32 %v1227
      %v1230 = vcvt.s32.f32 %v1228
      %1231 = vmin.xlane.f32.xlu0 %v1230
      %v1232 = vpop.xlane.xlu0 %1231
      %vm1233 = vcmp.eq.f32.partialorder %v1230, %v1232
      %v1234 = vsel %vm1233, %v1229, inf
      %1235 = vmin.xlane.f32.xlu0 %v1234
      %v1236 = vpop.xlane.xlu0 %1235
      %v1237 = vcvt.f32.s32 %v1236
      %v1238 = vcvt.f32.s32 %v1232
      %v1239 = vshll.u32 %v1238, 16
      %v1240 = vadd.s32 %v1239, %v1237
      %v1241 = vand.u32 %v884, 65535
      %v1242 = vshra.s32 %v884, 16
      %v1243 = vcvt.s32.f32 %v1241
      %v1244 = vcvt.s32.f32 %v1242
      %1245 = vmin.xlane.f32.xlu0 %v1244
      %v1246 = vpop.xlane.xlu0 %1245
      %vm1247 = vcmp.eq.f32.partialorder %v1244, %v1246
      %v1248 = vsel %vm1247, %v1243, inf
      %1249 = vmin.xlane.f32.xlu0 %v1248
      %v1250 = vpop.xlane.xlu0 %1249
      %v1251 = vcvt.f32.s32 %v1250
      %v1252 = vcvt.f32.s32 %v1246
      %v1253 = vshll.u32 %v1252, 16
      %v1254 = vadd.s32 %v1253, %v1251
      %v1255 = vand.u32 %v885, 65535
      %v1256 = vshra.s32 %v885, 16
      %v1257 = vcvt.s32.f32 %v1255
      %v1258 = vcvt.s32.f32 %v1256
      %1259 = vmin.xlane.f32.xlu0 %v1258
      %v1260 = vpop.xlane.xlu0 %1259
      %vm1261 = vcmp.eq.f32.partialorder %v1258, %v1260
      %v1262 = vsel %vm1261, %v1257, inf
      %1263 = vmin.xlane.f32.xlu0 %v1262
      %v1264 = vpop.xlane.xlu0 %1263
      %v1265 = vcvt.f32.s32 %v1264
      %v1266 = vcvt.f32.s32 %v1260
      %v1267 = vshll.u32 %v1266, 16
      %v1268 = vadd.s32 %v1267, %v1265
      %v1269 = vand.u32 %v886, 65535
      %v1270 = vshra.s32 %v886, 16
      %v1271 = vcvt.s32.f32 %v1269
      %v1272 = vcvt.s32.f32 %v1270
      %1273 = vmin.xlane.f32.xlu0 %v1272
      %v1274 = vpop.xlane.xlu0 %1273
      %vm1275 = vcmp.eq.f32.partialorder %v1272, %v1274
      %v1276 = vsel %vm1275, %v1271, inf
      %1277 = vmin.xlane.f32.xlu0 %v1276
      %v1278 = vpop.xlane.xlu0 %1277
      %v1279 = vcvt.f32.s32 %v1278
      %v1280 = vcvt.f32.s32 %v1274
      %v1281 = vshll.u32 %v1280, 16
      %v1282 = vadd.s32 %v1281, %v1279
      %v1283 = vand.u32 %v887, 65535
      %v1284 = vshra.s32 %v887, 16
      %v1285 = vcvt.s32.f32 %v1283
      %v1286 = vcvt.s32.f32 %v1284
      %1287 = vmin.xlane.f32.xlu0 %v1286
      %v1288 = vpop.xlane.xlu0 %1287
      %vm1289 = vcmp.eq.f32.partialorder %v1286, %v1288
      %v1290 = vsel %vm1289, %v1285, inf
      %1291 = vmin.xlane.f32.xlu0 %v1290
      %v1292 = vpop.xlane.xlu0 %1291
      %v1293 = vcvt.f32.s32 %v1292
      %v1294 = vcvt.f32.s32 %v1288
      %v1295 = vshll.u32 %v1294, 16
      %v1296 = vadd.s32 %v1295, %v1293
      %v1297 = vand.u32 %v888, 65535
      %v1298 = vshra.s32 %v888, 16
      %v1299 = vcvt.s32.f32 %v1297
      %v1300 = vcvt.s32.f32 %v1298
      %1301 = vmin.xlane.f32.xlu0 %v1300
      %v1302 = vpop.xlane.xlu0 %1301
      %vm1303 = vcmp.eq.f32.partialorder %v1300, %v1302
      %v1304 = vsel %vm1303, %v1299, inf
      %1305 = vmin.xlane.f32.xlu0 %v1304
      %v1306 = vpop.xlane.xlu0 %1305
      %v1307 = vcvt.f32.s32 %v1306
      %v1308 = vcvt.f32.s32 %v1302
      %v1309 = vshll.u32 %v1308, 16
      %v1310 = vadd.s32 %v1309, %v1307
      %v1311 = vand.u32 %v889, 65535
      %v1312 = vshra.s32 %v889, 16
      %v1313 = vcvt.s32.f32 %v1311
      %v1314 = vcvt.s32.f32 %v1312
      %1315 = vmin.xlane.f32.xlu0 %v1314
      %v1316 = vpop.xlane.xlu0 %1315
      %vm1317 = vcmp.eq.f32.partialorder %v1314, %v1316
      %v1318 = vsel %vm1317, %v1313, inf
      %1319 = vmin.xlane.f32.xlu0 %v1318
      %v1320 = vpop.xlane.xlu0 %1319
      %v1321 = vcvt.f32.s32 %v1320
      %v1322 = vcvt.f32.s32 %v1316
      %v1323 = vshll.u32 %v1322, 16
      %v1324 = vadd.s32 %v1323, %v1321
      %v1325 = vand.u32 %v890, 65535
      %v1326 = vshra.s32 %v890, 16
      %v1327 = vcvt.s32.f32 %v1325
      %v1328 = vcvt.s32.f32 %v1326
      %1329 = vmin.xlane.f32.xlu0 %v1328
      %v1330 = vpop.xlane.xlu0 %1329
      %vm1331 = vcmp.eq.f32.partialorder %v1328, %v1330
      %v1332 = vsel %vm1331, %v1327, inf
      %1333 = vmin.xlane.f32.xlu0 %v1332
      %v1334 = vpop.xlane.xlu0 %1333
      %v1335 = vcvt.f32.s32 %v1334
      %v1336 = vcvt.f32.s32 %v1330
      %v1337 = vshll.u32 %v1336, 16
      %v1338 = vadd.s32 %v1337, %v1335
      %vm1339 = vcmp.eq.s32.totalorder %v723, %v904
      %vm1340 = vcmp.eq.s32.totalorder %v723, %v918
      %vm1341 = vcmp.eq.s32.totalorder %v723, %v932
      %vm1342 = vcmp.eq.s32.totalorder %v723, %v946
      %vm1343 = vcmp.eq.s32.totalorder %v723, %v960
      %vm1344 = vcmp.eq.s32.totalorder %v723, %v974
      %vm1345 = vcmp.eq.s32.totalorder %v723, %v988
      %vm1346 = vcmp.eq.s32.totalorder %v723, %v1002
      %vm1347 = vcmp.eq.s32.totalorder %v723, %v1016
      %vm1348 = vcmp.eq.s32.totalorder %v723, %v1030
      %vm1349 = vcmp.eq.s32.totalorder %v723, %v1044
      %vm1350 = vcmp.eq.s32.totalorder %v723, %v1058
      %vm1351 = vcmp.eq.s32.totalorder %v723, %v1072
      %vm1352 = vcmp.eq.s32.totalorder %v723, %v1086
      %vm1353 = vcmp.eq.s32.totalorder %v723, %v1100
      %vm1354 = vcmp.eq.s32.totalorder %v723, %v1114
      %vm1355 = vcmp.eq.s32.totalorder %v723, %v1128
      %vm1356 = vcmp.eq.s32.totalorder %v723, %v1142
      %vm1357 = vcmp.eq.s32.totalorder %v723, %v1156
      %vm1358 = vcmp.eq.s32.totalorder %v723, %v1170
      %vm1359 = vcmp.eq.s32.totalorder %v723, %v1184
      %vm1360 = vcmp.eq.s32.totalorder %v723, %v1198
      %vm1361 = vcmp.eq.s32.totalorder %v723, %v1212
      %vm1362 = vcmp.eq.s32.totalorder %v723, %v1226
      %vm1363 = vcmp.eq.s32.totalorder %v723, %v1240
      %vm1364 = vcmp.eq.s32.totalorder %v723, %v1254
      %vm1365 = vcmp.eq.s32.totalorder %v723, %v1268
      %vm1366 = vcmp.eq.s32.totalorder %v723, %v1282
      %vm1367 = vcmp.eq.s32.totalorder %v723, %v1296
      %vm1368 = vcmp.eq.s32.totalorder %v723, %v1310
      %vm1369 = vcmp.eq.s32.totalorder %v723, %v1324
      %vm1370 = vcmp.eq.s32.totalorder %v723, %v1338
      %v1371 = vsel %vm1339, 1, 0
      %v1372 = vsel %vm1340, 1, 0
      %v1373 = vsel %vm1341, 1, 0
      %v1374 = vsel %vm1342, 1, 0
      %v1375 = vsel %vm1343, 1, 0
      %v1376 = vsel %vm1344, 1, 0
      %v1377 = vsel %vm1345, 1, 0
      %v1378 = vsel %vm1346, 1, 0
      %v1379 = vsel %vm1347, 1, 0
      %v1380 = vsel %vm1348, 1, 0
      %v1381 = vsel %vm1349, 1, 0
      %v1382 = vsel %vm1350, 1, 0
      %v1383 = vsel %vm1351, 1, 0
      %v1384 = vsel %vm1352, 1, 0
      %v1385 = vsel %vm1353, 1, 0
      %v1386 = vsel %vm1354, 1, 0
      %v1387 = vsel %vm1355, 1, 0
      %v1388 = vsel %vm1356, 1, 0
      %v1389 = vsel %vm1357, 1, 0
      %v1390 = vsel %vm1358, 1, 0
      %v1391 = vsel %vm1359, 1, 0
      %v1392 = vsel %vm1360, 1, 0
      %v1393 = vsel %vm1361, 1, 0
      %v1394 = vsel %vm1362, 1, 0
      %v1395 = vsel %vm1363, 1, 0
      %v1396 = vsel %vm1364, 1, 0
      %v1397 = vsel %vm1365, 1, 0
      %v1398 = vsel %vm1366, 1, 0
      %v1399 = vsel %vm1367, 1, 0
      %v1400 = vsel %vm1368, 1, 0
      %v1401 = vsel %vm1369, 1, 0
      %v1402 = vsel %vm1370, 1, 0
      %v1403 = vcvt.s32.f32 %v1371
      %v1404 = vcvt.s32.f32 %v1372
      %v1405 = vcvt.s32.f32 %v1373
      %v1406 = vcvt.s32.f32 %v1374
      %v1407 = vcvt.s32.f32 %v1375
      %v1408 = vcvt.s32.f32 %v1376
      %v1409 = vcvt.s32.f32 %v1377
      %v1410 = vcvt.s32.f32 %v1378
      %v1411 = vcvt.s32.f32 %v1379
      %v1412 = vcvt.s32.f32 %v1380
      %v1413 = vcvt.s32.f32 %v1381
      %v1414 = vcvt.s32.f32 %v1382
      %v1415 = vcvt.s32.f32 %v1383
      %v1416 = vcvt.s32.f32 %v1384
      %v1417 = vcvt.s32.f32 %v1385
      %v1418 = vcvt.s32.f32 %v1386
      %v1419 = vcvt.s32.f32 %v1387
      %v1420 = vcvt.s32.f32 %v1388
      %v1421 = vcvt.s32.f32 %v1389
      %v1422 = vcvt.s32.f32 %v1390
      %v1423 = vcvt.s32.f32 %v1391
      %v1424 = vcvt.s32.f32 %v1392
      %v1425 = vcvt.s32.f32 %v1393
      %v1426 = vcvt.s32.f32 %v1394
      %v1427 = vcvt.s32.f32 %v1395
      %v1428 = vcvt.s32.f32 %v1396
      %v1429 = vcvt.s32.f32 %v1397
      %v1430 = vcvt.s32.f32 %v1398
      %v1431 = vcvt.s32.f32 %v1399
      %v1432 = vcvt.s32.f32 %v1400
      %v1433 = vcvt.s32.f32 %v1401
      %v1434 = vcvt.s32.f32 %v1402
      %s1435 = scalar_lea.vmem %s3, 1
      %v1436 = vld [vmem:[%s1435] sm:$0x1]
      %v1438 = vlaneseq
      %v1439 = vshrl.u32 %v1438, 7
      %v1440 = vsub.s32 0, %v1439
      %v1441 = vrot.slane %v1436, %v1440
      %v1443 = vsub.f32 %v1441, %v534
      %v1444 = vsub.f32 %v1441, %v540
      %v1445 = vsub.f32 %v1441, %v546
      %v1446 = vsub.f32 %v1441, %v552
      %v1447 = vsub.f32 %v1441, %v558
      %v1448 = vsub.f32 %v1441, %v564
      %v1449 = vsub.f32 %v1441, %v570
      %v1450 = vsub.f32 %v1441, %v576
      %v1451 = vsub.f32 %v1441, %v582
      %v1452 = vsub.f32 %v1441, %v588
      %v1453 = vsub.f32 %v1441, %v594
      %v1454 = vsub.f32 %v1441, %v600
      %v1455 = vsub.f32 %v1441, %v606
      %v1456 = vsub.f32 %v1441, %v612
      %v1457 = vsub.f32 %v1441, %v618
      %v1458 = vsub.f32 %v1441, %v624
      %v1459 = vsub.f32 %v1441, %v630
      %v1460 = vsub.f32 %v1441, %v636
      %v1461 = vsub.f32 %v1441, %v642
      %v1462 = vsub.f32 %v1441, %v648
      %v1463 = vsub.f32 %v1441, %v654
      %v1464 = vsub.f32 %v1441, %v660
      %v1465 = vsub.f32 %v1441, %v666
      %v1466 = vsub.f32 %v1441, %v672
      %v1467 = vsub.f32 %v1441, %v678
      %v1468 = vsub.f32 %v1441, %v684
      %v1469 = vsub.f32 %v1441, %v690
      %v1470 = vsub.f32 %v1441, %v696
      %v1471 = vsub.f32 %v1441, %v702
      %v1472 = vsub.f32 %v1441, %v708
      %v1473 = vsub.f32 %v1441, %v714
      %v1474 = vsub.f32 %v1441, %v720
      %1475 = vmin.xlane.f32.xlu0 %v1443
      %v1476 = vpop.xlane.xlu0 %1475
      %1477 = vmin.xlane.f32.xlu0 %v1444
      %v1478 = vpop.xlane.xlu0 %1477
      %1479 = vmin.xlane.f32.xlu0 %v1445
      %v1480 = vpop.xlane.xlu0 %1479
      %1481 = vmin.xlane.f32.xlu0 %v1446
      %v1482 = vpop.xlane.xlu0 %1481
      %1483 = vmin.xlane.f32.xlu0 %v1447
      %v1484 = vpop.xlane.xlu0 %1483
      %1485 = vmin.xlane.f32.xlu0 %v1448
      %v1486 = vpop.xlane.xlu0 %1485
      %1487 = vmin.xlane.f32.xlu0 %v1449
      %v1488 = vpop.xlane.xlu0 %1487
      %1489 = vmin.xlane.f32.xlu0 %v1450
      %v1490 = vpop.xlane.xlu0 %1489
      %1491 = vmin.xlane.f32.xlu0 %v1451
      %v1492 = vpop.xlane.xlu0 %1491
      %1493 = vmin.xlane.f32.xlu0 %v1452
      %v1494 = vpop.xlane.xlu0 %1493
      %1495 = vmin.xlane.f32.xlu0 %v1453
      %v1496 = vpop.xlane.xlu0 %1495
      %1497 = vmin.xlane.f32.xlu0 %v1454
      %v1498 = vpop.xlane.xlu0 %1497
      %1499 = vmin.xlane.f32.xlu0 %v1455
      %v1500 = vpop.xlane.xlu0 %1499
      %1501 = vmin.xlane.f32.xlu0 %v1456
      %v1502 = vpop.xlane.xlu0 %1501
      %1503 = vmin.xlane.f32.xlu0 %v1457
      %v1504 = vpop.xlane.xlu0 %1503
      %1505 = vmin.xlane.f32.xlu0 %v1458
      %v1506 = vpop.xlane.xlu0 %1505
      %1507 = vmin.xlane.f32.xlu0 %v1459
      %v1508 = vpop.xlane.xlu0 %1507
      %1509 = vmin.xlane.f32.xlu0 %v1460
      %v1510 = vpop.xlane.xlu0 %1509
      %1511 = vmin.xlane.f32.xlu0 %v1461
      %v1512 = vpop.xlane.xlu0 %1511
      %1513 = vmin.xlane.f32.xlu0 %v1462
      %v1514 = vpop.xlane.xlu0 %1513
      %1515 = vmin.xlane.f32.xlu0 %v1463
      %v1516 = vpop.xlane.xlu0 %1515
      %1517 = vmin.xlane.f32.xlu0 %v1464
      %v1518 = vpop.xlane.xlu0 %1517
      %1519 = vmin.xlane.f32.xlu0 %v1465
      %v1520 = vpop.xlane.xlu0 %1519
      %1521 = vmin.xlane.f32.xlu0 %v1466
      %v1522 = vpop.xlane.xlu0 %1521
      %1523 = vmin.xlane.f32.xlu0 %v1467
      %v1524 = vpop.xlane.xlu0 %1523
      %1525 = vmin.xlane.f32.xlu0 %v1468
      %v1526 = vpop.xlane.xlu0 %1525
      %1527 = vmin.xlane.f32.xlu0 %v1469
      %v1528 = vpop.xlane.xlu0 %1527
      %1529 = vmin.xlane.f32.xlu0 %v1470
      %v1530 = vpop.xlane.xlu0 %1529
      %1531 = vmin.xlane.f32.xlu0 %v1471
      %v1532 = vpop.xlane.xlu0 %1531
      %1533 = vmin.xlane.f32.xlu0 %v1472
      %v1534 = vpop.xlane.xlu0 %1533
      %1535 = vmin.xlane.f32.xlu0 %v1473
      %v1536 = vpop.xlane.xlu0 %1535
      %1537 = vmin.xlane.f32.xlu0 %v1474
      %v1538 = vpop.xlane.xlu0 %1537
      %vm1539 = vcmp.eq.f32.partialorder %v1443, %v1476
      %vm1540 = vcmp.eq.f32.partialorder %v1444, %v1478
      %vm1541 = vcmp.eq.f32.partialorder %v1445, %v1480
      %vm1542 = vcmp.eq.f32.partialorder %v1446, %v1482
      %vm1543 = vcmp.eq.f32.partialorder %v1447, %v1484
      %vm1544 = vcmp.eq.f32.partialorder %v1448, %v1486
      %vm1545 = vcmp.eq.f32.partialorder %v1449, %v1488
      %vm1546 = vcmp.eq.f32.partialorder %v1450, %v1490
      %vm1547 = vcmp.eq.f32.partialorder %v1451, %v1492
      %vm1548 = vcmp.eq.f32.partialorder %v1452, %v1494
      %vm1549 = vcmp.eq.f32.partialorder %v1453, %v1496
      %vm1550 = vcmp.eq.f32.partialorder %v1454, %v1498
      %vm1551 = vcmp.eq.f32.partialorder %v1455, %v1500
      %vm1552 = vcmp.eq.f32.partialorder %v1456, %v1502
      %vm1553 = vcmp.eq.f32.partialorder %v1457, %v1504
      %vm1554 = vcmp.eq.f32.partialorder %v1458, %v1506
      %vm1555 = vcmp.eq.f32.partialorder %v1459, %v1508
      %vm1556 = vcmp.eq.f32.partialorder %v1460, %v1510
      %vm1557 = vcmp.eq.f32.partialorder %v1461, %v1512
      %vm1558 = vcmp.eq.f32.partialorder %v1462, %v1514
      %vm1559 = vcmp.eq.f32.partialorder %v1463, %v1516
      %vm1560 = vcmp.eq.f32.partialorder %v1464, %v1518
      %vm1561 = vcmp.eq.f32.partialorder %v1465, %v1520
      %vm1562 = vcmp.eq.f32.partialorder %v1466, %v1522
      %vm1563 = vcmp.eq.f32.partialorder %v1467, %v1524
      %vm1564 = vcmp.eq.f32.partialorder %v1468, %v1526
      %vm1565 = vcmp.eq.f32.partialorder %v1469, %v1528
      %vm1566 = vcmp.eq.f32.partialorder %v1470, %v1530
      %vm1567 = vcmp.eq.f32.partialorder %v1471, %v1532
      %vm1568 = vcmp.eq.f32.partialorder %v1472, %v1534
      %vm1569 = vcmp.eq.f32.partialorder %v1473, %v1536
      %vm1570 = vcmp.eq.f32.partialorder %v1474, %v1538
      %v1571 = vsel %vm1539, %v723, 128
      %v1572 = vsel %vm1540, %v723, 128
      %v1573 = vsel %vm1541, %v723, 128
      %v1574 = vsel %vm1542, %v723, 128
      %v1575 = vsel %vm1543, %v723, 128
      %v1576 = vsel %vm1544, %v723, 128
      %v1577 = vsel %vm1545, %v723, 128
      %v1578 = vsel %vm1546, %v723, 128
      %v1579 = vsel %vm1547, %v723, 128
      %v1580 = vsel %vm1548, %v723, 128
      %v1581 = vsel %vm1549, %v723, 128
      %v1582 = vsel %vm1550, %v723, 128
      %v1583 = vsel %vm1551, %v723, 128
      %v1584 = vsel %vm1552, %v723, 128
      %v1585 = vsel %vm1553, %v723, 128
      %v1586 = vsel %vm1554, %v723, 128
      %v1587 = vsel %vm1555, %v723, 128
      %v1588 = vsel %vm1556, %v723, 128
      %v1589 = vsel %vm1557, %v723, 128
      %v1590 = vsel %vm1558, %v723, 128
      %v1591 = vsel %vm1559, %v723, 128
      %v1592 = vsel %vm1560, %v723, 128
      %v1593 = vsel %vm1561, %v723, 128
      %v1594 = vsel %vm1562, %v723, 128
      %v1595 = vsel %vm1563, %v723, 128
      %v1596 = vsel %vm1564, %v723, 128
      %v1597 = vsel %vm1565, %v723, 128
      %v1598 = vsel %vm1566, %v723, 128
      %v1599 = vsel %vm1567, %v723, 128
      %v1600 = vsel %vm1568, %v723, 128
      %v1601 = vsel %vm1569, %v723, 128
      %v1602 = vsel %vm1570, %v723, 128
      %v1603 = vand.u32 %v1571, 65535
      %v1604 = vshra.s32 %v1571, 16
      %v1605 = vcvt.s32.f32 %v1603
      %v1606 = vcvt.s32.f32 %v1604
      %1607 = vmin.xlane.f32.xlu0 %v1606
      %v1608 = vpop.xlane.xlu0 %1607
      %vm1609 = vcmp.eq.f32.partialorder %v1606, %v1608
      %v1610 = vsel %vm1609, %v1605, inf
      %1611 = vmin.xlane.f32.xlu0 %v1610
      %v1612 = vpop.xlane.xlu0 %1611
      %v1613 = vcvt.f32.s32 %v1612
      %v1614 = vcvt.f32.s32 %v1608
      %v1615 = vshll.u32 %v1614, 16
      %v1616 = vadd.s32 %v1615, %v1613
      %v1617 = vand.u32 %v1572, 65535
      %v1618 = vshra.s32 %v1572, 16
      %v1619 = vcvt.s32.f32 %v1617
      %v1620 = vcvt.s32.f32 %v1618
      %1621 = vmin.xlane.f32.xlu0 %v1620
      %v1622 = vpop.xlane.xlu0 %1621
      %vm1623 = vcmp.eq.f32.partialorder %v1620, %v1622
      %v1624 = vsel %vm1623, %v1619, inf
      %1625 = vmin.xlane.f32.xlu0 %v1624
      %v1626 = vpop.xlane.xlu0 %1625
      %v1627 = vcvt.f32.s32 %v1626
      %v1628 = vcvt.f32.s32 %v1622
      %v1629 = vshll.u32 %v1628, 16
      %v1630 = vadd.s32 %v1629, %v1627
      %v1631 = vand.u32 %v1573, 65535
      %v1632 = vshra.s32 %v1573, 16
      %v1633 = vcvt.s32.f32 %v1631
      %v1634 = vcvt.s32.f32 %v1632
      %1635 = vmin.xlane.f32.xlu0 %v1634
      %v1636 = vpop.xlane.xlu0 %1635
      %vm1637 = vcmp.eq.f32.partialorder %v1634, %v1636
      %v1638 = vsel %vm1637, %v1633, inf
      %1639 = vmin.xlane.f32.xlu0 %v1638
      %v1640 = vpop.xlane.xlu0 %1639
      %v1641 = vcvt.f32.s32 %v1640
      %v1642 = vcvt.f32.s32 %v1636
      %v1643 = vshll.u32 %v1642, 16
      %v1644 = vadd.s32 %v1643, %v1641
      %v1645 = vand.u32 %v1574, 65535
      %v1646 = vshra.s32 %v1574, 16
      %v1647 = vcvt.s32.f32 %v1645
      %v1648 = vcvt.s32.f32 %v1646
      %1649 = vmin.xlane.f32.xlu0 %v1648
      %v1650 = vpop.xlane.xlu0 %1649
      %vm1651 = vcmp.eq.f32.partialorder %v1648, %v1650
      %v1652 = vsel %vm1651, %v1647, inf
      %1653 = vmin.xlane.f32.xlu0 %v1652
      %v1654 = vpop.xlane.xlu0 %1653
      %v1655 = vcvt.f32.s32 %v1654
      %v1656 = vcvt.f32.s32 %v1650
      %v1657 = vshll.u32 %v1656, 16
      %v1658 = vadd.s32 %v1657, %v1655
      %v1659 = vand.u32 %v1575, 65535
      %v1660 = vshra.s32 %v1575, 16
      %v1661 = vcvt.s32.f32 %v1659
      %v1662 = vcvt.s32.f32 %v1660
      %1663 = vmin.xlane.f32.xlu0 %v1662
      %v1664 = vpop.xlane.xlu0 %1663
      %vm1665 = vcmp.eq.f32.partialorder %v1662, %v1664
      %v1666 = vsel %vm1665, %v1661, inf
      %1667 = vmin.xlane.f32.xlu0 %v1666
      %v1668 = vpop.xlane.xlu0 %1667
      %v1669 = vcvt.f32.s32 %v1668
      %v1670 = vcvt.f32.s32 %v1664
      %v1671 = vshll.u32 %v1670, 16
      %v1672 = vadd.s32 %v1671, %v1669
      %v1673 = vand.u32 %v1576, 65535
      %v1674 = vshra.s32 %v1576, 16
      %v1675 = vcvt.s32.f32 %v1673
      %v1676 = vcvt.s32.f32 %v1674
      %1677 = vmin.xlane.f32.xlu0 %v1676
      %v1678 = vpop.xlane.xlu0 %1677
      %vm1679 = vcmp.eq.f32.partialorder %v1676, %v1678
      %v1680 = vsel %vm1679, %v1675, inf
      %1681 = vmin.xlane.f32.xlu0 %v1680
      %v1682 = vpop.xlane.xlu0 %1681
      %v1683 = vcvt.f32.s32 %v1682
      %v1684 = vcvt.f32.s32 %v1678
      %v1685 = vshll.u32 %v1684, 16
      %v1686 = vadd.s32 %v1685, %v1683
      %v1687 = vand.u32 %v1577, 65535
      %v1688 = vshra.s32 %v1577, 16
      %v1689 = vcvt.s32.f32 %v1687
      %v1690 = vcvt.s32.f32 %v1688
      %1691 = vmin.xlane.f32.xlu0 %v1690
      %v1692 = vpop.xlane.xlu0 %1691
      %vm1693 = vcmp.eq.f32.partialorder %v1690, %v1692
      %v1694 = vsel %vm1693, %v1689, inf
      %1695 = vmin.xlane.f32.xlu0 %v1694
      %v1696 = vpop.xlane.xlu0 %1695
      %v1697 = vcvt.f32.s32 %v1696
      %v1698 = vcvt.f32.s32 %v1692
      %v1699 = vshll.u32 %v1698, 16
      %v1700 = vadd.s32 %v1699, %v1697
      %v1701 = vand.u32 %v1578, 65535
      %v1702 = vshra.s32 %v1578, 16
      %v1703 = vcvt.s32.f32 %v1701
      %v1704 = vcvt.s32.f32 %v1702
      %1705 = vmin.xlane.f32.xlu0 %v1704
      %v1706 = vpop.xlane.xlu0 %1705
      %vm1707 = vcmp.eq.f32.partialorder %v1704, %v1706
      %v1708 = vsel %vm1707, %v1703, inf
      %1709 = vmin.xlane.f32.xlu0 %v1708
      %v1710 = vpop.xlane.xlu0 %1709
      %v1711 = vcvt.f32.s32 %v1710
      %v1712 = vcvt.f32.s32 %v1706
      %v1713 = vshll.u32 %v1712, 16
      %v1714 = vadd.s32 %v1713, %v1711
      %v1715 = vand.u32 %v1579, 65535
      %v1716 = vshra.s32 %v1579, 16
      %v1717 = vcvt.s32.f32 %v1715
      %v1718 = vcvt.s32.f32 %v1716
      %1719 = vmin.xlane.f32.xlu0 %v1718
      %v1720 = vpop.xlane.xlu0 %1719
      %vm1721 = vcmp.eq.f32.partialorder %v1718, %v1720
      %v1722 = vsel %vm1721, %v1717, inf
      %1723 = vmin.xlane.f32.xlu0 %v1722
      %v1724 = vpop.xlane.xlu0 %1723
      %v1725 = vcvt.f32.s32 %v1724
      %v1726 = vcvt.f32.s32 %v1720
      %v1727 = vshll.u32 %v1726, 16
      %v1728 = vadd.s32 %v1727, %v1725
      %v1729 = vand.u32 %v1580, 65535
      %v1730 = vshra.s32 %v1580, 16
      %v1731 = vcvt.s32.f32 %v1729
      %v1732 = vcvt.s32.f32 %v1730
      %1733 = vmin.xlane.f32.xlu0 %v1732
      %v1734 = vpop.xlane.xlu0 %1733
      %vm1735 = vcmp.eq.f32.partialorder %v1732, %v1734
      %v1736 = vsel %vm1735, %v1731, inf
      %1737 = vmin.xlane.f32.xlu0 %v1736
      %v1738 = vpop.xlane.xlu0 %1737
      %v1739 = vcvt.f32.s32 %v1738
      %v1740 = vcvt.f32.s32 %v1734
      %v1741 = vshll.u32 %v1740, 16
      %v1742 = vadd.s32 %v1741, %v1739
      %v1743 = vand.u32 %v1581, 65535
      %v1744 = vshra.s32 %v1581, 16
      %v1745 = vcvt.s32.f32 %v1743
      %v1746 = vcvt.s32.f32 %v1744
      %1747 = vmin.xlane.f32.xlu0 %v1746
      %v1748 = vpop.xlane.xlu0 %1747
      %vm1749 = vcmp.eq.f32.partialorder %v1746, %v1748
      %v1750 = vsel %vm1749, %v1745, inf
      %1751 = vmin.xlane.f32.xlu0 %v1750
      %v1752 = vpop.xlane.xlu0 %1751
      %v1753 = vcvt.f32.s32 %v1752
      %v1754 = vcvt.f32.s32 %v1748
      %v1755 = vshll.u32 %v1754, 16
      %v1756 = vadd.s32 %v1755, %v1753
      %v1757 = vand.u32 %v1582, 65535
      %v1758 = vshra.s32 %v1582, 16
      %v1759 = vcvt.s32.f32 %v1757
      %v1760 = vcvt.s32.f32 %v1758
      %1761 = vmin.xlane.f32.xlu0 %v1760
      %v1762 = vpop.xlane.xlu0 %1761
      %vm1763 = vcmp.eq.f32.partialorder %v1760, %v1762
      %v1764 = vsel %vm1763, %v1759, inf
      %1765 = vmin.xlane.f32.xlu0 %v1764
      %v1766 = vpop.xlane.xlu0 %1765
      %v1767 = vcvt.f32.s32 %v1766
      %v1768 = vcvt.f32.s32 %v1762
      %v1769 = vshll.u32 %v1768, 16
      %v1770 = vadd.s32 %v1769, %v1767
      %v1771 = vand.u32 %v1583, 65535
      %v1772 = vshra.s32 %v1583, 16
      %v1773 = vcvt.s32.f32 %v1771
      %v1774 = vcvt.s32.f32 %v1772
      %1775 = vmin.xlane.f32.xlu0 %v1774
      %v1776 = vpop.xlane.xlu0 %1775
      %vm1777 = vcmp.eq.f32.partialorder %v1774, %v1776
      %v1778 = vsel %vm1777, %v1773, inf
      %1779 = vmin.xlane.f32.xlu0 %v1778
      %v1780 = vpop.xlane.xlu0 %1779
      %v1781 = vcvt.f32.s32 %v1780
      %v1782 = vcvt.f32.s32 %v1776
      %v1783 = vshll.u32 %v1782, 16
      %v1784 = vadd.s32 %v1783, %v1781
      %v1785 = vand.u32 %v1584, 65535
      %v1786 = vshra.s32 %v1584, 16
      %v1787 = vcvt.s32.f32 %v1785
      %v1788 = vcvt.s32.f32 %v1786
      %1789 = vmin.xlane.f32.xlu0 %v1788
      %v1790 = vpop.xlane.xlu0 %1789
      %vm1791 = vcmp.eq.f32.partialorder %v1788, %v1790
      %v1792 = vsel %vm1791, %v1787, inf
      %1793 = vmin.xlane.f32.xlu0 %v1792
      %v1794 = vpop.xlane.xlu0 %1793
      %v1795 = vcvt.f32.s32 %v1794
      %v1796 = vcvt.f32.s32 %v1790
      %v1797 = vshll.u32 %v1796, 16
      %v1798 = vadd.s32 %v1797, %v1795
      %v1799 = vand.u32 %v1585, 65535
      %v1800 = vshra.s32 %v1585, 16
      %v1801 = vcvt.s32.f32 %v1799
      %v1802 = vcvt.s32.f32 %v1800
      %1803 = vmin.xlane.f32.xlu0 %v1802
      %v1804 = vpop.xlane.xlu0 %1803
      %vm1805 = vcmp.eq.f32.partialorder %v1802, %v1804
      %v1806 = vsel %vm1805, %v1801, inf
      %1807 = vmin.xlane.f32.xlu0 %v1806
      %v1808 = vpop.xlane.xlu0 %1807
      %v1809 = vcvt.f32.s32 %v1808
      %v1810 = vcvt.f32.s32 %v1804
      %v1811 = vshll.u32 %v1810, 16
      %v1812 = vadd.s32 %v1811, %v1809
      %v1813 = vand.u32 %v1586, 65535
      %v1814 = vshra.s32 %v1586, 16
      %v1815 = vcvt.s32.f32 %v1813
      %v1816 = vcvt.s32.f32 %v1814
      %1817 = vmin.xlane.f32.xlu0 %v1816
      %v1818 = vpop.xlane.xlu0 %1817
      %vm1819 = vcmp.eq.f32.partialorder %v1816, %v1818
      %v1820 = vsel %vm1819, %v1815, inf
      %1821 = vmin.xlane.f32.xlu0 %v1820
      %v1822 = vpop.xlane.xlu0 %1821
      %v1823 = vcvt.f32.s32 %v1822
      %v1824 = vcvt.f32.s32 %v1818
      %v1825 = vshll.u32 %v1824, 16
      %v1826 = vadd.s32 %v1825, %v1823
      %v1827 = vand.u32 %v1587, 65535
      %v1828 = vshra.s32 %v1587, 16
      %v1829 = vcvt.s32.f32 %v1827
      %v1830 = vcvt.s32.f32 %v1828
      %1831 = vmin.xlane.f32.xlu0 %v1830
      %v1832 = vpop.xlane.xlu0 %1831
      %vm1833 = vcmp.eq.f32.partialorder %v1830, %v1832
      %v1834 = vsel %vm1833, %v1829, inf
      %1835 = vmin.xlane.f32.xlu0 %v1834
      %v1836 = vpop.xlane.xlu0 %1835
      %v1837 = vcvt.f32.s32 %v1836
      %v1838 = vcvt.f32.s32 %v1832
      %v1839 = vshll.u32 %v1838, 16
      %v1840 = vadd.s32 %v1839, %v1837
      %v1841 = vand.u32 %v1588, 65535
      %v1842 = vshra.s32 %v1588, 16
      %v1843 = vcvt.s32.f32 %v1841
      %v1844 = vcvt.s32.f32 %v1842
      %1845 = vmin.xlane.f32.xlu0 %v1844
      %v1846 = vpop.xlane.xlu0 %1845
      %vm1847 = vcmp.eq.f32.partialorder %v1844, %v1846
      %v1848 = vsel %vm1847, %v1843, inf
      %1849 = vmin.xlane.f32.xlu0 %v1848
      %v1850 = vpop.xlane.xlu0 %1849
      %v1851 = vcvt.f32.s32 %v1850
      %v1852 = vcvt.f32.s32 %v1846
      %v1853 = vshll.u32 %v1852, 16
      %v1854 = vadd.s32 %v1853, %v1851
      %v1855 = vand.u32 %v1589, 65535
      %v1856 = vshra.s32 %v1589, 16
      %v1857 = vcvt.s32.f32 %v1855
      %v1858 = vcvt.s32.f32 %v1856
      %1859 = vmin.xlane.f32.xlu0 %v1858
      %v1860 = vpop.xlane.xlu0 %1859
      %vm1861 = vcmp.eq.f32.partialorder %v1858, %v1860
      %v1862 = vsel %vm1861, %v1857, inf
      %1863 = vmin.xlane.f32.xlu0 %v1862
      %v1864 = vpop.xlane.xlu0 %1863
      %v1865 = vcvt.f32.s32 %v1864
      %v1866 = vcvt.f32.s32 %v1860
      %v1867 = vshll.u32 %v1866, 16
      %v1868 = vadd.s32 %v1867, %v1865
      %v1869 = vand.u32 %v1590, 65535
      %v1870 = vshra.s32 %v1590, 16
      %v1871 = vcvt.s32.f32 %v1869
      %v1872 = vcvt.s32.f32 %v1870
      %1873 = vmin.xlane.f32.xlu0 %v1872
      %v1874 = vpop.xlane.xlu0 %1873
      %vm1875 = vcmp.eq.f32.partialorder %v1872, %v1874
      %v1876 = vsel %vm1875, %v1871, inf
      %1877 = vmin.xlane.f32.xlu0 %v1876
      %v1878 = vpop.xlane.xlu0 %1877
      %v1879 = vcvt.f32.s32 %v1878
      %v1880 = vcvt.f32.s32 %v1874
      %v1881 = vshll.u32 %v1880, 16
      %v1882 = vadd.s32 %v1881, %v1879
      %v1883 = vand.u32 %v1591, 65535
      %v1884 = vshra.s32 %v1591, 16
      %v1885 = vcvt.s32.f32 %v1883
      %v1886 = vcvt.s32.f32 %v1884
      %1887 = vmin.xlane.f32.xlu0 %v1886
      %v1888 = vpop.xlane.xlu0 %1887
      %vm1889 = vcmp.eq.f32.partialorder %v1886, %v1888
      %v1890 = vsel %vm1889, %v1885, inf
      %1891 = vmin.xlane.f32.xlu0 %v1890
      %v1892 = vpop.xlane.xlu0 %1891
      %v1893 = vcvt.f32.s32 %v1892
      %v1894 = vcvt.f32.s32 %v1888
      %v1895 = vshll.u32 %v1894, 16
      %v1896 = vadd.s32 %v1895, %v1893
      %v1897 = vand.u32 %v1592, 65535
      %v1898 = vshra.s32 %v1592, 16
      %v1899 = vcvt.s32.f32 %v1897
      %v1900 = vcvt.s32.f32 %v1898
      %1901 = vmin.xlane.f32.xlu0 %v1900
      %v1902 = vpop.xlane.xlu0 %1901
      %vm1903 = vcmp.eq.f32.partialorder %v1900, %v1902
      %v1904 = vsel %vm1903, %v1899, inf
      %1905 = vmin.xlane.f32.xlu0 %v1904
      %v1906 = vpop.xlane.xlu0 %1905
      %v1907 = vcvt.f32.s32 %v1906
      %v1908 = vcvt.f32.s32 %v1902
      %v1909 = vshll.u32 %v1908, 16
      %v1910 = vadd.s32 %v1909, %v1907
      %v1911 = vand.u32 %v1593, 65535
      %v1912 = vshra.s32 %v1593, 16
      %v1913 = vcvt.s32.f32 %v1911
      %v1914 = vcvt.s32.f32 %v1912
      %1915 = vmin.xlane.f32.xlu0 %v1914
      %v1916 = vpop.xlane.xlu0 %1915
      %vm1917 = vcmp.eq.f32.partialorder %v1914, %v1916
      %v1918 = vsel %vm1917, %v1913, inf
      %1919 = vmin.xlane.f32.xlu0 %v1918
      %v1920 = vpop.xlane.xlu0 %1919
      %v1921 = vcvt.f32.s32 %v1920
      %v1922 = vcvt.f32.s32 %v1916
      %v1923 = vshll.u32 %v1922, 16
      %v1924 = vadd.s32 %v1923, %v1921
      %v1925 = vand.u32 %v1594, 65535
      %v1926 = vshra.s32 %v1594, 16
      %v1927 = vcvt.s32.f32 %v1925
      %v1928 = vcvt.s32.f32 %v1926
      %1929 = vmin.xlane.f32.xlu0 %v1928
      %v1930 = vpop.xlane.xlu0 %1929
      %vm1931 = vcmp.eq.f32.partialorder %v1928, %v1930
      %v1932 = vsel %vm1931, %v1927, inf
      %1933 = vmin.xlane.f32.xlu0 %v1932
      %v1934 = vpop.xlane.xlu0 %1933
      %v1935 = vcvt.f32.s32 %v1934
      %v1936 = vcvt.f32.s32 %v1930
      %v1937 = vshll.u32 %v1936, 16
      %v1938 = vadd.s32 %v1937, %v1935
      %v1939 = vand.u32 %v1595, 65535
      %v1940 = vshra.s32 %v1595, 16
      %v1941 = vcvt.s32.f32 %v1939
      %v1942 = vcvt.s32.f32 %v1940
      %1943 = vmin.xlane.f32.xlu0 %v1942
      %v1944 = vpop.xlane.xlu0 %1943
      %vm1945 = vcmp.eq.f32.partialorder %v1942, %v1944
      %v1946 = vsel %vm1945, %v1941, inf
      %1947 = vmin.xlane.f32.xlu0 %v1946
      %v1948 = vpop.xlane.xlu0 %1947
      %v1949 = vcvt.f32.s32 %v1948
      %v1950 = vcvt.f32.s32 %v1944
      %v1951 = vshll.u32 %v1950, 16
      %v1952 = vadd.s32 %v1951, %v1949
      %v1953 = vand.u32 %v1596, 65535
      %v1954 = vshra.s32 %v1596, 16
      %v1955 = vcvt.s32.f32 %v1953
      %v1956 = vcvt.s32.f32 %v1954
      %1957 = vmin.xlane.f32.xlu0 %v1956
      %v1958 = vpop.xlane.xlu0 %1957
      %vm1959 = vcmp.eq.f32.partialorder %v1956, %v1958
      %v1960 = vsel %vm1959, %v1955, inf
      %1961 = vmin.xlane.f32.xlu0 %v1960
      %v1962 = vpop.xlane.xlu0 %1961
      %v1963 = vcvt.f32.s32 %v1962
      %v1964 = vcvt.f32.s32 %v1958
      %v1965 = vshll.u32 %v1964, 16
      %v1966 = vadd.s32 %v1965, %v1963
      %v1967 = vand.u32 %v1597, 65535
      %v1968 = vshra.s32 %v1597, 16
      %v1969 = vcvt.s32.f32 %v1967
      %v1970 = vcvt.s32.f32 %v1968
      %1971 = vmin.xlane.f32.xlu0 %v1970
      %v1972 = vpop.xlane.xlu0 %1971
      %vm1973 = vcmp.eq.f32.partialorder %v1970, %v1972
      %v1974 = vsel %vm1973, %v1969, inf
      %1975 = vmin.xlane.f32.xlu0 %v1974
      %v1976 = vpop.xlane.xlu0 %1975
      %v1977 = vcvt.f32.s32 %v1976
      %v1978 = vcvt.f32.s32 %v1972
      %v1979 = vshll.u32 %v1978, 16
      %v1980 = vadd.s32 %v1979, %v1977
      %v1981 = vand.u32 %v1598, 65535
      %v1982 = vshra.s32 %v1598, 16
      %v1983 = vcvt.s32.f32 %v1981
      %v1984 = vcvt.s32.f32 %v1982
      %1985 = vmin.xlane.f32.xlu0 %v1984
      %v1986 = vpop.xlane.xlu0 %1985
      %vm1987 = vcmp.eq.f32.partialorder %v1984, %v1986
      %v1988 = vsel %vm1987, %v1983, inf
      %1989 = vmin.xlane.f32.xlu0 %v1988
      %v1990 = vpop.xlane.xlu0 %1989
      %v1991 = vcvt.f32.s32 %v1990
      %v1992 = vcvt.f32.s32 %v1986
      %v1993 = vshll.u32 %v1992, 16
      %v1994 = vadd.s32 %v1993, %v1991
      %v1995 = vand.u32 %v1599, 65535
      %v1996 = vshra.s32 %v1599, 16
      %v1997 = vcvt.s32.f32 %v1995
      %v1998 = vcvt.s32.f32 %v1996
      %1999 = vmin.xlane.f32.xlu0 %v1998
      %v2000 = vpop.xlane.xlu0 %1999
      %vm2001 = vcmp.eq.f32.partialorder %v1998, %v2000
      %v2002 = vsel %vm2001, %v1997, inf
      %2003 = vmin.xlane.f32.xlu0 %v2002
      %v2004 = vpop.xlane.xlu0 %2003
      %v2005 = vcvt.f32.s32 %v2004
      %v2006 = vcvt.f32.s32 %v2000
      %v2007 = vshll.u32 %v2006, 16
      %v2008 = vadd.s32 %v2007, %v2005
      %v2009 = vand.u32 %v1600, 65535
      %v2010 = vshra.s32 %v1600, 16
      %v2011 = vcvt.s32.f32 %v2009
      %v2012 = vcvt.s32.f32 %v2010
      %2013 = vmin.xlane.f32.xlu0 %v2012
      %v2014 = vpop.xlane.xlu0 %2013
      %vm2015 = vcmp.eq.f32.partialorder %v2012, %v2014
      %v2016 = vsel %vm2015, %v2011, inf
      %2017 = vmin.xlane.f32.xlu0 %v2016
      %v2018 = vpop.xlane.xlu0 %2017
      %v2019 = vcvt.f32.s32 %v2018
      %v2020 = vcvt.f32.s32 %v2014
      %v2021 = vshll.u32 %v2020, 16
      %v2022 = vadd.s32 %v2021, %v2019
      %v2023 = vand.u32 %v1601, 65535
      %v2024 = vshra.s32 %v1601, 16
      %v2025 = vcvt.s32.f32 %v2023
      %v2026 = vcvt.s32.f32 %v2024
      %2027 = vmin.xlane.f32.xlu0 %v2026
      %v2028 = vpop.xlane.xlu0 %2027
      %vm2029 = vcmp.eq.f32.partialorder %v2026, %v2028
      %v2030 = vsel %vm2029, %v2025, inf
      %2031 = vmin.xlane.f32.xlu0 %v2030
      %v2032 = vpop.xlane.xlu0 %2031
      %v2033 = vcvt.f32.s32 %v2032
      %v2034 = vcvt.f32.s32 %v2028
      %v2035 = vshll.u32 %v2034, 16
      %v2036 = vadd.s32 %v2035, %v2033
      %v2037 = vand.u32 %v1602, 65535
      %v2038 = vshra.s32 %v1602, 16
      %v2039 = vcvt.s32.f32 %v2037
      %v2040 = vcvt.s32.f32 %v2038
      %2041 = vmin.xlane.f32.xlu0 %v2040
      %v2042 = vpop.xlane.xlu0 %2041
      %vm2043 = vcmp.eq.f32.partialorder %v2040, %v2042
      %v2044 = vsel %vm2043, %v2039, inf
      %2045 = vmin.xlane.f32.xlu0 %v2044
      %v2046 = vpop.xlane.xlu0 %2045
      %v2047 = vcvt.f32.s32 %v2046
      %v2048 = vcvt.f32.s32 %v2042
      %v2049 = vshll.u32 %v2048, 16
      %v2050 = vadd.s32 %v2049, %v2047
      %vm2051 = vcmp.eq.s32.totalorder %v723, %v1616
      %vm2052 = vcmp.eq.s32.totalorder %v723, %v1630
      %vm2053 = vcmp.eq.s32.totalorder %v723, %v1644
      %vm2054 = vcmp.eq.s32.totalorder %v723, %v1658
      %vm2055 = vcmp.eq.s32.totalorder %v723, %v1672
      %vm2056 = vcmp.eq.s32.totalorder %v723, %v1686
      %vm2057 = vcmp.eq.s32.totalorder %v723, %v1700
      %vm2058 = vcmp.eq.s32.totalorder %v723, %v1714
      %vm2059 = vcmp.eq.s32.totalorder %v723, %v1728
      %vm2060 = vcmp.eq.s32.totalorder %v723, %v1742
      %vm2061 = vcmp.eq.s32.totalorder %v723, %v1756
      %vm2062 = vcmp.eq.s32.totalorder %v723, %v1770
      %vm2063 = vcmp.eq.s32.totalorder %v723, %v1784
      %vm2064 = vcmp.eq.s32.totalorder %v723, %v1798
      %vm2065 = vcmp.eq.s32.totalorder %v723, %v1812
      %vm2066 = vcmp.eq.s32.totalorder %v723, %v1826
      %vm2067 = vcmp.eq.s32.totalorder %v723, %v1840
      %vm2068 = vcmp.eq.s32.totalorder %v723, %v1854
      %vm2069 = vcmp.eq.s32.totalorder %v723, %v1868
      %vm2070 = vcmp.eq.s32.totalorder %v723, %v1882
      %vm2071 = vcmp.eq.s32.totalorder %v723, %v1896
      %vm2072 = vcmp.eq.s32.totalorder %v723, %v1910
      %vm2073 = vcmp.eq.s32.totalorder %v723, %v1924
      %vm2074 = vcmp.eq.s32.totalorder %v723, %v1938
      %vm2075 = vcmp.eq.s32.totalorder %v723, %v1952
      %vm2076 = vcmp.eq.s32.totalorder %v723, %v1966
      %vm2077 = vcmp.eq.s32.totalorder %v723, %v1980
      %vm2078 = vcmp.eq.s32.totalorder %v723, %v1994
      %vm2079 = vcmp.eq.s32.totalorder %v723, %v2008
      %vm2080 = vcmp.eq.s32.totalorder %v723, %v2022
      %vm2081 = vcmp.eq.s32.totalorder %v723, %v2036
      %vm2082 = vcmp.eq.s32.totalorder %v723, %v2050
      %v2083 = vsel %vm2051, 1, 0
      %v2084 = vsel %vm2052, 1, 0
      %v2085 = vsel %vm2053, 1, 0
      %v2086 = vsel %vm2054, 1, 0
      %v2087 = vsel %vm2055, 1, 0
      %v2088 = vsel %vm2056, 1, 0
      %v2089 = vsel %vm2057, 1, 0
      %v2090 = vsel %vm2058, 1, 0
      %v2091 = vsel %vm2059, 1, 0
      %v2092 = vsel %vm2060, 1, 0
      %v2093 = vsel %vm2061, 1, 0
      %v2094 = vsel %vm2062, 1, 0
      %v2095 = vsel %vm2063, 1, 0
      %v2096 = vsel %vm2064, 1, 0
      %v2097 = vsel %vm2065, 1, 0
      %v2098 = vsel %vm2066, 1, 0
      %v2099 = vsel %vm2067, 1, 0
      %v2100 = vsel %vm2068, 1, 0
      %v2101 = vsel %vm2069, 1, 0
      %v2102 = vsel %vm2070, 1, 0
      %v2103 = vsel %vm2071, 1, 0
      %v2104 = vsel %vm2072, 1, 0
      %v2105 = vsel %vm2073, 1, 0
      %v2106 = vsel %vm2074, 1, 0
      %v2107 = vsel %vm2075, 1, 0
      %v2108 = vsel %vm2076, 1, 0
      %v2109 = vsel %vm2077, 1, 0
      %v2110 = vsel %vm2078, 1, 0
      %v2111 = vsel %vm2079, 1, 0
      %v2112 = vsel %vm2080, 1, 0
      %v2113 = vsel %vm2081, 1, 0
      %v2114 = vsel %vm2082, 1, 0
      %v2115 = vcvt.s32.f32 %v2083
      %v2116 = vcvt.s32.f32 %v2084
      %v2117 = vcvt.s32.f32 %v2085
      %v2118 = vcvt.s32.f32 %v2086
      %v2119 = vcvt.s32.f32 %v2087
      %v2120 = vcvt.s32.f32 %v2088
      %v2121 = vcvt.s32.f32 %v2089
      %v2122 = vcvt.s32.f32 %v2090
      %v2123 = vcvt.s32.f32 %v2091
      %v2124 = vcvt.s32.f32 %v2092
      %v2125 = vcvt.s32.f32 %v2093
      %v2126 = vcvt.s32.f32 %v2094
      %v2127 = vcvt.s32.f32 %v2095
      %v2128 = vcvt.s32.f32 %v2096
      %v2129 = vcvt.s32.f32 %v2097
      %v2130 = vcvt.s32.f32 %v2098
      %v2131 = vcvt.s32.f32 %v2099
      %v2132 = vcvt.s32.f32 %v2100
      %v2133 = vcvt.s32.f32 %v2101
      %v2134 = vcvt.s32.f32 %v2102
      %v2135 = vcvt.s32.f32 %v2103
      %v2136 = vcvt.s32.f32 %v2104
      %v2137 = vcvt.s32.f32 %v2105
      %v2138 = vcvt.s32.f32 %v2106
      %v2139 = vcvt.s32.f32 %v2107
      %v2140 = vcvt.s32.f32 %v2108
      %v2141 = vcvt.s32.f32 %v2109
      %v2142 = vcvt.s32.f32 %v2110
      %v2143 = vcvt.s32.f32 %v2111
      %v2144 = vcvt.s32.f32 %v2112
      %v2145 = vcvt.s32.f32 %v2113
      %v2146 = vcvt.s32.f32 %v2114
      %v2147 = vld [vmem:[%s2] sm:$0xff]
      %v2148 = vld [vmem:[%s2 + $0x8] sm:$0xff]
      %v2149 = vld [vmem:[%s2 + $0x10] sm:$0xff]
      %v2150 = vld [vmem:[%s2 + $0x18] sm:$0xff]
      %v2151 = vld [vmem:[%s2 + $0x20] sm:$0xff]
      %v2152 = vld [vmem:[%s2 + $0x28] sm:$0xff]
      %v2153 = vld [vmem:[%s2 + $0x30] sm:$0xff]
      %v2154 = vld [vmem:[%s2 + $0x38] sm:$0xff]
      %v2155 = vld [vmem:[%s2 + $0x40] sm:$0xff]
      %v2156 = vld [vmem:[%s2 + $0x48] sm:$0xff]
      %v2157 = vld [vmem:[%s2 + $0x50] sm:$0xff]
      %v2158 = vld [vmem:[%s2 + $0x58] sm:$0xff]
      %v2159 = vld [vmem:[%s2 + $0x60] sm:$0xff]
      %v2160 = vld [vmem:[%s2 + $0x68] sm:$0xff]
      %v2161 = vld [vmem:[%s2 + $0x70] sm:$0xff]
      %v2162 = vld [vmem:[%s2 + $0x78] sm:$0xff]
      %v2163 = vld [vmem:[%s2 + $0x80] sm:$0xff]
      %v2164 = vld [vmem:[%s2 + $0x88] sm:$0xff]
      %v2165 = vld [vmem:[%s2 + $0x90] sm:$0xff]
      %v2166 = vld [vmem:[%s2 + $0x98] sm:$0xff]
      %v2167 = vld [vmem:[%s2 + $0xa0] sm:$0xff]
      %v2168 = vld [vmem:[%s2 + $0xa8] sm:$0xff]
      %v2169 = vld [vmem:[%s2 + $0xb0] sm:$0xff]
      %v2170 = vld [vmem:[%s2 + $0xb8] sm:$0xff]
      %v2171 = vld [vmem:[%s2 + $0xc0] sm:$0xff]
      %v2172 = vld [vmem:[%s2 + $0xc8] sm:$0xff]
      %v2173 = vld [vmem:[%s2 + $0xd0] sm:$0xff]
      %v2174 = vld [vmem:[%s2 + $0xd8] sm:$0xff]
      %v2175 = vld [vmem:[%s2 + $0xe0] sm:$0xff]
      %v2176 = vld [vmem:[%s2 + $0xe8] sm:$0xff]
      %v2177 = vld [vmem:[%s2 + $0xf0] sm:$0xff]
      %v2178 = vld [vmem:[%s2 + $0xf8] sm:$0xff]
      %2179 = vmatprep.subr.mxu0 0.0
      %2180 = vmatpush1.msra.mxu0 %v2147
      %2181 = vmatprep.subr.mxu0 0.0
      %2182 = vmatpush1.msra.mxu0 %v2148
      %2183 = vmatprep.subr.mxu0 0.0
      %2184 = vmatpush1.msra.mxu0 %v2149
      %2185 = vmatprep.subr.mxu0 0.0
      %2186 = vmatpush1.msra.mxu0 %v2150
      %2187 = vmatprep.subr.mxu0 0.0
      %2188 = vmatpush1.msra.mxu0 %v2151
      %2189 = vmatprep.subr.mxu0 0.0
      %2190 = vmatpush1.msra.mxu0 %v2152
      %2191 = vmatprep.subr.mxu0 0.0
      %2192 = vmatpush1.msra.mxu0 %v2153
      %2193 = vmatprep.subr.mxu0 0.0
      %2194 = vmatpush1.msra.mxu0 %v2154
      %2195 = vmatprep.subr.mxu0 0.0
      %2196 = vmatpush1.msra.mxu0 %v2155
      %2197 = vmatprep.subr.mxu0 0.0
      %2198 = vmatpush1.msra.mxu0 %v2156
      %2199 = vmatprep.subr.mxu0 0.0
      %2200 = vmatpush1.msra.mxu0 %v2157
      %2201 = vmatprep.subr.mxu0 0.0
      %2202 = vmatpush1.msra.mxu0 %v2158
      %2203 = vmatprep.subr.mxu0 0.0
      %2204 = vmatpush1.msra.mxu0 %v2159
      %2205 = vmatprep.subr.mxu0 0.0
      %2206 = vmatpush1.msra.mxu0 %v2160
      %2207 = vmatprep.subr.mxu0 0.0
      %2208 = vmatpush1.msra.mxu0 %v2161
      %2209 = vmatprep.subr.mxu0 0.0
      %2210 = vmatpush1.msra.mxu0 %v2162
      %2211 = vmatprep.subr.mxu0 0.0
      %2212 = vmatpush1.msra.mxu0 %v2163
      %2213 = vmatprep.subr.mxu0 0.0
      %2214 = vmatpush1.msra.mxu0 %v2164
      %2215 = vmatprep.subr.mxu0 0.0
      %2216 = vmatpush1.msra.mxu0 %v2165
      %2217 = vmatprep.subr.mxu0 0.0
      %2218 = vmatpush1.msra.mxu0 %v2166
      %2219 = vmatprep.subr.mxu0 0.0
      %2220 = vmatpush1.msra.mxu0 %v2167
      %2221 = vmatprep.subr.mxu0 0.0
      %2222 = vmatpush1.msra.mxu0 %v2168
      %2223 = vmatprep.subr.mxu0 0.0
      %2224 = vmatpush1.msra.mxu0 %v2169
      %2225 = vmatprep.subr.mxu0 0.0
      %2226 = vmatpush1.msra.mxu0 %v2170
      %2227 = vmatprep.subr.mxu0 0.0
      %2228 = vmatpush1.msra.mxu0 %v2171
      %2229 = vmatprep.subr.mxu0 0.0
      %2230 = vmatpush1.msra.mxu0 %v2172
      %2231 = vmatprep.subr.mxu0 0.0
      %2232 = vmatpush1.msra.mxu0 %v2173
      %2233 = vmatprep.subr.mxu0 0.0
      %2234 = vmatpush1.msra.mxu0 %v2174
      %2235 = vmatprep.subr.mxu0 0.0
      %2236 = vmatpush1.msra.mxu0 %v2175
      %2237 = vmatprep.subr.mxu0 0.0
      %2238 = vmatpush1.msra.mxu0 %v2176
      %2239 = vmatprep.subr.mxu0 0.0
      %2240 = vmatpush1.msra.mxu0 %v2177
      %2241 = vmatprep.subr.mxu0 0.0
      %2242 = vmatpush1.msra.mxu0 %v2178
      %2243 = vmatprep.mubr.f32.mxu0 %v2115
      %2244 = vmatmul.mubr.f32.gmra.mrb[0].mxu0 %v1403
      %v2245 = vpop.f32.mrb[0].mxu0
      %v2246 = vadd.f32 0.0, %v2245
      %v2247 = vpop.f32.mrb[0].mxu0
      %2248 = vmatprep.mubr.f32.mxu0 %v2116
      %2249 = vmatmul.mubr.f32.gmra.mrb[0].mxu0 %v1404
      %v2250 = vpop.f32.mrb[0].mxu0
      %v2251 = vadd.f32 0.0, %v2250
      %v2252 = vpop.f32.mrb[0].mxu0
      %2253 = vmatprep.mubr.f32.mxu0 %v2117
      %2254 = vmatmul.mubr.f32.gmra.mrb[0].mxu0 %v1405
      %v2255 = vpop.f32.mrb[0].mxu0
      %v2256 = vadd.f32 0.0, %v2255
      %v2257 = vpop.f32.mrb[0].mxu0
      %2258 = vmatprep.mubr.f32.mxu0 %v2118
      %2259 = vmatmul.mubr.f32.gmra.mrb[0].mxu0 %v1406
      %v2260 = vpop.f32.mrb[0].mxu0
      %v2261 = vadd.f32 0.0, %v2260
      %v2262 = vpop.f32.mrb[0].mxu0
      %2263 = vmatprep.mubr.f32.mxu0 %v2119
      %2264 = vmatmul.mubr.f32.gmra.mrb[0].mxu0 %v1407
      %v2265 = vpop.f32.mrb[0].mxu0
      %v2266 = vadd.f32 0.0, %v2265
      %v2267 = vpop.f32.mrb[0].mxu0
      %2268 = vmatprep.mubr.f32.mxu0 %v2120
      %2269 = vmatmul.mubr.f32.gmra.mrb[0].mxu0 %v1408
      %v2270 = vpop.f32.mrb[0].mxu0
      %v2271 = vadd.f32 0.0, %v2270
      %v2272 = vpop.f32.mrb[0].mxu0
      %2273 = vmatprep.mubr.f32.mxu0 %v2121
      %2274 = vmatmul.mubr.f32.gmra.mrb[0].mxu0 %v1409
      %v2275 = vpop.f32.mrb[0].mxu0
      %v2276 = vadd.f32 0.0, %v2275
      %v2277 = vpop.f32.mrb[0].mxu0
      %2278 = vmatprep.mubr.f32.mxu0 %v2122
      %2279 = vmatmul.mubr.f32.gmra.mrb[0].mxu0 %v1410
      %v2280 = vpop.f32.mrb[0].mxu0
      %v2281 = vadd.f32 0.0, %v2280
      %v2282 = vpop.f32.mrb[0].mxu0
      %2283 = vmatprep.mubr.f32.mxu0 %v2123
      %2284 = vmatmul.mubr.f32.gmra.mrb[0].mxu0 %v1411
      %v2285 = vpop.f32.mrb[0].mxu0
      %v2286 = vadd.f32 0.0, %v2285
      %v2287 = vpop.f32.mrb[0].mxu0
      %2288 = vmatprep.mubr.f32.mxu0 %v2124
      %2289 = vmatmul.mubr.f32.gmra.mrb[0].mxu0 %v1412
      %v2290 = vpop.f32.mrb[0].mxu0
      %v2291 = vadd.f32 0.0, %v2290
      %v2292 = vpop.f32.mrb[0].mxu0
      %2293 = vmatprep.mubr.f32.mxu0 %v2125
      %2294 = vmatmul.mubr.f32.gmra.mrb[0].mxu0 %v1413
      %v2295 = vpop.f32.mrb[0].mxu0
      %v2296 = vadd.f32 0.0, %v2295
      %v2297 = vpop.f32.mrb[0].mxu0
      %2298 = vmatprep.mubr.f32.mxu0 %v2126
      %2299 = vmatmul.mubr.f32.gmra.mrb[0].mxu0 %v1414
      %v2300 = vpop.f32.mrb[0].mxu0
      %v2301 = vadd.f32 0.0, %v2300
      %v2302 = vpop.f32.mrb[0].mxu0
      %2303 = vmatprep.mubr.f32.mxu0 %v2127
      %2304 = vmatmul.mubr.f32.gmra.mrb[0].mxu0 %v1415
      %v2305 = vpop.f32.mrb[0].mxu0
      %v2306 = vadd.f32 0.0, %v2305
      %v2307 = vpop.f32.mrb[0].mxu0
      %2308 = vmatprep.mubr.f32.mxu0 %v2128
      %2309 = vmatmul.mubr.f32.gmra.mrb[0].mxu0 %v1416
      %v2310 = vpop.f32.mrb[0].mxu0
      %v2311 = vadd.f32 0.0, %v2310
      %v2312 = vpop.f32.mrb[0].mxu0
      %2313 = vmatprep.mubr.f32.mxu0 %v2129
      %2314 = vmatmul.mubr.f32.gmra.mrb[0].mxu0 %v1417
      %v2315 = vpop.f32.mrb[0].mxu0
      %v2316 = vadd.f32 0.0, %v2315
      %v2317 = vpop.f32.mrb[0].mxu0
      %2318 = vmatprep.mubr.f32.mxu0 %v2130
      %2319 = vmatmul.mubr.f32.gmra.mrb[0].mxu0 %v1418
      %v2320 = vpop.f32.mrb[0].mxu0
      %v2321 = vadd.f32 0.0, %v2320
      %v2322 = vpop.f32.mrb[0].mxu0
      %2323 = vmatprep.mubr.f32.mxu0 %v2131
      %2324 = vmatmul.mubr.f32.gmra.mrb[0].mxu0 %v1419
      %v2325 = vpop.f32.mrb[0].mxu0
      %v2326 = vadd.f32 0.0, %v2325
      %v2327 = vpop.f32.mrb[0].mxu0
      %2328 = vmatprep.mubr.f32.mxu0 %v2132
      %2329 = vmatmul.mubr.f32.gmra.mrb[0].mxu0 %v1420
      %v2330 = vpop.f32.mrb[0].mxu0
      %v2331 = vadd.f32 0.0, %v2330
      %v2332 = vpop.f32.mrb[0].mxu0
      %2333 = vmatprep.mubr.f32.mxu0 %v2133
      %2334 = vmatmul.mubr.f32.gmra.mrb[0].mxu0 %v1421
      %v2335 = vpop.f32.mrb[0].mxu0
      %v2336 = vadd.f32 0.0, %v2335
      %v2337 = vpop.f32.mrb[0].mxu0
      %2338 = vmatprep.mubr.f32.mxu0 %v2134
      %2339 = vmatmul.mubr.f32.gmra.mrb[0].mxu0 %v1422
      %v2340 = vpop.f32.mrb[0].mxu0
      %v2341 = vadd.f32 0.0, %v2340
      %v2342 = vpop.f32.mrb[0].mxu0
      %2343 = vmatprep.mubr.f32.mxu0 %v2135
      %2344 = vmatmul.mubr.f32.gmra.mrb[0].mxu0 %v1423
      %v2345 = vpop.f32.mrb[0].mxu0
      %v2346 = vadd.f32 0.0, %v2345
      %v2347 = vpop.f32.mrb[0].mxu0
      %2348 = vmatprep.mubr.f32.mxu0 %v2136
      %2349 = vmatmul.mubr.f32.gmra.mrb[0].mxu0 %v1424
      %v2350 = vpop.f32.mrb[0].mxu0
      %v2351 = vadd.f32 0.0, %v2350
      %v2352 = vpop.f32.mrb[0].mxu0
      %2353 = vmatprep.mubr.f32.mxu0 %v2137
      %2354 = vmatmul.mubr.f32.gmra.mrb[0].mxu0 %v1425
      %v2355 = vpop.f32.mrb[0].mxu0
      %v2356 = vadd.f32 0.0, %v2355
      %v2357 = vpop.f32.mrb[0].mxu0
      %2358 = vmatprep.mubr.f32.mxu0 %v2138
      %2359 = vmatmul.mubr.f32.gmra.mrb[0].mxu0 %v1426
      %v2360 = vpop.f32.mrb[0].mxu0
      %v2361 = vadd.f32 0.0, %v2360
      %v2362 = vpop.f32.mrb[0].mxu0
      %2363 = vmatprep.mubr.f32.mxu0 %v2139
      %2364 = vmatmul.mubr.f32.gmra.mrb[0].mxu0 %v1427
      %v2365 = vpop.f32.mrb[0].mxu0
      %v2366 = vadd.f32 0.0, %v2365
      %v2367 = vpop.f32.mrb[0].mxu0
      %2368 = vmatprep.mubr.f32.mxu0 %v2140
      %2369 = vmatmul.mubr.f32.gmra.mrb[0].mxu0 %v1428
      %v2370 = vpop.f32.mrb[0].mxu0
      %v2371 = vadd.f32 0.0, %v2370
      %v2372 = vpop.f32.mrb[0].mxu0
      %2373 = vmatprep.mubr.f32.mxu0 %v2141
      %2374 = vmatmul.mubr.f32.gmra.mrb[0].mxu0 %v1429
      %v2375 = vpop.f32.mrb[0].mxu0
      %v2376 = vadd.f32 0.0, %v2375
      %v2377 = vpop.f32.mrb[0].mxu0
      %2378 = vmatprep.mubr.f32.mxu0 %v2142
      %2379 = vmatmul.mubr.f32.gmra.mrb[0].mxu0 %v1430
      %v2380 = vpop.f32.mrb[0].mxu0
      %v2381 = vadd.f32 0.0, %v2380
      %v2382 = vpop.f32.mrb[0].mxu0
      %2383 = vmatprep.mubr.f32.mxu0 %v2143
      %2384 = vmatmul.mubr.f32.gmra.mrb[0].mxu0 %v1431
      %v2385 = vpop.f32.mrb[0].mxu0
      %v2386 = vadd.f32 0.0, %v2385
      %v2387 = vpop.f32.mrb[0].mxu0
      %2388 = vmatprep.mubr.f32.mxu0 %v2144
      %2389 = vmatmul.mubr.f32.gmra.mrb[0].mxu0 %v1432
      %v2390 = vpop.f32.mrb[0].mxu0
      %v2391 = vadd.f32 0.0, %v2390
      %v2392 = vpop.f32.mrb[0].mxu0
      %2393 = vmatprep.mubr.f32.mxu0 %v2145
      %2394 = vmatmul.mubr.f32.gmra.mrb[0].mxu0 %v1433
      %v2395 = vpop.f32.mrb[0].mxu0
      %v2396 = vadd.f32 0.0, %v2395
      %v2397 = vpop.f32.mrb[0].mxu0
      %2398 = vmatprep.mubr.f32.mxu0 %v2146
      %2399 = vmatmul.mubr.f32.gmra.mrb[0].mxu0 %v1434
      %v2400 = vpop.f32.mrb[0].mxu0
      %v2401 = vadd.f32 0.0, %v2400
      %v2402 = vpop.f32.mrb[0].mxu0
      %2403 = vdwg.mxu0
      %2404 = vst.msk [vmem:[%s302] sm:$0xff] %vm368, %v2246
      %2405 = vst.msk [vmem:[%s302 + $0x8] sm:$0xff] %vm368, %v2251
      %2406 = vst.msk [vmem:[%s302 + $0x10] sm:$0xff] %vm368, %v2256
      %2407 = vst.msk [vmem:[%s302 + $0x18] sm:$0xff] %vm368, %v2261
      %2408 = vst.msk [vmem:[%s302 + $0x20] sm:$0xff] %vm368, %v2266
      %2409 = vst.msk [vmem:[%s302 + $0x28] sm:$0xff] %vm368, %v2271
      %2410 = vst.msk [vmem:[%s302 + $0x30] sm:$0xff] %vm368, %v2276
      %2411 = vst.msk [vmem:[%s302 + $0x38] sm:$0xff] %vm368, %v2281
      %2412 = vst.msk [vmem:[%s302 + $0x40] sm:$0xff] %vm368, %v2286
      %2413 = vst.msk [vmem:[%s302 + $0x48] sm:$0xff] %vm368, %v2291
      %2414 = vst.msk [vmem:[%s302 + $0x50] sm:$0xff] %vm368, %v2296
      %2415 = vst.msk [vmem:[%s302 + $0x58] sm:$0xff] %vm368, %v2301
      %2416 = vst.msk [vmem:[%s302 + $0x60] sm:$0xff] %vm368, %v2306
      %2417 = vst.msk [vmem:[%s302 + $0x68] sm:$0xff] %vm368, %v2311
      %2418 = vst.msk [vmem:[%s302 + $0x70] sm:$0xff] %vm368, %v2316
      %2419 = vst.msk [vmem:[%s302 + $0x78] sm:$0xff] %vm368, %v2321
      %2420 = vst.msk [vmem:[%s302 + $0x80] sm:$0xff] %vm368, %v2326
      %2421 = vst.msk [vmem:[%s302 + $0x88] sm:$0xff] %vm368, %v2331
      %2422 = vst.msk [vmem:[%s302 + $0x90] sm:$0xff] %vm368, %v2336
      %2423 = vst.msk [vmem:[%s302 + $0x98] sm:$0xff] %vm368, %v2341
      %2424 = vst.msk [vmem:[%s302 + $0xa0] sm:$0xff] %vm368, %v2346
      %2425 = vst.msk [vmem:[%s302 + $0xa8] sm:$0xff] %vm368, %v2351
      %2426 = vst.msk [vmem:[%s302 + $0xb0] sm:$0xff] %vm368, %v2356
      %2427 = vst.msk [vmem:[%s302 + $0xb8] sm:$0xff] %vm368, %v2361
      %2428 = vst.msk [vmem:[%s302 + $0xc0] sm:$0xff] %vm368, %v2366
      %2429 = vst.msk [vmem:[%s302 + $0xc8] sm:$0xff] %vm368, %v2371
      %2430 = vst.msk [vmem:[%s302 + $0xd0] sm:$0xff] %vm368, %v2376
      %2431 = vst.msk [vmem:[%s302 + $0xd8] sm:$0xff] %vm368, %v2381
      %2432 = vst.msk [vmem:[%s302 + $0xe0] sm:$0xff] %vm368, %v2386
      %2433 = vst.msk [vmem:[%s302 + $0xe8] sm:$0xff] %vm368, %v2391
      %2434 = vst.msk [vmem:[%s302 + $0xf0] sm:$0xff] %vm368, %v2396
      %2435 = vst.msk [vmem:[%s302 + $0xf8] sm:$0xff] %vm368, %v2401
      %2436 = vst [vmem:[%s309] sm:$0xff] %v1403
      %2437 = vst [vmem:[%s309 + $0x8] sm:$0xff] %v2115
      %2438 = vst [vmem:[%s309 + $0x10] sm:$0xff] %v1404
      %2439 = vst [vmem:[%s309 + $0x18] sm:$0xff] %v2116
      %2440 = vst [vmem:[%s309 + $0x20] sm:$0xff] %v1405
      %2441 = vst [vmem:[%s309 + $0x28] sm:$0xff] %v2117
      %2442 = vst [vmem:[%s309 + $0x30] sm:$0xff] %v1406
      %2443 = vst [vmem:[%s309 + $0x38] sm:$0xff] %v2118
      %2444 = vst [vmem:[%s309 + $0x40] sm:$0xff] %v1407
      %2445 = vst [vmem:[%s309 + $0x48] sm:$0xff] %v2119
      %2446 = vst [vmem:[%s309 + $0x50] sm:$0xff] %v1408
      %2447 = vst [vmem:[%s309 + $0x58] sm:$0xff] %v2120
      %2448 = vst [vmem:[%s309 + $0x60] sm:$0xff] %v1409
      %2449 = vst [vmem:[%s309 + $0x68] sm:$0xff] %v2121
      %2450 = vst [vmem:[%s309 + $0x70] sm:$0xff] %v1410
      %2451 = vst [vmem:[%s309 + $0x78] sm:$0xff] %v2122
      %2452 = vst [vmem:[%s309 + $0x80] sm:$0xff] %v1411
      %2453 = vst [vmem:[%s309 + $0x88] sm:$0xff] %v2123
      %2454 = vst [vmem:[%s309 + $0x90] sm:$0xff] %v1412
      %2455 = vst [vmem:[%s309 + $0x98] sm:$0xff] %v2124
      %2456 = vst [vmem:[%s309 + $0xa0] sm:$0xff] %v1413
      %2457 = vst [vmem:[%s309 + $0xa8] sm:$0xff] %v2125
      %2458 = vst [vmem:[%s309 + $0xb0] sm:$0xff] %v1414
      %2459 = vst [vmem:[%s309 + $0xb8] sm:$0xff] %v2126
      %2460 = vst [vmem:[%s309 + $0xc0] sm:$0xff] %v1415
      %2461 = vst [vmem:[%s309 + $0xc8] sm:$0xff] %v2127
      %2462 = vst [vmem:[%s309 + $0xd0] sm:$0xff] %v1416
      %2463 = vst [vmem:[%s309 + $0xd8] sm:$0xff] %v2128
      %2464 = vst [vmem:[%s309 + $0xe0] sm:$0xff] %v1417
      %2465 = vst [vmem:[%s309 + $0xe8] sm:$0xff] %v2129
      %2466 = vst [vmem:[%s309 + $0xf0] sm:$0xff] %v1418
      %2467 = vst [vmem:[%s309 + $0xf8] sm:$0xff] %v2130
      %2468 = vst [vmem:[%s309 + $0x100] sm:$0xff] %v1419
      %2469 = vst [vmem:[%s309 + $0x108] sm:$0xff] %v2131
      %2470 = vst [vmem:[%s309 + $0x110] sm:$0xff] %v1420
      %2471 = vst [vmem:[%s309 + $0x118] sm:$0xff] %v2132
      %2472 = vst [vmem:[%s309 + $0x120] sm:$0xff] %v1421
      %2473 = vst [vmem:[%s309 + $0x128] sm:$0xff] %v2133
      %2474 = vst [vmem:[%s309 + $0x130] sm:$0xff] %v1422
      %2475 = vst [vmem:[%s309 + $0x138] sm:$0xff] %v2134
      %2476 = vst [vmem:[%s309 + $0x140] sm:$0xff] %v1423
      %2477 = vst [vmem:[%s309 + $0x148] sm:$0xff] %v2135
      %2478 = vst [vmem:[%s309 + $0x150] sm:$0xff] %v1424
      %2479 = vst [vmem:[%s309 + $0x158] sm:$0xff] %v2136
      %2480 = vst [vmem:[%s309 + $0x160] sm:$0xff] %v1425
      %2481 = vst [vmem:[%s309 + $0x168] sm:$0xff] %v2137
      %2482 = vst [vmem:[%s309 + $0x170] sm:$0xff] %v1426
      %2483 = vst [vmem:[%s309 + $0x178] sm:$0xff] %v2138
      %2484 = vst [vmem:[%s309 + $0x180] sm:$0xff] %v1427
      %2485 = vst [vmem:[%s309 + $0x188] sm:$0xff] %v2139
      %2486 = vst [vmem:[%s309 + $0x190] sm:$0xff] %v1428
      %2487 = vst [vmem:[%s309 + $0x198] sm:$0xff] %v2140
      %2488 = vst [vmem:[%s309 + $0x1a0] sm:$0xff] %v1429
      %2489 = vst [vmem:[%s309 + $0x1a8] sm:$0xff] %v2141
      %2490 = vst [vmem:[%s309 + $0x1b0] sm:$0xff] %v1430
      %2491 = vst [vmem:[%s309 + $0x1b8] sm:$0xff] %v2142
      %2492 = vst [vmem:[%s309 + $0x1c0] sm:$0xff] %v1431
      %2493 = vst [vmem:[%s309 + $0x1c8] sm:$0xff] %v2143
      %2494 = vst [vmem:[%s309 + $0x1d0] sm:$0xff] %v1432
      %2495 = vst [vmem:[%s309 + $0x1d8] sm:$0xff] %v2144
      %2496 = vst [vmem:[%s309 + $0x1e0] sm:$0xff] %v1433
      %2497 = vst [vmem:[%s309 + $0x1e8] sm:$0xff] %v2145
      %2498 = vst [vmem:[%s309 + $0x1f0] sm:$0xff] %v1434
      %2499 = vst [vmem:[%s309 + $0x1f8] sm:$0xff] %v2146
      %s2500 = smul.u32 %s19, 256
      %v2501 = vlaneseq
      %v2502 = vshrl.u32 %v2501, 7
      %v2503 = vadd.s32 %v2502, 8
      %v2504 = vadd.s32 %v2502, 16
      %v2505 = vadd.s32 %v2502, 24
      %v2506 = vadd.s32 %v2502, 32
      %v2507 = vadd.s32 %v2502, 40
      %v2508 = vadd.s32 %v2502, 48
      %v2509 = vadd.s32 %v2502, 56
      %v2510 = vadd.s32 %v2502, 64
      %v2511 = vadd.s32 %v2502, 72
      %v2512 = vadd.s32 %v2502, 80
      %v2513 = vadd.s32 %v2502, 88
      %v2514 = vadd.s32 %v2502, 96
      %v2515 = vadd.s32 %v2502, 104
      %v2516 = vadd.s32 %v2502, 112
      %v2517 = vadd.s32 %v2502, 120
      %v2518 = vadd.s32 %v2502, 128
      %v2519 = vadd.s32 %v2502, 136
      %v2520 = vadd.s32 %v2502, 144
      %v2521 = vadd.s32 %v2502, 152
      %v2522 = vadd.s32 %v2502, 160
      %v2523 = vadd.s32 %v2502, 168
      %v2524 = vadd.s32 %v2502, 176
      %v2525 = vadd.s32 %v2502, 184
      %v2526 = vadd.s32 %v2502, 192
      %v2527 = vadd.s32 %v2502, 200
      %v2528 = vadd.s32 %v2502, 208
      %v2529 = vadd.s32 %v2502, 216
      %v2530 = vadd.s32 %v2502, 224
      %v2531 = vadd.s32 %v2502, 232
      %v2532 = vadd.s32 %v2502, 240
      %v2533 = vadd.s32 %v2502, 248
      %v2534 = vstv %s2500
      %v2535 = vadd.s32 %v2502, %v2534
      %v2536 = vadd.s32 %v2503, %v2534
      %v2537 = vadd.s32 %v2504, %v2534
      %v2538 = vadd.s32 %v2505, %v2534
      %v2539 = vadd.s32 %v2506, %v2534
      %v2540 = vadd.s32 %v2507, %v2534
      %v2541 = vadd.s32 %v2508, %v2534
      %v2542 = vadd.s32 %v2509, %v2534
      %v2543 = vadd.s32 %v2510, %v2534
      %v2544 = vadd.s32 %v2511, %v2534
      %v2545 = vadd.s32 %v2512, %v2534
      %v2546 = vadd.s32 %v2513, %v2534
      %v2547 = vadd.s32 %v2514, %v2534
      %v2548 = vadd.s32 %v2515, %v2534
      %v2549 = vadd.s32 %v2516, %v2534
      %v2550 = vadd.s32 %v2517, %v2534
      %v2551 = vadd.s32 %v2518, %v2534
      %v2552 = vadd.s32 %v2519, %v2534
      %v2553 = vadd.s32 %v2520, %v2534
      %v2554 = vadd.s32 %v2521, %v2534
      %v2555 = vadd.s32 %v2522, %v2534
      %v2556 = vadd.s32 %v2523, %v2534
      %v2557 = vadd.s32 %v2524, %v2534
      %v2558 = vadd.s32 %v2525, %v2534
      %v2559 = vadd.s32 %v2526, %v2534
      %v2560 = vadd.s32 %v2527, %v2534
      %v2561 = vadd.s32 %v2528, %v2534
      %v2562 = vadd.s32 %v2529, %v2534
      %v2563 = vadd.s32 %v2530, %v2534
      %v2564 = vadd.s32 %v2531, %v2534
      %v2565 = vadd.s32 %v2532, %v2534
      %v2566 = vadd.s32 %v2533, %v2534
      %vm2567 = vcmp.lt.s32.totalorder %v2535, 512
      %vm2568 = vcmp.lt.s32.totalorder %v2536, 512
      %vm2569 = vcmp.lt.s32.totalorder %v2537, 512
      %vm2570 = vcmp.lt.s32.totalorder %v2538, 512
      %vm2571 = vcmp.lt.s32.totalorder %v2539, 512
      %vm2572 = vcmp.lt.s32.totalorder %v2540, 512
      %vm2573 = vcmp.lt.s32.totalorder %v2541, 512
      %vm2574 = vcmp.lt.s32.totalorder %v2542, 512
      %vm2575 = vcmp.lt.s32.totalorder %v2543, 512
      %vm2576 = vcmp.lt.s32.totalorder %v2544, 512
      %vm2577 = vcmp.lt.s32.totalorder %v2545, 512
      %vm2578 = vcmp.lt.s32.totalorder %v2546, 512
      %vm2579 = vcmp.lt.s32.totalorder %v2547, 512
      %vm2580 = vcmp.lt.s32.totalorder %v2548, 512
      %vm2581 = vcmp.lt.s32.totalorder %v2549, 512
      %vm2582 = vcmp.lt.s32.totalorder %v2550, 512
      %vm2583 = vcmp.lt.s32.totalorder %v2551, 512
      %vm2584 = vcmp.lt.s32.totalorder %v2552, 512
      %vm2585 = vcmp.lt.s32.totalorder %v2553, 512
      %vm2586 = vcmp.lt.s32.totalorder %v2554, 512
      %vm2587 = vcmp.lt.s32.totalorder %v2555, 512
      %vm2588 = vcmp.lt.s32.totalorder %v2556, 512
      %vm2589 = vcmp.lt.s32.totalorder %v2557, 512
      %vm2590 = vcmp.lt.s32.totalorder %v2558, 512
      %vm2591 = vcmp.lt.s32.totalorder %v2559, 512
      %vm2592 = vcmp.lt.s32.totalorder %v2560, 512
      %vm2593 = vcmp.lt.s32.totalorder %v2561, 512
      %vm2594 = vcmp.lt.s32.totalorder %v2562, 512
      %vm2595 = vcmp.lt.s32.totalorder %v2563, 512
      %vm2596 = vcmp.lt.s32.totalorder %v2564, 512
      %vm2597 = vcmp.lt.s32.totalorder %v2565, 512
      %vm2598 = vcmp.lt.s32.totalorder %v2566, 512
      %v2599 = vsel %vm2567, 1, 0
      %v2600 = vsel %vm2568, 1, 0
      %v2601 = vsel %vm2569, 1, 0
      %v2602 = vsel %vm2570, 1, 0
      %v2603 = vsel %vm2571, 1, 0
      %v2604 = vsel %vm2572, 1, 0
      %v2605 = vsel %vm2573, 1, 0
      %v2606 = vsel %vm2574, 1, 0
      %v2607 = vsel %vm2575, 1, 0
      %v2608 = vsel %vm2576, 1, 0
      %v2609 = vsel %vm2577, 1, 0
      %v2610 = vsel %vm2578, 1, 0
      %v2611 = vsel %vm2579, 1, 0
      %v2612 = vsel %vm2580, 1, 0
      %v2613 = vsel %vm2581, 1, 0
      %v2614 = vsel %vm2582, 1, 0
      %v2615 = vsel %vm2583, 1, 0
      %v2616 = vsel %vm2584, 1, 0
      %v2617 = vsel %vm2585, 1, 0
      %v2618 = vsel %vm2586, 1, 0
      %v2619 = vsel %vm2587, 1, 0
      %v2620 = vsel %vm2588, 1, 0
      %v2621 = vsel %vm2589, 1, 0
      %v2622 = vsel %vm2590, 1, 0
      %v2623 = vsel %vm2591, 1, 0
      %v2624 = vsel %vm2592, 1, 0
      %v2625 = vsel %vm2593, 1, 0
      %v2626 = vsel %vm2594, 1, 0
      %v2627 = vsel %vm2595, 1, 0
      %v2628 = vsel %vm2596, 1, 0
      %v2629 = vsel %vm2597, 1, 0
      %v2630 = vsel %vm2598, 1, 0
      %v2631 = vcvt.s32.f32 %v2599
      %v2632 = vcvt.s32.f32 %v2600
      %v2633 = vcvt.s32.f32 %v2601
      %v2634 = vcvt.s32.f32 %v2602
      %v2635 = vcvt.s32.f32 %v2603
      %v2636 = vcvt.s32.f32 %v2604
      %v2637 = vcvt.s32.f32 %v2605
      %v2638 = vcvt.s32.f32 %v2606
      %v2639 = vcvt.s32.f32 %v2607
      %v2640 = vcvt.s32.f32 %v2608
      %v2641 = vcvt.s32.f32 %v2609
      %v2642 = vcvt.s32.f32 %v2610
      %v2643 = vcvt.s32.f32 %v2611
      %v2644 = vcvt.s32.f32 %v2612
      %v2645 = vcvt.s32.f32 %v2613
      %v2646 = vcvt.s32.f32 %v2614
      %v2647 = vcvt.s32.f32 %v2615
      %v2648 = vcvt.s32.f32 %v2616
      %v2649 = vcvt.s32.f32 %v2617
      %v2650 = vcvt.s32.f32 %v2618
      %v2651 = vcvt.s32.f32 %v2619
      %v2652 = vcvt.s32.f32 %v2620
      %v2653 = vcvt.s32.f32 %v2621
      %v2654 = vcvt.s32.f32 %v2622
      %v2655 = vcvt.s32.f32 %v2623
      %v2656 = vcvt.s32.f32 %v2624
      %v2657 = vcvt.s32.f32 %v2625
      %v2658 = vcvt.s32.f32 %v2626
      %v2659 = vcvt.s32.f32 %v2627
      %v2660 = vcvt.s32.f32 %v2628
      %v2661 = vcvt.s32.f32 %v2629
      %v2662 = vcvt.s32.f32 %v2630
      %v2663 = vmul.f32 %v1403, %v2631
      %v2664 = vmul.f32 %v2115, %v2631
      %v2665 = vmul.f32 %v1404, %v2632
      %v2666 = vmul.f32 %v2116, %v2632
      %v2667 = vmul.f32 %v1405, %v2633
      %v2668 = vmul.f32 %v2117, %v2633
      %v2669 = vmul.f32 %v1406, %v2634
      %v2670 = vmul.f32 %v2118, %v2634
      %v2671 = vmul.f32 %v1407, %v2635
      %v2672 = vmul.f32 %v2119, %v2635
      %v2673 = vmul.f32 %v1408, %v2636
      %v2674 = vmul.f32 %v2120, %v2636
      %v2675 = vmul.f32 %v1409, %v2637
      %v2676 = vmul.f32 %v2121, %v2637
      %v2677 = vmul.f32 %v1410, %v2638
      %v2678 = vmul.f32 %v2122, %v2638
      %v2679 = vmul.f32 %v1411, %v2639
      %v2680 = vmul.f32 %v2123, %v2639
      %v2681 = vmul.f32 %v1412, %v2640
      %v2682 = vmul.f32 %v2124, %v2640
      %v2683 = vmul.f32 %v1413, %v2641
      %v2684 = vmul.f32 %v2125, %v2641
      %v2685 = vmul.f32 %v1414, %v2642
      %v2686 = vmul.f32 %v2126, %v2642
      %v2687 = vmul.f32 %v1415, %v2643
      %v2688 = vmul.f32 %v2127, %v2643
      %v2689 = vmul.f32 %v1416, %v2644
      %v2690 = vmul.f32 %v2128, %v2644
      %v2691 = vmul.f32 %v1417, %v2645
      %v2692 = vmul.f32 %v2129, %v2645
      %v2693 = vmul.f32 %v1418, %v2646
      %v2694 = vmul.f32 %v2130, %v2646
      %v2695 = vmul.f32 %v1419, %v2647
      %v2696 = vmul.f32 %v2131, %v2647
      %v2697 = vmul.f32 %v1420, %v2648
      %v2698 = vmul.f32 %v2132, %v2648
      %v2699 = vmul.f32 %v1421, %v2649
      %v2700 = vmul.f32 %v2133, %v2649
      %v2701 = vmul.f32 %v1422, %v2650
      %v2702 = vmul.f32 %v2134, %v2650
      %v2703 = vmul.f32 %v1423, %v2651
      %v2704 = vmul.f32 %v2135, %v2651
      %v2705 = vmul.f32 %v1424, %v2652
      %v2706 = vmul.f32 %v2136, %v2652
      %v2707 = vmul.f32 %v1425, %v2653
      %v2708 = vmul.f32 %v2137, %v2653
      %v2709 = vmul.f32 %v1426, %v2654
      %v2710 = vmul.f32 %v2138, %v2654
      %v2711 = vmul.f32 %v1427, %v2655
      %v2712 = vmul.f32 %v2139, %v2655
      %v2713 = vmul.f32 %v1428, %v2656
      %v2714 = vmul.f32 %v2140, %v2656
      %v2715 = vmul.f32 %v1429, %v2657
      %v2716 = vmul.f32 %v2141, %v2657
      %v2717 = vmul.f32 %v1430, %v2658
      %v2718 = vmul.f32 %v2142, %v2658
      %v2719 = vmul.f32 %v1431, %v2659
      %v2720 = vmul.f32 %v2143, %v2659
      %v2721 = vmul.f32 %v1432, %v2660
      %v2722 = vmul.f32 %v2144, %v2660
      %v2723 = vmul.f32 %v1433, %v2661
      %v2724 = vmul.f32 %v2145, %v2661
      %v2725 = vmul.f32 %v1434, %v2662
      %v2726 = vmul.f32 %v2146, %v2662
      %v2727 = vadd.f32 %v2663, %v2665
      %v2728 = vadd.f32 %v2727, %v2667
      %v2729 = vadd.f32 %v2728, %v2669
      %v2730 = vadd.f32 %v2729, %v2671
      %v2731 = vadd.f32 %v2730, %v2673
      %v2732 = vadd.f32 %v2731, %v2675
      %v2733 = vadd.f32 %v2732, %v2677
      %v2734 = vadd.f32 %v2733, %v2679
      %v2735 = vadd.f32 %v2734, %v2681
      %v2736 = vadd.f32 %v2735, %v2683
      %v2737 = vadd.f32 %v2736, %v2685
      %v2738 = vadd.f32 %v2737, %v2687
      %v2739 = vadd.f32 %v2738, %v2689
      %v2740 = vadd.f32 %v2739, %v2691
      %v2741 = vadd.f32 %v2740, %v2693
      %v2742 = vadd.f32 %v2741, %v2695
      %v2743 = vadd.f32 %v2742, %v2697
      %v2744 = vadd.f32 %v2743, %v2699
      %v2745 = vadd.f32 %v2744, %v2701
      %v2746 = vadd.f32 %v2745, %v2703
      %v2747 = vadd.f32 %v2746, %v2705
      %v2748 = vadd.f32 %v2747, %v2707
      %v2749 = vadd.f32 %v2748, %v2709
      %v2750 = vadd.f32 %v2749, %v2711
      %v2751 = vadd.f32 %v2750, %v2713
      %v2752 = vadd.f32 %v2751, %v2715
      %v2753 = vadd.f32 %v2752, %v2717
      %v2754 = vadd.f32 %v2753, %v2719
      %v2755 = vadd.f32 %v2754, %v2721
      %v2756 = vadd.f32 %v2755, %v2723
      %v2757 = vadd.f32 %v2756, %v2725
      %v2758 = vrot.slane %v2757, 4
      %v2759 = vadd.f32 %v2757, %v2758
      %v2760 = vrot.slane %v2759, 2
      %v2761 = vadd.f32 %v2759, %v2760
      %v2762 = vrot.slane %v2761, 1
      %v2763 = vadd.f32 %v2761, %v2762
      %v2764 = vadd.f32 %v2664, %v2666
      %v2765 = vadd.f32 %v2764, %v2668
      %v2766 = vadd.f32 %v2765, %v2670
      %v2767 = vadd.f32 %v2766, %v2672
      %v2768 = vadd.f32 %v2767, %v2674
      %v2769 = vadd.f32 %v2768, %v2676
      %v2770 = vadd.f32 %v2769, %v2678
      %v2771 = vadd.f32 %v2770, %v2680
      %v2772 = vadd.f32 %v2771, %v2682
      %v2773 = vadd.f32 %v2772, %v2684
      %v2774 = vadd.f32 %v2773, %v2686
      %v2775 = vadd.f32 %v2774, %v2688
      %v2776 = vadd.f32 %v2775, %v2690
      %v2777 = vadd.f32 %v2776, %v2692
      %v2778 = vadd.f32 %v2777, %v2694
      %v2779 = vadd.f32 %v2778, %v2696
      %v2780 = vadd.f32 %v2779, %v2698
      %v2781 = vadd.f32 %v2780, %v2700
      %v2782 = vadd.f32 %v2781, %v2702
      %v2783 = vadd.f32 %v2782, %v2704
      %v2784 = vadd.f32 %v2783, %v2706
      %v2785 = vadd.f32 %v2784, %v2708
      %v2786 = vadd.f32 %v2785, %v2710
      %v2787 = vadd.f32 %v2786, %v2712
      %v2788 = vadd.f32 %v2787, %v2714
      %v2789 = vadd.f32 %v2788, %v2716
      %v2790 = vadd.f32 %v2789, %v2718
      %v2791 = vadd.f32 %v2790, %v2720
      %v2792 = vadd.f32 %v2791, %v2722
      %v2793 = vadd.f32 %v2792, %v2724
      %v2794 = vadd.f32 %v2793, %v2726
      %v2795 = vrot.slane %v2794, 4
      %v2796 = vadd.f32 %v2794, %v2795
      %v2797 = vrot.slane %v2796, 2
      %v2798 = vadd.f32 %v2796, %v2797
      %v2799 = vrot.slane %v2798, 1
      %v2800 = vadd.f32 %v2798, %v2799
      %2801 = vst [vmem:[%s315] sm:$0xff] %v2763
      %2802 = vst [vmem:[%s315 + $0x8] sm:$0xff] %v2800
      %v2803 = vsub.f32 %v2246, %v320
      %v2804 = vsub.f32 %v2251, %v321
      %v2805 = vsub.f32 %v2256, %v322
      %v2806 = vsub.f32 %v2261, %v323
      %v2807 = vsub.f32 %v2266, %v324
      %v2808 = vsub.f32 %v2271, %v325
      %v2809 = vsub.f32 %v2276, %v326
      %v2810 = vsub.f32 %v2281, %v327
      %v2811 = vsub.f32 %v2286, %v328
      %v2812 = vsub.f32 %v2291, %v329
      %v2813 = vsub.f32 %v2296, %v330
      %v2814 = vsub.f32 %v2301, %v331
      %v2815 = vsub.f32 %v2306, %v332
      %v2816 = vsub.f32 %v2311, %v333
      %v2817 = vsub.f32 %v2316, %v334
      %v2818 = vsub.f32 %v2321, %v335
      %v2819 = vsub.f32 %v2326, %v336
      %v2820 = vsub.f32 %v2331, %v337
      %v2821 = vsub.f32 %v2336, %v338
      %v2822 = vsub.f32 %v2341, %v339
      %v2823 = vsub.f32 %v2346, %v340
      %v2824 = vsub.f32 %v2351, %v341
      %v2825 = vsub.f32 %v2356, %v342
      %v2826 = vsub.f32 %v2361, %v343
      %v2827 = vsub.f32 %v2366, %v344
      %v2828 = vsub.f32 %v2371, %v345
      %v2829 = vsub.f32 %v2376, %v346
      %v2830 = vsub.f32 %v2381, %v347
      %v2831 = vsub.f32 %v2386, %v348
      %v2832 = vsub.f32 %v2391, %v349
      %v2833 = vsub.f32 %v2396, %v350
      %v2834 = vsub.f32 %v2401, %v351
      %v2835 = vmul.f32 %v2803, %v2631
      %v2836 = vmul.f32 %v2804, %v2632
      %v2837 = vmul.f32 %v2805, %v2633
      %v2838 = vmul.f32 %v2806, %v2634
      %v2839 = vmul.f32 %v2807, %v2635
      %v2840 = vmul.f32 %v2808, %v2636
      %v2841 = vmul.f32 %v2809, %v2637
      %v2842 = vmul.f32 %v2810, %v2638
      %v2843 = vmul.f32 %v2811, %v2639
      %v2844 = vmul.f32 %v2812, %v2640
      %v2845 = vmul.f32 %v2813, %v2641
      %v2846 = vmul.f32 %v2814, %v2642
      %v2847 = vmul.f32 %v2815, %v2643
      %v2848 = vmul.f32 %v2816, %v2644
      %v2849 = vmul.f32 %v2817, %v2645
      %v2850 = vmul.f32 %v2818, %v2646
      %v2851 = vmul.f32 %v2819, %v2647
      %v2852 = vmul.f32 %v2820, %v2648
      %v2853 = vmul.f32 %v2821, %v2649
      %v2854 = vmul.f32 %v2822, %v2650
      %v2855 = vmul.f32 %v2823, %v2651
      %v2856 = vmul.f32 %v2824, %v2652
      %v2857 = vmul.f32 %v2825, %v2653
      %v2858 = vmul.f32 %v2826, %v2654
      %v2859 = vmul.f32 %v2827, %v2655
      %v2860 = vmul.f32 %v2828, %v2656
      %v2861 = vmul.f32 %v2829, %v2657
      %v2862 = vmul.f32 %v2830, %v2658
      %v2863 = vmul.f32 %v2831, %v2659
      %v2864 = vmul.f32 %v2832, %v2660
      %v2865 = vmul.f32 %v2833, %v2661
      %v2866 = vmul.f32 %v2834, %v2662
      %v2867 = vmul.f32 %v2835, %v2835
      %v2868 = vmul.f32 %v2836, %v2836
      %v2869 = vmul.f32 %v2837, %v2837
      %v2870 = vmul.f32 %v2838, %v2838
      %v2871 = vmul.f32 %v2839, %v2839
      %v2872 = vmul.f32 %v2840, %v2840
      %v2873 = vmul.f32 %v2841, %v2841
      %v2874 = vmul.f32 %v2842, %v2842
      %v2875 = vmul.f32 %v2843, %v2843
      %v2876 = vmul.f32 %v2844, %v2844
      %v2877 = vmul.f32 %v2845, %v2845
      %v2878 = vmul.f32 %v2846, %v2846
      %v2879 = vmul.f32 %v2847, %v2847
      %v2880 = vmul.f32 %v2848, %v2848
      %v2881 = vmul.f32 %v2849, %v2849
      %v2882 = vmul.f32 %v2850, %v2850
      %v2883 = vmul.f32 %v2851, %v2851
      %v2884 = vmul.f32 %v2852, %v2852
      %v2885 = vmul.f32 %v2853, %v2853
      %v2886 = vmul.f32 %v2854, %v2854
      %v2887 = vmul.f32 %v2855, %v2855
      %v2888 = vmul.f32 %v2856, %v2856
      %v2889 = vmul.f32 %v2857, %v2857
      %v2890 = vmul.f32 %v2858, %v2858
      %v2891 = vmul.f32 %v2859, %v2859
      %v2892 = vmul.f32 %v2860, %v2860
      %v2893 = vmul.f32 %v2861, %v2861
      %v2894 = vmul.f32 %v2862, %v2862
      %v2895 = vmul.f32 %v2863, %v2863
      %v2896 = vmul.f32 %v2864, %v2864
      %v2897 = vmul.f32 %v2865, %v2865
      %v2898 = vmul.f32 %v2866, %v2866
      %v2899 = vsel %vm368, %v2867, 0.0
      %v2900 = vsel %vm368, %v2868, 0.0
      %v2901 = vadd.f32 %v2899, %v2900
      %v2902 = vsel %vm368, %v2869, 0.0
      %v2903 = vadd.f32 %v2901, %v2902
      %v2904 = vsel %vm368, %v2870, 0.0
      %v2905 = vadd.f32 %v2903, %v2904
      %v2906 = vsel %vm368, %v2871, 0.0
      %v2907 = vadd.f32 %v2905, %v2906
      %v2908 = vsel %vm368, %v2872, 0.0
      %v2909 = vadd.f32 %v2907, %v2908
      %v2910 = vsel %vm368, %v2873, 0.0
      %v2911 = vadd.f32 %v2909, %v2910
      %v2912 = vsel %vm368, %v2874, 0.0
      %v2913 = vadd.f32 %v2911, %v2912
      %v2914 = vsel %vm368, %v2875, 0.0
      %v2915 = vadd.f32 %v2913, %v2914
      %v2916 = vsel %vm368, %v2876, 0.0
      %v2917 = vadd.f32 %v2915, %v2916
      %v2918 = vsel %vm368, %v2877, 0.0
      %v2919 = vadd.f32 %v2917, %v2918
      %v2920 = vsel %vm368, %v2878, 0.0
      %v2921 = vadd.f32 %v2919, %v2920
      %v2922 = vsel %vm368, %v2879, 0.0
      %v2923 = vadd.f32 %v2921, %v2922
      %v2924 = vsel %vm368, %v2880, 0.0
      %v2925 = vadd.f32 %v2923, %v2924
      %v2926 = vsel %vm368, %v2881, 0.0
      %v2927 = vadd.f32 %v2925, %v2926
      %v2928 = vsel %vm368, %v2882, 0.0
      %v2929 = vadd.f32 %v2927, %v2928
      %v2930 = vsel %vm368, %v2883, 0.0
      %v2931 = vadd.f32 %v2929, %v2930
      %v2932 = vsel %vm368, %v2884, 0.0
      %v2933 = vadd.f32 %v2931, %v2932
      %v2934 = vsel %vm368, %v2885, 0.0
      %v2935 = vadd.f32 %v2933, %v2934
      %v2936 = vsel %vm368, %v2886, 0.0
      %v2937 = vadd.f32 %v2935, %v2936
      %v2938 = vsel %vm368, %v2887, 0.0
      %v2939 = vadd.f32 %v2937, %v2938
      %v2940 = vsel %vm368, %v2888, 0.0
      %v2941 = vadd.f32 %v2939, %v2940
      %v2942 = vsel %vm368, %v2889, 0.0
      %v2943 = vadd.f32 %v2941, %v2942
      %v2944 = vsel %vm368, %v2890, 0.0
      %v2945 = vadd.f32 %v2943, %v2944
      %v2946 = vsel %vm368, %v2891, 0.0
      %v2947 = vadd.f32 %v2945, %v2946
      %v2948 = vsel %vm368, %v2892, 0.0
      %v2949 = vadd.f32 %v2947, %v2948
      %v2950 = vsel %vm368, %v2893, 0.0
      %v2951 = vadd.f32 %v2949, %v2950
      %v2952 = vsel %vm368, %v2894, 0.0
      %v2953 = vadd.f32 %v2951, %v2952
      %v2954 = vsel %vm368, %v2895, 0.0
      %v2955 = vadd.f32 %v2953, %v2954
      %v2956 = vsel %vm368, %v2896, 0.0
      %v2957 = vadd.f32 %v2955, %v2956
      %v2958 = vsel %vm368, %v2897, 0.0
      %v2959 = vadd.f32 %v2957, %v2958
      %v2960 = vsel %vm368, %v2898, 0.0
      %v2961 = vadd.f32 %v2959, %v2960
      %2962 = vadd.xlane.f32.xlu0 %v2961
      %v2963 = vpop.xlane.xlu0 %2962
      %v2964 = vrot.slane %v2963, 4
      %v2965 = vadd.f32 %v2963, %v2964
      %v2966 = vrot.slane %v2965, 2
      %v2967 = vadd.f32 %v2965, %v2966
      %v2968 = vrot.slane %v2967, 1
      %v2969 = vadd.f32 %v2967, %v2968
      %s2970 = vtos %v2969
      %v2971 = vstv %s2970
      %2972 = vst [vmem:[%s319] sm:$0xff] %v2971
      %s2973 = smul.u32 32, %s19
      %p2974 = scmp.lt.s32.totalorder %s2973, 63
      %s2975 = scalar_select %p2974, %s2973, 63
      %s2976 = smul.addr %s2975, 8
      %s2977 = scalar_lea.vmem %s4, %s2976
      %s2978 = smul.u32 32, %s19
      %p2979 = scmp.lt.s32.totalorder %s2978, 63
      %s2980 = scalar_select %p2979, %s2978, 63
      %s2981 = smul.addr %s2980, 2
      %s2982 = smul.addr %s2981, 8
      %s2983 = scalar_lea.vmem %s5, %s2982
      %p2984 = scmp.lt.s32.totalorder %s19, 1
      %s2985 = scalar_select %p2984, %s19, 1
      %s2986 = smul.addr %s2985, 2
      %s2987 = smul.addr %s2986, 8
      %s2988 = scalar_lea.vmem %s6, %s2987
      %p2989 = scmp.lt.s32.totalorder %s19, 1
      %s2990 = scalar_select %p2989, %s19, 1
      %s2991 = smul.addr %s2990, 8
      %s2992 = scalar_lea.vmem %s7, %s2991
      // Predicated region
      $region37: #{vq_forward.1} parent=35 // pred_check
        %p2993 = pneg %p126
      $region38: #{vq_forward.1} parent=35 // pred_check_branch
        %2995 = sbr.rel (%p2993) target = $region40
      $region39: #{vq_forward.1} parent=35 // pred_region
        %s2996 = smul.u32 32, %s19
      $region40: #{vq_forward.1} parent=35 // pred_fallthru
        _
      // Predicated region
      $region41: #{vq_forward.1} parent=35 // pred_check
        %p2997 = pneg %p152
      $region42: #{vq_forward.1} parent=35 // pred_check_branch
        %2999 = sbr.rel (%p2997) target = $region44
      $region43: #{vq_forward.1} parent=35 // pred_region
        %s3000 = smul.u32 32, %s19
      $region44: #{vq_forward.1} parent=35 // pred_fallthru
        _
      // Predicated region
      $region45: #{vq_forward.1} parent=35 // pred_check
        %p3001 = pneg %p178
      $region46: #{vq_forward.1} parent=35 // pred_check_branch
        %3003 = sbr.rel (%p3001) target = $region48
      $region47: #{vq_forward.1} parent=35 // pred_region
        _
      $region48: #{vq_forward.1} parent=35 // pred_fallthru
        _
      // Predicated region
      $region49: #{vq_forward.1} parent=35 // pred_check
        %p3004 = pneg %p204
      $region50: #{vq_forward.1} parent=35 // pred_check_branch
        %3006 = sbr.rel (%p3004) target = $region52
      $region51: #{vq_forward.1} parent=35 // pred_region
        _
      $region52: #{vq_forward.1} parent=35 // pred_fallthru
        _
    $region36: #{vq_forward.1} parent=5 // pred_fallthru
      _
    %p3007 = scmp.le.s32.totalorder 2, %s14
    // Predicated region
    $region53: #{vq_forward.1} parent=5 // pred_check
      %p3008 = pneg %p3007
    $region54: #{vq_forward.1} parent=5 // pred_check_branch
      %3010 = sbr.rel (%p3008) target = $region56
    $region55: #{vq_forward.1} parent=5 // pred_region
      %s3011 = ssub.s32 %s14, 2
      // Predicated region
      $region57: #{vq_forward.1} parent=55 // pred_check
        %p3012 = pneg %p132
      $region58: #{vq_forward.1} parent=55 // pred_check_branch
        %3014 = sbr.rel (%p3012) target = $region60
      $region59: #{vq_forward.1} parent=55 // pred_region
        %s3015 = smul.u32 32, %s20
        %p3016 = scmp.lt.s32.totalorder %s3015, 63
        %s3017 = scalar_select %p3016, %s3015, 63
        %s3018 = smul.addr %s3017, 8
        %s3019 = scalar_lea.vmem %s4, %s3018
      $region60: #{vq_forward.1} parent=55 // pred_fallthru
        _
      // Predicated region
      $region61: #{vq_forward.1} parent=55 // pred_check
        %p3020 = pneg %p158
      $region62: #{vq_forward.1} parent=55 // pred_check_branch
        %3022 = sbr.rel (%p3020) target = $region64
      $region63: #{vq_forward.1} parent=55 // pred_region
        %s3023 = smul.u32 32, %s20
        %p3024 = scmp.lt.s32.totalorder %s3023, 63
        %s3025 = scalar_select %p3024, %s3023, 63
        %s3026 = smul.addr %s3025, 2
        %s3027 = smul.addr %s3026, 8
        %s3028 = scalar_lea.vmem %s5, %s3027
      $region64: #{vq_forward.1} parent=55 // pred_fallthru
        _
      // Predicated region
      $region65: #{vq_forward.1} parent=55 // pred_check
        %p3029 = pneg %p184
      $region66: #{vq_forward.1} parent=55 // pred_check_branch
        %3031 = sbr.rel (%p3029) target = $region68
      $region67: #{vq_forward.1} parent=55 // pred_region
        %p3032 = scmp.lt.s32.totalorder %s20, 1
        %s3033 = scalar_select %p3032, %s20, 1
        %s3034 = smul.addr %s3033, 2
        %s3035 = smul.addr %s3034, 8
        %s3036 = scalar_lea.vmem %s6, %s3035
      $region68: #{vq_forward.1} parent=55 // pred_fallthru
        _
      // Predicated region
      $region69: #{vq_forward.1} parent=55 // pred_check
        %p3037 = pneg %p210
      $region70: #{vq_forward.1} parent=55 // pred_check_branch
        %3039 = sbr.rel (%p3037) target = $region72
      $region71: #{vq_forward.1} parent=55 // pred_region
        %p3040 = scmp.lt.s32.totalorder %s20, 1
        %s3041 = scalar_select %p3040, %s20, 1
        %s3042 = smul.addr %s3041, 8
        %s3043 = scalar_lea.vmem %s7, %s3042
      $region72: #{vq_forward.1} parent=55 // pred_fallthru
        _
    $region56: #{vq_forward.1} parent=5 // pred_fallthru
      _
  $region6: #{vq_forward.1} parent=0 // loop_footer
    %s18 = sadd.s32 1, %s14
  $region7: #{vq_forward.1} parent=0 // loop_footer_branch
    %13 = sbr.rel target = $region3
  $region8: #{vq_forward.1} parent=0 // loop_exit
    _

</llo_original>
